<compile_context>
chip_gen: v6e
topology: v6e:2x2x1
jax: 0.10.0
libtpu: 0.0.40
codegen_flags: <defaults>
</compile_context>

<pallas_src>
import jax
import jax.numpy as jnp
from jax.experimental import pallas as pl
from jax.experimental.pallas import tpu as pltpu


def _round_up(n, m):
    return ((n + m - 1) // m) * m


def _mlp_kernel(x_ref, w1_ref, b1_ref, w2_ref, b2_ref, w3_ref, b3_ref, o_ref):
    # fc1: cast the f32 x tile to bf16 in-kernel (VPU work that hides under the MXU),
    # matmul with bf16 operands, f32 accumulation; bias + ReLU on the VPU in f32.
    x_bf = x_ref[...].astype(jnp.bfloat16)
    h1 = jnp.dot(x_bf, w1_ref[...], preferred_element_type=jnp.float32)
    h1 = jnp.maximum(h1 + b1_ref[...], 0.0)
    # fc2: downcast activations to bf16 only for the matmul, keep f32 accumulation.
    h2 = jnp.dot(h1.astype(jnp.bfloat16), w2_ref[...],
                 preferred_element_type=jnp.float32)
    h2 = jnp.maximum(h2 + b2_ref[...], 0.0)
    # fc3 (out_dim == 1): broadcast-multiply + cross-lane reduce instead of a
    # lane-sparse (tile,128)@(128,1) MXU pass.
    o_ref[...] = jnp.sum(h2 * w3_ref[...], axis=-1, keepdims=True) + b3_ref[...]


def brd4_forward(x, w1, b1, w2, b2, w3, b3, *, batch_tile=1024):
    """x: (B, input_dim) f32.  w_k: (in_dim, out_dim) f32.  Returns (B, 1) f32."""
    B, input_dim = x.shape
    hidden_dim = w1.shape[1]
    mid_dim = w2.shape[1]
    out_dim = w3.shape[1]
    assert out_dim == 1, "fc3 reduction path assumes out_dim == 1"

    # Adaptive batch tile:
    #  * multiple of 16 (bf16 sublane packing for the in-kernel cast),
    #  * never (much) larger than the padded batch,
    #  * when B > 16, at most ceil(B/2) so the grid has >= 2 steps (v7x megacore).
    tile = max(16, _round_up(min(batch_tile, B), 16))
    if B > 16:
        tile = min(tile, max(16, _round_up((B + 1) // 2, 16)))

    grid = (pl.cdiv(B, tile),)

    # Weights as bf16 MXU operands; biases / fc3 row stay f32 (VPU path).
    w1_bf = w1.astype(jnp.bfloat16)
    w2_bf = w2.astype(jnp.bfloat16)
    w3_row = w3.reshape(1, mid_dim).astype(jnp.float32)
    b1_2d = b1.reshape(1, hidden_dim).astype(jnp.float32)
    b2_2d = b2.reshape(1, mid_dim).astype(jnp.float32)
    b3_2d = b3.reshape(1, out_dim).astype(jnp.float32)

    flops = 2 * B * (input_dim * hidden_dim + hidden_dim * mid_dim + mid_dim * out_dim)
    bytes_accessed = (
        x.size * 4                          # f32 activations in (cast happens in-kernel)
        + w1_bf.size * 2 + w2_bf.size * 2   # bf16 weights
        + (w3_row.size + b1_2d.size + b2_2d.size + b3_2d.size) * 4
        + B * out_dim * 4                   # f32 output
    )
    cost = pl.CostEstimate(flops=flops, transcendentals=0,
                           bytes_accessed=bytes_accessed)

    const_map = lambda i: (0, 0)
    single_buf = pl.Buffered(1)   # constant-index blocks: fetch once, no double buffer

    return pl.pallas_call(
        _mlp_kernel,
        out_shape=jax.ShapeDtypeStruct((B, out_dim), jnp.float32),
        grid_spec=pltpu.PrefetchScalarGridSpec(
            num_scalar_prefetch=0,
            grid=grid,
            in_specs=[
                # x tile: iterate over batch (double-buffered by default).
                pl.BlockSpec((tile, input_dim), lambda i: (i, 0)),
                # weights / biases: full arrays, constant block index, single-buffered.
                pl.BlockSpec((input_dim, hidden_dim), const_map, pipeline_mode=single_buf),
                pl.BlockSpec((1, hidden_dim), const_map, pipeline_mode=single_buf),
                pl.BlockSpec((hidden_dim, mid_dim), const_map, pipeline_mode=single_buf),
                pl.BlockSpec((1, mid_dim), const_map, pipeline_mode=single_buf),
                pl.BlockSpec((1, mid_dim), const_map, pipeline_mode=single_buf),
                pl.BlockSpec((1, out_dim), const_map, pipeline_mode=single_buf),
            ],
            out_specs=pl.BlockSpec((tile, out_dim), lambda i: (i, 0)),
        ),
        compiler_params=pltpu.CompilerParams(
            dimension_semantics=("parallel",),
            # tile=1024 working set is ~22 MiB (16 MiB double-buffered f32 x + 2 MiB w1
            # + intermediates); raise the scoped limit past v5e's 16 MiB default while
            # staying under v7x's 64 MiB physical VMEM.
            vmem_limit_bytes=48 * 1024 * 1024,
        ),
        cost_estimate=cost,
    )(x, w1_bf, b1_2d, w2_bf, b2_2d, w3_row, b3_2d)


def init_params(key, input_dim=2048, hidden_dim=512, mid_dim=128):
    """Deterministic init mimicking PyTorch nn.Linear default (U[-1/sqrt(fan_in), ...]).
    Weights are returned already transposed to (in_dim, out_dim)."""
    ks = jax.random.split(key, 6)

    def lin(kw, kb, fan_in, fan_out):
        bound = 1.0 / jnp.sqrt(fan_in)
        w = jax.random.uniform(kw, (fan_in, fan_out), jnp.float32, -bound, bound)
        b = jax.random.uniform(kb, (fan_out,), jnp.float32, -bound, bound)
        return w, b

    w1, b1 = lin(ks[0], ks[1], input_dim, hidden_dim)
    w2, b2 = lin(ks[2], ks[3], hidden_dim, mid_dim)
    w3, b3 = lin(ks[4], ks[5], mid_dim, 1)
    return w1, b1, w2, b2, w3, b3


if __name__ == "__main__":
    input_dim, hidden_dim, mid_dim = 2048, 512, 128
    batch = 64  # small demo batch; adaptive tiling gives a 2-step grid (tile=32)

    key = jax.random.PRNGKey(0)
    kx, kp = jax.random.split(key)
    x = jax.random.normal(kx, (batch, input_dim), dtype=jnp.float32)
    w1, b1, w2, b2, w3, b3 = init_params(kp, input_dim, hidden_dim, mid_dim)

    out = brd4_forward(x, w1, b1, w2, b2, w3, b3)
    out = jax.block_until_ready(out)

    # Pure-JAX reference with the same bf16 operand quantization as the kernel.
    # TODO(synk): bf16 MXU operands are an intentional accuracy trade-off vs the f32
    # PyTorch model; this check validates consistency with the quantized math.
    def q(a):
        return a.astype(jnp.bfloat16).astype(jnp.float32)

    ref = jnp.maximum(q(x) @ q(w1) + b1, 0.0)
    ref = jnp.maximum(q(ref) @ q(w2) + b2, 0.0)
    ref = jnp.sum(ref * w3.reshape(1, mid_dim), axis=-1, keepdims=True) + b3

    assert out.shape == (batch, 1), out.shape
    assert jnp.allclose(out, ref, atol=2e-3, rtol=2e-3), "mismatch vs reference"

    print("KERNEL_OK")
</pallas_src>

<mosaic_0001>
module attributes {stable_mosaic.version = 11 : i64} {
  func.func @_mlp_kernel(%arg0: i32, %arg1: memref<32x2048xf32, #tpu.memory_space<vmem>>, %arg2: memref<2048x512xbf16, #tpu.memory_space<vmem>>, %arg3: memref<1x512xf32, #tpu.memory_space<vmem>>, %arg4: memref<512x128xbf16, #tpu.memory_space<vmem>>, %arg5: memref<1x128xf32, #tpu.memory_space<vmem>>, %arg6: memref<1x128xf32, #tpu.memory_space<vmem>>, %arg7: memref<1x1xf32, #tpu.memory_space<vmem>>, %arg8: memref<32x1xf32, #tpu.memory_space<vmem>>) attributes {dimension_semantics = [#tpu.dimension_semantics<parallel>], iteration_bounds = array<i64: 2>, scalar_prefetch = 0 : i64, scratch_operands = 0 : i64, tpu.core_type = #tpu.core_type<tc>, window_params = [{transform_indices = @transform_0, window_bounds = array<i64: 32, 2048>}, {pipeline_mode = #tpu.pipeline_mode<synchronous>, transform_indices = @transform_1, window_bounds = array<i64: 2048, 512>}, {pipeline_mode = #tpu.pipeline_mode<synchronous>, transform_indices = @transform_2, window_bounds = array<i64: 1, 512>}, {pipeline_mode = #tpu.pipeline_mode<synchronous>, transform_indices = @transform_3, window_bounds = array<i64: 512, 128>}, {pipeline_mode = #tpu.pipeline_mode<synchronous>, transform_indices = @transform_4, window_bounds = array<i64: 1, 128>}, {pipeline_mode = #tpu.pipeline_mode<synchronous>, transform_indices = @transform_5, window_bounds = array<i64: 1, 128>}, {pipeline_mode = #tpu.pipeline_mode<synchronous>, transform_indices = @transform_6, window_bounds = array<i64: 1, 1>}, {transform_indices = @transform_7, window_bounds = array<i64: 32, 1>}]} {
    %c0 = arith.constant 0 : index
    %c0_0 = arith.constant 0 : index
    %0 = vector.load %arg1[%c0, %c0_0] : memref<32x2048xf32, #tpu.memory_space<vmem>>, vector<32x2048xf32>
    %1 = arith.truncf %0 : vector<32x2048xf32> to vector<32x2048xbf16>
    %c0_1 = arith.constant 0 : index
    %c0_2 = arith.constant 0 : index
    %2 = vector.load %arg2[%c0_1, %c0_2] : memref<2048x512xbf16, #tpu.memory_space<vmem>>, vector<2048x512xbf16>
    %cst = arith.constant dense<0.000000e+00> : vector<32x512xf32>
    %3 = tpu.matmul %1, %2, %cst {dimension_numbers = #tpu.dot_dimension_numbers<[1], [0], [0], [1], [0, 0, 1, 1], [], []>} : vector<32x2048xbf16>, vector<2048x512xbf16>, vector<32x512xf32> -> vector<32x512xf32>
    %c0_3 = arith.constant 0 : index
    %c0_4 = arith.constant 0 : index
    %4 = vector.load %arg3[%c0_3, %c0_4] : memref<1x512xf32, #tpu.memory_space<vmem>>, vector<1x512xf32>
    %5 = vector.broadcast %4 : vector<1x512xf32> to vector<32x512xf32>
    %6 = arith.addf %3, %5 : vector<32x512xf32>
    %cst_5 = arith.constant 0.000000e+00 : f32
    %7 = vector.broadcast %cst_5 : f32 to vector<32x512xf32>
    %8 = arith.maximumf %6, %7 : vector<32x512xf32>
    %9 = arith.truncf %8 : vector<32x512xf32> to vector<32x512xbf16>
    %c0_6 = arith.constant 0 : index
    %c0_7 = arith.constant 0 : index
    %10 = vector.load %arg4[%c0_6, %c0_7] : memref<512x128xbf16, #tpu.memory_space<vmem>>, vector<512x128xbf16>
    %cst_8 = arith.constant dense<0.000000e+00> : vector<32x128xf32>
    %11 = tpu.matmul %9, %10, %cst_8 {dimension_numbers = #tpu.dot_dimension_numbers<[1], [0], [0], [1], [0, 0, 1, 1], [], []>} : vector<32x512xbf16>, vector<512x128xbf16>, vector<32x128xf32> -> vector<32x128xf32>
    %c0_9 = arith.constant 0 : index
    %c0_10 = arith.constant 0 : index
    %12 = vector.load %arg5[%c0_9, %c0_10] : memref<1x128xf32, #tpu.memory_space<vmem>>, vector<1x128xf32>
    %13 = vector.broadcast %12 : vector<1x128xf32> to vector<32x128xf32>
    %14 = arith.addf %11, %13 : vector<32x128xf32>
    %cst_11 = arith.constant 0.000000e+00 : f32
    %15 = vector.broadcast %cst_11 : f32 to vector<32x128xf32>
    %16 = arith.maximumf %14, %15 : vector<32x128xf32>
    %c0_12 = arith.constant 0 : index
    %c0_13 = arith.constant 0 : index
    %17 = vector.load %arg6[%c0_12, %c0_13] : memref<1x128xf32, #tpu.memory_space<vmem>>, vector<1x128xf32>
    %18 = vector.broadcast %17 : vector<1x128xf32> to vector<32x128xf32>
    %19 = arith.mulf %16, %18 : vector<32x128xf32>
    %cst_14 = arith.constant dense<0.000000e+00> : vector<32xf32>
    %20 = vector.multi_reduction <add>, %19, %cst_14 [1] : vector<32x128xf32> to vector<32xf32>
    %21 = vector.shape_cast %20 : vector<32xf32> to vector<32x1xf32>
    %c0_15 = arith.constant 0 : index
    %c0_16 = arith.constant 0 : index
    %22 = vector.load %arg7[%c0_15, %c0_16] : memref<1x1xf32, #tpu.memory_space<vmem>>, vector<1x1xf32>
    %23 = vector.broadcast %22 : vector<1x1xf32> to vector<32x1xf32>
    %24 = arith.addf %21, %23 : vector<32x1xf32>
    %c0_17 = arith.constant 0 : index
    %c0_18 = arith.constant 0 : index
    %25 = vector.load %arg8[%c0_17, %c0_18] : memref<32x1xf32, #tpu.memory_space<vmem>>, vector<32x1xf32>
    tpu.vector_store %arg8[%c0_17, %c0_18], %24 {strides = array<i32>} : memref<32x1xf32, #tpu.memory_space<vmem>>, vector<32x1xf32>,
    return
  }
  func.func @transform_0(%arg0: i32) -> (i32, i32) {
    %c0_i32 = arith.constant 0 : i32
    %c0_i32_0 = arith.constant 0 : i32
    return %arg0, %c0_i32 : i32, i32
  }
  func.func @transform_1(%arg0: i32) -> (i32, i32) {
    %c0_i32 = arith.constant 0 : i32
    %c0_i32_0 = arith.constant 0 : i32
    %c0_i32_1 = arith.constant 0 : i32
    return %c0_i32, %c0_i32_0 : i32, i32
  }
  func.func @transform_2(%arg0: i32) -> (i32, i32) {
    %c0_i32 = arith.constant 0 : i32
    %c0_i32_0 = arith.constant 0 : i32
    %c0_i32_1 = arith.constant 0 : i32
    return %c0_i32, %c0_i32_0 : i32, i32
  }
  func.func @transform_3(%arg0: i32) -> (i32, i32) {
    %c0_i32 = arith.constant 0 : i32
    %c0_i32_0 = arith.constant 0 : i32
    %c0_i32_1 = arith.constant 0 : i32
    return %c0_i32, %c0_i32_0 : i32, i32
  }
  func.func @transform_4(%arg0: i32) -> (i32, i32) {
    %c0_i32 = arith.constant 0 : i32
    %c0_i32_0 = arith.constant 0 : i32
    %c0_i32_1 = arith.constant 0 : i32
    return %c0_i32, %c0_i32_0 : i32, i32
  }
  func.func @transform_5(%arg0: i32) -> (i32, i32) {
    %c0_i32 = arith.constant 0 : i32
    %c0_i32_0 = arith.constant 0 : i32
    %c0_i32_1 = arith.constant 0 : i32
    return %c0_i32, %c0_i32_0 : i32, i32
  }
  func.func @transform_6(%arg0: i32) -> (i32, i32) {
    %c0_i32 = arith.constant 0 : i32
    %c0_i32_0 = arith.constant 0 : i32
    %c0_i32_1 = arith.constant 0 : i32
    return %c0_i32, %c0_i32_0 : i32, i32
  }
  func.func @transform_7(%arg0: i32) -> (i32, i32) {
    %c0_i32 = arith.constant 0 : i32
    %c0_i32_0 = arith.constant 0 : i32
    return %arg0, %c0_i32 : i32, i32
  }
}

</mosaic_0001>

<llo_original>
// kernel: tpu_custom_call.1
$region0: #{tpu_custom_call.1}
  #allocation0 [shape = 'u32[]', space=smem, size = 0x4, offset = 0x4, fixed_abs, tag = 'smem constant byte address 0x4 - core index']
  #allocation1 [shape = 'u32[144,128]{1,0:T(1,128)}', space=vmem, size = 0x12000, scoped, tag = 'internal scratch']
  #allocation2 [shape = 'f32[1,1]{1,0:T(1,128)S(1)}', space=vmem, size = 0x200, scoped, tag = 'scoped memory for tpu_custom_call.1']
  %s0 = inlined_call_operand.hbm [shape: f32[64,2048], index: 0, kind: input, shape index: {}]
  %s1 = inlined_call_operand.hbm [shape: bf16[2048,512], index: 1, kind: input, shape index: {}]
  %s2 = inlined_call_operand.hbm [shape: f32[1,512], index: 2, kind: input, shape index: {}]
  %s3 = inlined_call_operand.hbm [shape: bf16[512,128], index: 3, kind: input, shape index: {}]
  %s4 = inlined_call_operand.hbm [shape: f32[1,128], index: 4, kind: input, shape index: {}]
  %s5 = inlined_call_operand.hbm [shape: f32[1,128], index: 5, kind: input, shape index: {}]
  %s6 = inlined_call_operand.<no memory space> [shape: f32[1,1], index: 6, kind: input, shape index: {}]
  %s7 = inlined_call_operand.vmem [shape: f32[64,1], index: 7, kind: output, shape index: {}]
  %s8 = sld [smem:[#allocation0]]
  $region85: #{tpu_custom_call.1} parent=0
    _
  %s10 = ssub.s32 1, %s8
  %s11 = scalar_select 0, %s10, %s8
  %v12 = vstv %s6
  %13 = vst [vmem:[#allocation2] sm:$0x1] %v12
  $region1: #{tpu_custom_call.1} parent=0
    #allocation3 [shape = 'u8[524288]{0}', space=vmem, size = 0x80000, scoped, tag = 'input window, operand 0']
    #allocation4 [shape = 's32[2]{0}', space=sflag, size = 0x8, scoped, tag = 'scoped memory for tpu_custom_call.1']
    #allocation5 [shape = 'u8[2097152]{0}', space=vmem, size = 0x200000, scoped, tag = 'input window, operand 1, single buffered']
    #allocation6 [shape = 's32[1]{0}', space=sflag, size = 0x4, scoped, tag = 'scoped memory for tpu_custom_call.1']
    #allocation7 [shape = 'u8[2048]{0}', space=vmem, size = 0x800, scoped, tag = 'input window, operand 2, single buffered']
    #allocation8 [shape = 'u8[131072]{0}', space=vmem, size = 0x20000, scoped, tag = 'input window, operand 3, single buffered']
    #allocation9 [shape = 's32[1]{0}', space=sflag, size = 0x4, scoped, tag = 'scoped memory for tpu_custom_call.1']
    #allocation10 [shape = 'u8[512]{0}', space=vmem, size = 0x400, scoped, tag = 'input window, operand 4, single buffered']
    #allocation11 [shape = 'u8[512]{0}', space=vmem, size = 0x400, scoped, tag = 'input window, operand 5, single buffered']
    #allocation12 [shape = 's32[1]{0}', space=sflag, size = 0x4, scoped, tag = 'scoped memory for tpu_custom_call.1']
    %14 = vsyncpa [#allocation4], 0
    %s15 = scalar_lea.sflag [#allocation4], 1
    %16 = vsyncpa %s15, 0
    %17 = vsyncpa [#allocation6], 0
    %18 = vsyncpa [#allocation9], 0
    %19 = vsyncpa [#allocation12], 0
    loop: start=0, step=1, limit=4
    $region2: #{tpu_custom_call.1} parent=1 // loop_pre_header
      _
    $region3: #{tpu_custom_call.1} parent=1 // loop_header
      %s21 = sphi 0, %s25
      %p22 = scmp.ge.s32.totalorder %s21, 4
      %s31 = sphi 0, %s33
      %s34 = sphi 0, %s31
      %s35 = sphi 0, %s34
      %s51 = sphi 0, %s35
      %s55 = sphi 0, %s55
      %s57 = sphi 0, %s55
      %s58 = sphi 0, %s57
      %s72 = sphi 0, %s58
      %s76 = sphi 0, %s76
      %s78 = sphi 0, %s76
      %s79 = sphi 0, %s78
      %s93 = sphi 0, %s79
      %s97 = sphi 0, %s97
      %s99 = sphi 0, %s97
      %s100 = sphi 0, %s99
      %s114 = sphi 0, %s100
      %s118 = sphi 0, %s118
      %s120 = sphi 0, %s118
      %s121 = sphi 0, %s120
      %s135 = sphi 0, %s121
      %s139 = sphi 0, %s139
      %s141 = sphi 0, %s139
      %s142 = sphi 0, %s141
      %s156 = sphi 0, %s142
      %s160 = sphi 0, %s160
      %s162 = sphi 0, %s160
      %s163 = sphi 0, %s162
      %s177 = sphi 0, %s163
      %s183 = sphi 0, %s185
      %s186 = sphi 0, %s183
      %s187 = sphi 0, %s186
      %s203 = sphi 0, %s187
    $region4: #{tpu_custom_call.1} parent=1 // loop_header_branch
      %24 = sbr.rel (%p22) target = $region8
    $region5: #{tpu_custom_call.1} parent=1 // loop_body
      %s26 = ssub.s32 %s21, 1
      %s27 = ssub.s32 %s21, 2
      %s28 = sadd.s32 %s21, 1
      %s29 = ssub.s32 %s21, %s28
      %p30 = scmp.eq.s32.totalorder %s29, 0
      %s32 = sadd.s32 %s31, 1
      %s33 = scalar_select %p30, %s31, %s32
      %p36 = pneg %p30
      %p37 = scmp.eq.s32.totalorder %s21, 1
      %p38 = por %p36, %p37
      %p39 = scmp.ne.s32.totalorder %s31, %s34
      %p40 = scmp.eq.s32.totalorder %s21, 0
      %p41 = por %p39, %p40
      %p42 = scmp.ne.s32.totalorder %s31, %s34
      %p43 = scmp.eq.s32.totalorder %s26, 1
      %p44 = por %p42, %p43
      %p45 = scmp.ne.s32.totalorder %s34, %s35
      %p46 = scmp.eq.s32.totalorder %s26, 0
      %p47 = por %p45, %p46
      %p48 = scmp.ne.s32.totalorder %s34, %s35
      %p49 = scmp.eq.s32.totalorder %s27, 1
      %p50 = por %p48, %p49
      %p52 = scmp.ne.s32.totalorder %s35, %s51
      %p53 = scmp.eq.s32.totalorder %s27, 0
      %p54 = por %p52, %p53
      %s56 = sadd.s32 %s55, 1
      %p59 = scmp.eq.s32.totalorder %s21, 1
      %p60 = scmp.ne.s32.totalorder %s55, %s57
      %p61 = scmp.eq.s32.totalorder %s21, 0
      %p62 = por %p60, %p61
      %p63 = scmp.ne.s32.totalorder %s55, %s57
      %p64 = scmp.eq.s32.totalorder %s26, 1
      %p65 = por %p63, %p64
      %p66 = scmp.ne.s32.totalorder %s57, %s58
      %p67 = scmp.eq.s32.totalorder %s26, 0
      %p68 = por %p66, %p67
      %p69 = scmp.ne.s32.totalorder %s57, %s58
      %p70 = scmp.eq.s32.totalorder %s27, 1
      %p71 = por %p69, %p70
      %p73 = scmp.ne.s32.totalorder %s58, %s72
      %p74 = scmp.eq.s32.totalorder %s27, 0
      %p75 = por %p73, %p74
      %s77 = sadd.s32 %s76, 1
      %p80 = scmp.eq.s32.totalorder %s21, 1
      %p81 = scmp.ne.s32.totalorder %s76, %s78
      %p82 = scmp.eq.s32.totalorder %s21, 0
      %p83 = por %p81, %p82
      %p84 = scmp.ne.s32.totalorder %s76, %s78
      %p85 = scmp.eq.s32.totalorder %s26, 1
      %p86 = por %p84, %p85
      %p87 = scmp.ne.s32.totalorder %s78, %s79
      %p88 = scmp.eq.s32.totalorder %s26, 0
      %p89 = por %p87, %p88
      %p90 = scmp.ne.s32.totalorder %s78, %s79
      %p91 = scmp.eq.s32.totalorder %s27, 1
      %p92 = por %p90, %p91
      %p94 = scmp.ne.s32.totalorder %s79, %s93
      %p95 = scmp.eq.s32.totalorder %s27, 0
      %p96 = por %p94, %p95
      %s98 = sadd.s32 %s97, 1
      %p101 = scmp.eq.s32.totalorder %s21, 1
      %p102 = scmp.ne.s32.totalorder %s97, %s99
      %p103 = scmp.eq.s32.totalorder %s21, 0
      %p104 = por %p102, %p103
      %p105 = scmp.ne.s32.totalorder %s97, %s99
      %p106 = scmp.eq.s32.totalorder %s26, 1
      %p107 = por %p105, %p106
      %p108 = scmp.ne.s32.totalorder %s99, %s100
      %p109 = scmp.eq.s32.totalorder %s26, 0
      %p110 = por %p108, %p109
      %p111 = scmp.ne.s32.totalorder %s99, %s100
      %p112 = scmp.eq.s32.totalorder %s27, 1
      %p113 = por %p111, %p112
      %p115 = scmp.ne.s32.totalorder %s100, %s114
      %p116 = scmp.eq.s32.totalorder %s27, 0
      %p117 = por %p115, %p116
      %s119 = sadd.s32 %s118, 1
      %p122 = scmp.eq.s32.totalorder %s21, 1
      %p123 = scmp.ne.s32.totalorder %s118, %s120
      %p124 = scmp.eq.s32.totalorder %s21, 0
      %p125 = por %p123, %p124
      %p126 = scmp.ne.s32.totalorder %s118, %s120
      %p127 = scmp.eq.s32.totalorder %s26, 1
      %p128 = por %p126, %p127
      %p129 = scmp.ne.s32.totalorder %s120, %s121
      %p130 = scmp.eq.s32.totalorder %s26, 0
      %p131 = por %p129, %p130
      %p132 = scmp.ne.s32.totalorder %s120, %s121
      %p133 = scmp.eq.s32.totalorder %s27, 1
      %p134 = por %p132, %p133
      %p136 = scmp.ne.s32.totalorder %s121, %s135
      %p137 = scmp.eq.s32.totalorder %s27, 0
      %p138 = por %p136, %p137
      %s140 = sadd.s32 %s139, 1
      %p143 = scmp.eq.s32.totalorder %s21, 1
      %p144 = scmp.ne.s32.totalorder %s139, %s141
      %p145 = scmp.eq.s32.totalorder %s21, 0
      %p146 = por %p144, %p145
      %p147 = scmp.ne.s32.totalorder %s139, %s141
      %p148 = scmp.eq.s32.totalorder %s26, 1
      %p149 = por %p147, %p148
      %p150 = scmp.ne.s32.totalorder %s141, %s142
      %p151 = scmp.eq.s32.totalorder %s26, 0
      %p152 = por %p150, %p151
      %p153 = scmp.ne.s32.totalorder %s141, %s142
      %p154 = scmp.eq.s32.totalorder %s27, 1
      %p155 = por %p153, %p154
      %p157 = scmp.ne.s32.totalorder %s142, %s156
      %p158 = scmp.eq.s32.totalorder %s27, 0
      %p159 = por %p157, %p158
      %s161 = sadd.s32 %s160, 1
      %p164 = scmp.eq.s32.totalorder %s21, 1
      %p165 = scmp.ne.s32.totalorder %s160, %s162
      %p166 = scmp.eq.s32.totalorder %s21, 0
      %p167 = por %p165, %p166
      %p168 = scmp.ne.s32.totalorder %s160, %s162
      %p169 = scmp.eq.s32.totalorder %s26, 1
      %p170 = por %p168, %p169
      %p171 = scmp.ne.s32.totalorder %s162, %s163
      %p172 = scmp.eq.s32.totalorder %s26, 0
      %p173 = por %p171, %p172
      %p174 = scmp.ne.s32.totalorder %s162, %s163
      %p175 = scmp.eq.s32.totalorder %s27, 1
      %p176 = por %p174, %p175
      %p178 = scmp.ne.s32.totalorder %s163, %s177
      %p179 = scmp.eq.s32.totalorder %s27, 0
      %p180 = por %p178, %p179
      %s181 = ssub.s32 %s21, %s28
      %p182 = scmp.eq.s32.totalorder %s181, 0
      %s184 = sadd.s32 %s183, 1
      %s185 = scalar_select %p182, %s183, %s184
      %p188 = pneg %p182
      %p189 = scmp.eq.s32.totalorder %s21, 1
      %p190 = por %p188, %p189
      %p191 = scmp.ne.s32.totalorder %s183, %s186
      %p192 = scmp.eq.s32.totalorder %s21, 0
      %p193 = por %p191, %p192
      %p194 = scmp.ne.s32.totalorder %s183, %s186
      %p195 = scmp.eq.s32.totalorder %s26, 1
      %p196 = por %p194, %p195
      %p197 = scmp.ne.s32.totalorder %s186, %s187
      %p198 = scmp.eq.s32.totalorder %s26, 0
      %p199 = por %p197, %p198
      %p200 = scmp.ne.s32.totalorder %s186, %s187
      %p201 = scmp.eq.s32.totalorder %s27, 1
      %p202 = por %p200, %p201
      %p204 = scmp.ne.s32.totalorder %s187, %s203
      %p205 = scmp.eq.s32.totalorder %s27, 0
      %p206 = por %p204, %p205
      %p207 = scmp.le.s32.totalorder 1, %s21
      %p208 = scmp.lt.s32.totalorder %s21, 3
      %p209 = pnand %p207, %p208
      %p210 = pneg %p209
      // Predicated region
      $region9: #{tpu_custom_call.1} parent=5 // pred_check
        _
      $region10: #{tpu_custom_call.1} parent=5 // pred_check_branch
        %212 = sbr.rel (%p209) target = $region12
      $region11: #{tpu_custom_call.1} parent=5 // pred_region
        %s213 = ssub.s32 %s21, 1
        // Predicated region
        $region13: #{tpu_custom_call.1} parent=11 // pred_check
          %p214 = pneg %p68
        $region14: #{tpu_custom_call.1} parent=11 // pred_check_branch
          %216 = sbr.rel (%p214) target = $region16
        $region15: #{tpu_custom_call.1} parent=11 // pred_region
          %s218 = ssub.s32 65536, 65536
          %219 = vsyncadd [#allocation6], %s218
          %s220 = sshll.u32 [#allocation5], 4
          %s221 = int_to_ptr.vmem [resolvable:$true] %s220
          %226 = dma.hbm_to_vmem [thread:$0]  %s1, 65536, %s221, [#allocation6], 256, 256, 16
        $region16: #{tpu_custom_call.1} parent=11 // pred_fallthru
          _
        // Predicated region
        $region17: #{tpu_custom_call.1} parent=11 // pred_check
          %p227 = pneg %p89
        $region18: #{tpu_custom_call.1} parent=11 // pred_check_branch
          %229 = sbr.rel (%p227) target = $region20
        $region19: #{tpu_custom_call.1} parent=11 // pred_region
          %s231 = ssub.s32 64, 64
          %232 = vsyncadd [#allocation6], %s231
          %s234 = sshll.u32 [#allocation7], 4
          %s235 = int_to_ptr.vmem [resolvable:$true] %s234
          %237 = dma.hbm_to_vmem [thread:$0]  %s2, 64, %s235, [#allocation6]
        $region20: #{tpu_custom_call.1} parent=11 // pred_fallthru
          _
        // Predicated region
        $region21: #{tpu_custom_call.1} parent=11 // pred_check
          %p238 = pneg %p110
        $region22: #{tpu_custom_call.1} parent=11 // pred_check_branch
          %240 = sbr.rel (%p238) target = $region24
        $region23: #{tpu_custom_call.1} parent=11 // pred_region
          %s242 = ssub.s32 4096, 4096
          %243 = vsyncadd [#allocation9], %s242
          %s244 = sshll.u32 [#allocation8], 4
          %s245 = int_to_ptr.vmem [resolvable:$true] %s244
          %250 = dma.hbm_to_vmem [thread:$0]  %s3, 4096, %s245, [#allocation9], 64, 64, 4
        $region24: #{tpu_custom_call.1} parent=11 // pred_fallthru
          _
        // Predicated region
        $region25: #{tpu_custom_call.1} parent=11 // pred_check
          %p251 = pneg %p131
        $region26: #{tpu_custom_call.1} parent=11 // pred_check_branch
          %253 = sbr.rel (%p251) target = $region28
        $region27: #{tpu_custom_call.1} parent=11 // pred_region
          %s255 = ssub.s32 16, 16
          %256 = vsyncadd [#allocation9], %s255
          %s258 = sshll.u32 [#allocation10], 4
          %s259 = int_to_ptr.vmem [resolvable:$true] %s258
          %261 = dma.hbm_to_vmem [thread:$0]  %s4, 16, %s259, [#allocation9]
        $region28: #{tpu_custom_call.1} parent=11 // pred_fallthru
          _
        // Predicated region
        $region29: #{tpu_custom_call.1} parent=11 // pred_check
          %p262 = pneg %p152
        $region30: #{tpu_custom_call.1} parent=11 // pred_check_branch
          %264 = sbr.rel (%p262) target = $region32
        $region31: #{tpu_custom_call.1} parent=11 // pred_region
          %s266 = ssub.s32 16, 16
          %267 = vsyncadd [#allocation12], %s266
          %s269 = sshll.u32 [#allocation11], 4
          %s270 = int_to_ptr.vmem [resolvable:$true] %s269
          %272 = dma.hbm_to_vmem [thread:$0]  %s5, 16, %s270, [#allocation12]
        $region32: #{tpu_custom_call.1} parent=11 // pred_fallthru
          _
        // Predicated region
        $region33: #{tpu_custom_call.1} parent=11 // pred_check
          %p273 = pneg %p173
        $region34: #{tpu_custom_call.1} parent=11 // pred_check_branch
          %275 = sbr.rel (%p273) target = $region36
        $region35: #{tpu_custom_call.1} parent=11 // pred_region
          _
        $region36: #{tpu_custom_call.1} parent=11 // pred_fallthru
          _
      $region12: #{tpu_custom_call.1} parent=5 // pred_fallthru
        _
      %p276 = scmp.lt.s32.totalorder %s21, 2
      // Predicated region
      $region37: #{tpu_custom_call.1} parent=5 // pred_check
        %p277 = pneg %p276
      $region38: #{tpu_custom_call.1} parent=5 // pred_check_branch
        %279 = sbr.rel (%p277) target = $region40
      $region39: #{tpu_custom_call.1} parent=5 // pred_region
        // Predicated region
        $region41: #{tpu_custom_call.1} parent=39 // pred_check
          %p280 = pneg %p41
        $region42: #{tpu_custom_call.1} parent=39 // pred_check_branch
          %282 = sbr.rel (%p280) target = $region44
        $region43: #{tpu_custom_call.1} parent=39 // pred_region
          %s283 = sand.u32 %s31, 1
          %s284 = scalar_lea.sflag [#allocation4], %s283
          %s285 = sand.u32 %s31, 1
          %s286 = smul.addr %s285, 512
          %s287 = scalar_lea.vmem [#allocation3], %s286
          %s288 = smul.u32 4, %s21
          %s290 = ssub.s32 8192, 8192
          %291 = vsyncadd %s284, %s290
          %s292 = smul.addr %s288, 16
          %s293 = smul.addr %s292, 128
          %s294 = scalar_lea.hbm %s0, %s293
          %s295 = sshll.u32 %s287, 4
          %s296 = int_to_ptr.vmem [resolvable:$true] %s295
          %301 = dma.hbm_to_vmem [thread:$0]  %s294, 8192, %s296, %s284, 2048, 2048, 128
        $region44: #{tpu_custom_call.1} parent=39 // pred_fallthru
          _
      $region40: #{tpu_custom_call.1} parent=5 // pred_fallthru
        _
      %p302 = scmp.le.s32.totalorder 1, %s21
      %p303 = scmp.lt.s32.totalorder %s21, 3
      %p304 = pnand %p302, %p303
      %p305 = pneg %p304
      // Predicated region
      $region45: #{tpu_custom_call.1} parent=5 // pred_check
        _
      $region46: #{tpu_custom_call.1} parent=5 // pred_check_branch
        %307 = sbr.rel (%p304) target = $region48
      $region47: #{tpu_custom_call.1} parent=5 // pred_region
        %s308 = ssub.s32 %s21, 1
        %s309 = sand.u32 %s34, 1
        %s310 = scalar_lea.sflag [#allocation4], %s309
        %s311 = sand.u32 %s34, 1
        %s312 = smul.addr %s311, 512
        %s313 = scalar_lea.vmem [#allocation3], %s312
        // Predicated region
        $region49: #{tpu_custom_call.1} parent=47 // pred_check
          %p314 = pneg %p47
        $region50: #{tpu_custom_call.1} parent=47 // pred_check_branch
          %316 = sbr.rel (%p314) target = $region52
        $region51: #{tpu_custom_call.1} parent=47 // pred_region
          %317 = dma.done %s310, 8192
        $region52: #{tpu_custom_call.1} parent=47 // pred_fallthru
          _
        // Predicated region
        $region53: #{tpu_custom_call.1} parent=47 // pred_check
          %p318 = pneg %p68
        $region54: #{tpu_custom_call.1} parent=47 // pred_check_branch
          %320 = sbr.rel (%p318) target = $region56
        $region55: #{tpu_custom_call.1} parent=47 // pred_region
          %321 = dma.done [#allocation6], 65536
        $region56: #{tpu_custom_call.1} parent=47 // pred_fallthru
          _
        // Predicated region
        $region57: #{tpu_custom_call.1} parent=47 // pred_check
          %p322 = pneg %p89
        $region58: #{tpu_custom_call.1} parent=47 // pred_check_branch
          %324 = sbr.rel (%p322) target = $region60
        $region59: #{tpu_custom_call.1} parent=47 // pred_region
          %325 = dma.done [#allocation6], 64
        $region60: #{tpu_custom_call.1} parent=47 // pred_fallthru
          _
        // Predicated region
        $region61: #{tpu_custom_call.1} parent=47 // pred_check
          %p326 = pneg %p110
        $region62: #{tpu_custom_call.1} parent=47 // pred_check_branch
          %328 = sbr.rel (%p326) target = $region64
        $region63: #{tpu_custom_call.1} parent=47 // pred_region
          %329 = dma.done [#allocation9], 4096
        $region64: #{tpu_custom_call.1} parent=47 // pred_fallthru
          _
        // Predicated region
        $region65: #{tpu_custom_call.1} parent=47 // pred_check
          %p330 = pneg %p131
        $region66: #{tpu_custom_call.1} parent=47 // pred_check_branch
          %332 = sbr.rel (%p330) target = $region68
        $region67: #{tpu_custom_call.1} parent=47 // pred_region
          %333 = dma.done [#allocation9], 16
        $region68: #{tpu_custom_call.1} parent=47 // pred_fallthru
          _
        // Predicated region
        $region69: #{tpu_custom_call.1} parent=47 // pred_check
          %p334 = pneg %p152
        $region70: #{tpu_custom_call.1} parent=47 // pred_check_branch
          %336 = sbr.rel (%p334) target = $region72
        $region71: #{tpu_custom_call.1} parent=47 // pred_region
          %337 = dma.done [#allocation12], 16
        $region72: #{tpu_custom_call.1} parent=47 // pred_fallthru
          _
        %s338 = sand.u32 %s34, 1
        %s339 = scalar_lea.sflag [#allocation4], %s338
        %s340 = sand.u32 %s34, 1
        %s341 = smul.addr %s340, 512
        %s342 = scalar_lea.vmem [#allocation3], %s341
        %p343 = pneg %p47
        %p344 = pneg %p44
        %p345 = pneg %p68
        %p346 = pneg %p65
        %p347 = pneg %p89
        %p348 = pneg %p86
        %p349 = pneg %p110
        %p350 = pneg %p107
        %p351 = pneg %p131
        %p352 = pneg %p128
        %p353 = pneg %p152
        %p354 = pneg %p149
        %p355 = pneg %p173
        %p356 = pneg %p170
        %p357 = pneg %p199
        %p358 = pneg %p196
        %s359 = smul.u32 4, %s26
        %p360 = scmp.lt.s32.totalorder %s359, 7
        %s361 = scalar_select %p360, %s359, 7
        %s362 = smul.addr %s361, 8
        %s363 = scalar_lea.vmem %s7, %s362
        %s364 = smul.u32 4, %s26
        %s365 = smul.u32 4, %s26
        %p366 = scmp.lt.s32.totalorder %s365, 7
        %s367 = scalar_select %p366, %s365, 7
        %s368 = smul.addr %s367, 8
        %s369 = scalar_lea.vmem %s7, %s368
        %s370 = smul.u32 4, %s26
        %v372 = vld [vmem:[%s313] sm:$0xff]
        %v373 = vld [vmem:[%s313 + $0x8] sm:$0xff]
        %v374 = vld [vmem:[%s313 + $0x10] sm:$0xff]
        %v375 = vld [vmem:[%s313 + $0x18] sm:$0xff]
        %v376 = vld [vmem:[%s313 + $0x20] sm:$0xff]
        %v377 = vld [vmem:[%s313 + $0x28] sm:$0xff]
        %v378 = vld [vmem:[%s313 + $0x30] sm:$0xff]
        %v379 = vld [vmem:[%s313 + $0x38] sm:$0xff]
        %v380 = vld [vmem:[%s313 + $0x40] sm:$0xff]
        %v381 = vld [vmem:[%s313 + $0x48] sm:$0xff]
        %v382 = vld [vmem:[%s313 + $0x50] sm:$0xff]
        %v383 = vld [vmem:[%s313 + $0x58] sm:$0xff]
        %v384 = vld [vmem:[%s313 + $0x60] sm:$0xff]
        %v385 = vld [vmem:[%s313 + $0x68] sm:$0xff]
        %v386 = vld [vmem:[%s313 + $0x70] sm:$0xff]
        %v387 = vld [vmem:[%s313 + $0x78] sm:$0xff]
        %v388 = vld [vmem:[%s313 + $0x80] sm:$0xff]
        %v389 = vld [vmem:[%s313 + $0x88] sm:$0xff]
        %v390 = vld [vmem:[%s313 + $0x90] sm:$0xff]
        %v391 = vld [vmem:[%s313 + $0x98] sm:$0xff]
        %v392 = vld [vmem:[%s313 + $0xa0] sm:$0xff]
        %v393 = vld [vmem:[%s313 + $0xa8] sm:$0xff]
        %v394 = vld [vmem:[%s313 + $0xb0] sm:$0xff]
        %v395 = vld [vmem:[%s313 + $0xb8] sm:$0xff]
        %v396 = vld [vmem:[%s313 + $0xc0] sm:$0xff]
        %v397 = vld [vmem:[%s313 + $0xc8] sm:$0xff]
        %v398 = vld [vmem:[%s313 + $0xd0] sm:$0xff]
        %v399 = vld [vmem:[%s313 + $0xd8] sm:$0xff]
        %v400 = vld [vmem:[%s313 + $0xe0] sm:$0xff]
        %v401 = vld [vmem:[%s313 + $0xe8] sm:$0xff]
        %v402 = vld [vmem:[%s313 + $0xf0] sm:$0xff]
        %v403 = vld [vmem:[%s313 + $0xf8] sm:$0xff]
        %v404 = vld [vmem:[%s313 + $0x100] sm:$0xff]
        %v405 = vld [vmem:[%s313 + $0x108] sm:$0xff]
        %v406 = vld [vmem:[%s313 + $0x110] sm:$0xff]
        %v407 = vld [vmem:[%s313 + $0x118] sm:$0xff]
        %v408 = vld [vmem:[%s313 + $0x120] sm:$0xff]
        %v409 = vld [vmem:[%s313 + $0x128] sm:$0xff]
        %v410 = vld [vmem:[%s313 + $0x130] sm:$0xff]
        %v411 = vld [vmem:[%s313 + $0x138] sm:$0xff]
        %v412 = vld [vmem:[%s313 + $0x140] sm:$0xff]
        %v413 = vld [vmem:[%s313 + $0x148] sm:$0xff]
        %v414 = vld [vmem:[%s313 + $0x150] sm:$0xff]
        %v415 = vld [vmem:[%s313 + $0x158] sm:$0xff]
        %v416 = vld [vmem:[%s313 + $0x160] sm:$0xff]
        %v417 = vld [vmem:[%s313 + $0x168] sm:$0xff]
        %v418 = vld [vmem:[%s313 + $0x170] sm:$0xff]
        %v419 = vld [vmem:[%s313 + $0x178] sm:$0xff]
        %v420 = vld [vmem:[%s313 + $0x180] sm:$0xff]
        %v421 = vld [vmem:[%s313 + $0x188] sm:$0xff]
        %v422 = vld [vmem:[%s313 + $0x190] sm:$0xff]
        %v423 = vld [vmem:[%s313 + $0x198] sm:$0xff]
        %v424 = vld [vmem:[%s313 + $0x1a0] sm:$0xff]
        %v425 = vld [vmem:[%s313 + $0x1a8] sm:$0xff]
        %v426 = vld [vmem:[%s313 + $0x1b0] sm:$0xff]
        %v427 = vld [vmem:[%s313 + $0x1b8] sm:$0xff]
        %v428 = vld [vmem:[%s313 + $0x1c0] sm:$0xff]
        %v429 = vld [vmem:[%s313 + $0x1c8] sm:$0xff]
        %v430 = vld [vmem:[%s313 + $0x1d0] sm:$0xff]
        %v431 = vld [vmem:[%s313 + $0x1d8] sm:$0xff]
        %v432 = vld [vmem:[%s313 + $0x1e0] sm:$0xff]
        %v433 = vld [vmem:[%s313 + $0x1e8] sm:$0xff]
        %v434 = vld [vmem:[%s313 + $0x1f0] sm:$0xff]
        %v435 = vld [vmem:[%s313 + $0x1f8] sm:$0xff]
        %v436 = vpack.c.bf16 %v388, %v372
        %v437 = vpack.c.bf16 %v389, %v373
        %v438 = vpack.c.bf16 %v390, %v374
        %v439 = vpack.c.bf16 %v391, %v375
        %v440 = vpack.c.bf16 %v392, %v376
        %v441 = vpack.c.bf16 %v393, %v377
        %v442 = vpack.c.bf16 %v394, %v378
        %v443 = vpack.c.bf16 %v395, %v379
        %v444 = vpack.c.bf16 %v396, %v380
        %v445 = vpack.c.bf16 %v397, %v381
        %v446 = vpack.c.bf16 %v398, %v382
        %v447 = vpack.c.bf16 %v399, %v383
        %v448 = vpack.c.bf16 %v400, %v384
        %v449 = vpack.c.bf16 %v401, %v385
        %v450 = vpack.c.bf16 %v402, %v386
        %v451 = vpack.c.bf16 %v403, %v387
        %v452 = vpack.c.bf16 %v420, %v404
        %v453 = vpack.c.bf16 %v421, %v405
        %v454 = vpack.c.bf16 %v422, %v406
        %v455 = vpack.c.bf16 %v423, %v407
        %v456 = vpack.c.bf16 %v424, %v408
        %v457 = vpack.c.bf16 %v425, %v409
        %v458 = vpack.c.bf16 %v426, %v410
        %v459 = vpack.c.bf16 %v427, %v411
        %v460 = vpack.c.bf16 %v428, %v412
        %v461 = vpack.c.bf16 %v429, %v413
        %v462 = vpack.c.bf16 %v430, %v414
        %v463 = vpack.c.bf16 %v431, %v415
        %v464 = vpack.c.bf16 %v432, %v416
        %v465 = vpack.c.bf16 %v433, %v417
        %v466 = vpack.c.bf16 %v434, %v418
        %v467 = vpack.c.bf16 %v435, %v419
        %v468 = vld [vmem:[#allocation5] sm:$0xff]
        %v469 = vld [vmem:[#allocation5 + $0x8] sm:$0xff]
        %v470 = vld [vmem:[#allocation5 + $0x10] sm:$0xff]
        %v471 = vld [vmem:[#allocation5 + $0x18] sm:$0xff]
        %v472 = vld [vmem:[#allocation5 + $0x20] sm:$0xff]
        %v473 = vld [vmem:[#allocation5 + $0x28] sm:$0xff]
        %v474 = vld [vmem:[#allocation5 + $0x30] sm:$0xff]
        %v475 = vld [vmem:[#allocation5 + $0x38] sm:$0xff]
        %v476 = vld [vmem:[#allocation5 + $0x40] sm:$0xff]
        %v477 = vld [vmem:[#allocation5 + $0x48] sm:$0xff]
        %v478 = vld [vmem:[#allocation5 + $0x50] sm:$0xff]
        %v479 = vld [vmem:[#allocation5 + $0x58] sm:$0xff]
        %v480 = vld [vmem:[#allocation5 + $0x60] sm:$0xff]
        %v481 = vld [vmem:[#allocation5 + $0x68] sm:$0xff]
        %v482 = vld [vmem:[#allocation5 + $0x70] sm:$0xff]
        %v483 = vld [vmem:[#allocation5 + $0x78] sm:$0xff]
        %v484 = vld [vmem:[#allocation5 + $0x80] sm:$0xff]
        %v485 = vld [vmem:[#allocation5 + $0x88] sm:$0xff]
        %v486 = vld [vmem:[#allocation5 + $0x90] sm:$0xff]
        %v487 = vld [vmem:[#allocation5 + $0x98] sm:$0xff]
        %v488 = vld [vmem:[#allocation5 + $0xa0] sm:$0xff]
        %v489 = vld [vmem:[#allocation5 + $0xa8] sm:$0xff]
        %v490 = vld [vmem:[#allocation5 + $0xb0] sm:$0xff]
        %v491 = vld [vmem:[#allocation5 + $0xb8] sm:$0xff]
        %v492 = vld [vmem:[#allocation5 + $0xc0] sm:$0xff]
        %v493 = vld [vmem:[#allocation5 + $0xc8] sm:$0xff]
        %v494 = vld [vmem:[#allocation5 + $0xd0] sm:$0xff]
        %v495 = vld [vmem:[#allocation5 + $0xd8] sm:$0xff]
        %v496 = vld [vmem:[#allocation5 + $0xe0] sm:$0xff]
        %v497 = vld [vmem:[#allocation5 + $0xe8] sm:$0xff]
        %v498 = vld [vmem:[#allocation5 + $0xf0] sm:$0xff]
        %v499 = vld [vmem:[#allocation5 + $0xf8] sm:$0xff]
        %v500 = vld [vmem:[#allocation5 + $0x100] sm:$0xff]
        %v501 = vld [vmem:[#allocation5 + $0x108] sm:$0xff]
        %v502 = vld [vmem:[#allocation5 + $0x110] sm:$0xff]
        %v503 = vld [vmem:[#allocation5 + $0x118] sm:$0xff]
        %v504 = vld [vmem:[#allocation5 + $0x120] sm:$0xff]
        %v505 = vld [vmem:[#allocation5 + $0x128] sm:$0xff]
        %v506 = vld [vmem:[#allocation5 + $0x130] sm:$0xff]
        %v507 = vld [vmem:[#allocation5 + $0x138] sm:$0xff]
        %v508 = vld [vmem:[#allocation5 + $0x140] sm:$0xff]
        %v509 = vld [vmem:[#allocation5 + $0x148] sm:$0xff]
        %v510 = vld [vmem:[#allocation5 + $0x150] sm:$0xff]
        %v511 = vld [vmem:[#allocation5 + $0x158] sm:$0xff]
        %v512 = vld [vmem:[#allocation5 + $0x160] sm:$0xff]
        %v513 = vld [vmem:[#allocation5 + $0x168] sm:$0xff]
        %v514 = vld [vmem:[#allocation5 + $0x170] sm:$0xff]
        %v515 = vld [vmem:[#allocation5 + $0x178] sm:$0xff]
        %v516 = vld [vmem:[#allocation5 + $0x180] sm:$0xff]
        %v517 = vld [vmem:[#allocation5 + $0x188] sm:$0xff]
        %v518 = vld [vmem:[#allocation5 + $0x190] sm:$0xff]
        %v519 = vld [vmem:[#allocation5 + $0x198] sm:$0xff]
        %v520 = vld [vmem:[#allocation5 + $0x1a0] sm:$0xff]
        %v521 = vld [vmem:[#allocation5 + $0x1a8] sm:$0xff]
        %v522 = vld [vmem:[#allocation5 + $0x1b0] sm:$0xff]
        %v523 = vld [vmem:[#allocation5 + $0x1b8] sm:$0xff]
        %v524 = vld [vmem:[#allocation5 + $0x1c0] sm:$0xff]
        %v525 = vld [vmem:[#allocation5 + $0x1c8] sm:$0xff]
        %v526 = vld [vmem:[#allocation5 + $0x1d0] sm:$0xff]
        %v527 = vld [vmem:[#allocation5 + $0x1d8] sm:$0xff]
        %v528 = vld [vmem:[#allocation5 + $0x1e0] sm:$0xff]
        %v529 = vld [vmem:[#allocation5 + $0x1e8] sm:$0xff]
        %v530 = vld [vmem:[#allocation5 + $0x1f0] sm:$0xff]
        %v531 = vld [vmem:[#allocation5 + $0x1f8] sm:$0xff]
        %v532 = vld [vmem:[#allocation5 + $0x200] sm:$0xff]
        %v533 = vld [vmem:[#allocation5 + $0x208] sm:$0xff]
        %v534 = vld [vmem:[#allocation5 + $0x210] sm:$0xff]
        %v535 = vld [vmem:[#allocation5 + $0x218] sm:$0xff]
        %v536 = vld [vmem:[#allocation5 + $0x220] sm:$0xff]
        %v537 = vld [vmem:[#allocation5 + $0x228] sm:$0xff]
        %v538 = vld [vmem:[#allocation5 + $0x230] sm:$0xff]
        %v539 = vld [vmem:[#allocation5 + $0x238] sm:$0xff]
        %v540 = vld [vmem:[#allocation5 + $0x240] sm:$0xff]
        %v541 = vld [vmem:[#allocation5 + $0x248] sm:$0xff]
        %v542 = vld [vmem:[#allocation5 + $0x250] sm:$0xff]
        %v543 = vld [vmem:[#allocation5 + $0x258] sm:$0xff]
        %v544 = vld [vmem:[#allocation5 + $0x260] sm:$0xff]
        %v545 = vld [vmem:[#allocation5 + $0x268] sm:$0xff]
        %v546 = vld [vmem:[#allocation5 + $0x270] sm:$0xff]
        %v547 = vld [vmem:[#allocation5 + $0x278] sm:$0xff]
        %v548 = vld [vmem:[#allocation5 + $0x280] sm:$0xff]
        %v549 = vld [vmem:[#allocation5 + $0x288] sm:$0xff]
        %v550 = vld [vmem:[#allocation5 + $0x290] sm:$0xff]
        %v551 = vld [vmem:[#allocation5 + $0x298] sm:$0xff]
        %v552 = vld [vmem:[#allocation5 + $0x2a0] sm:$0xff]
        %v553 = vld [vmem:[#allocation5 + $0x2a8] sm:$0xff]
        %v554 = vld [vmem:[#allocation5 + $0x2b0] sm:$0xff]
        %v555 = vld [vmem:[#allocation5 + $0x2b8] sm:$0xff]
        %v556 = vld [vmem:[#allocation5 + $0x2c0] sm:$0xff]
        %v557 = vld [vmem:[#allocation5 + $0x2c8] sm:$0xff]
        %v558 = vld [vmem:[#allocation5 + $0x2d0] sm:$0xff]
        %v559 = vld [vmem:[#allocation5 + $0x2d8] sm:$0xff]
        %v560 = vld [vmem:[#allocation5 + $0x2e0] sm:$0xff]
        %v561 = vld [vmem:[#allocation5 + $0x2e8] sm:$0xff]
        %v562 = vld [vmem:[#allocation5 + $0x2f0] sm:$0xff]
        %v563 = vld [vmem:[#allocation5 + $0x2f8] sm:$0xff]
        %v564 = vld [vmem:[#allocation5 + $0x300] sm:$0xff]
        %v565 = vld [vmem:[#allocation5 + $0x308] sm:$0xff]
        %v566 = vld [vmem:[#allocation5 + $0x310] sm:$0xff]
        %v567 = vld [vmem:[#allocation5 + $0x318] sm:$0xff]
        %v568 = vld [vmem:[#allocation5 + $0x320] sm:$0xff]
        %v569 = vld [vmem:[#allocation5 + $0x328] sm:$0xff]
        %v570 = vld [vmem:[#allocation5 + $0x330] sm:$0xff]
        %v571 = vld [vmem:[#allocation5 + $0x338] sm:$0xff]
        %v572 = vld [vmem:[#allocation5 + $0x340] sm:$0xff]
        %v573 = vld [vmem:[#allocation5 + $0x348] sm:$0xff]
        %v574 = vld [vmem:[#allocation5 + $0x350] sm:$0xff]
        %v575 = vld [vmem:[#allocation5 + $0x358] sm:$0xff]
        %v576 = vld [vmem:[#allocation5 + $0x360] sm:$0xff]
        %v577 = vld [vmem:[#allocation5 + $0x368] sm:$0xff]
        %v578 = vld [vmem:[#allocation5 + $0x370] sm:$0xff]
        %v579 = vld [vmem:[#allocation5 + $0x378] sm:$0xff]
        %v580 = vld [vmem:[#allocation5 + $0x380] sm:$0xff]
        %v581 = vld [vmem:[#allocation5 + $0x388] sm:$0xff]
        %v582 = vld [vmem:[#allocation5 + $0x390] sm:$0xff]
        %v583 = vld [vmem:[#allocation5 + $0x398] sm:$0xff]
        %v584 = vld [vmem:[#allocation5 + $0x3a0] sm:$0xff]
        %v585 = vld [vmem:[#allocation5 + $0x3a8] sm:$0xff]
        %v586 = vld [vmem:[#allocation5 + $0x3b0] sm:$0xff]
        %v587 = vld [vmem:[#allocation5 + $0x3b8] sm:$0xff]
        %v588 = vld [vmem:[#allocation5 + $0x3c0] sm:$0xff]
        %v589 = vld [vmem:[#allocation5 + $0x3c8] sm:$0xff]
        %v590 = vld [vmem:[#allocation5 + $0x3d0] sm:$0xff]
        %v591 = vld [vmem:[#allocation5 + $0x3d8] sm:$0xff]
        %v592 = vld [vmem:[#allocation5 + $0x3e0] sm:$0xff]
        %v593 = vld [vmem:[#allocation5 + $0x3e8] sm:$0xff]
        %v594 = vld [vmem:[#allocation5 + $0x3f0] sm:$0xff]
        %v595 = vld [vmem:[#allocation5 + $0x3f8] sm:$0xff]
        %v596 = vld [vmem:[#allocation5 + $0x400] sm:$0xff]
        %v597 = vld [vmem:[#allocation5 + $0x408] sm:$0xff]
        %v598 = vld [vmem:[#allocation5 + $0x410] sm:$0xff]
        %v599 = vld [vmem:[#allocation5 + $0x418] sm:$0xff]
        %v600 = vld [vmem:[#allocation5 + $0x420] sm:$0xff]
        %v601 = vld [vmem:[#allocation5 + $0x428] sm:$0xff]
        %v602 = vld [vmem:[#allocation5 + $0x430] sm:$0xff]
        %v603 = vld [vmem:[#allocation5 + $0x438] sm:$0xff]
        %v604 = vld [vmem:[#allocation5 + $0x440] sm:$0xff]
        %v605 = vld [vmem:[#allocation5 + $0x448] sm:$0xff]
        %v606 = vld [vmem:[#allocation5 + $0x450] sm:$0xff]
        %v607 = vld [vmem:[#allocation5 + $0x458] sm:$0xff]
        %v608 = vld [vmem:[#allocation5 + $0x460] sm:$0xff]
        %v609 = vld [vmem:[#allocation5 + $0x468] sm:$0xff]
        %v610 = vld [vmem:[#allocation5 + $0x470] sm:$0xff]
        %v611 = vld [vmem:[#allocation5 + $0x478] sm:$0xff]
        %v612 = vld [vmem:[#allocation5 + $0x480] sm:$0xff]
        %v613 = vld [vmem:[#allocation5 + $0x488] sm:$0xff]
        %v614 = vld [vmem:[#allocation5 + $0x490] sm:$0xff]
        %v615 = vld [vmem:[#allocation5 + $0x498] sm:$0xff]
        %v616 = vld [vmem:[#allocation5 + $0x4a0] sm:$0xff]
        %v617 = vld [vmem:[#allocation5 + $0x4a8] sm:$0xff]
        %v618 = vld [vmem:[#allocation5 + $0x4b0] sm:$0xff]
        %v619 = vld [vmem:[#allocation5 + $0x4b8] sm:$0xff]
        %v620 = vld [vmem:[#allocation5 + $0x4c0] sm:$0xff]
        %v621 = vld [vmem:[#allocation5 + $0x4c8] sm:$0xff]
        %v622 = vld [vmem:[#allocation5 + $0x4d0] sm:$0xff]
        %v623 = vld [vmem:[#allocation5 + $0x4d8] sm:$0xff]
        %v624 = vld [vmem:[#allocation5 + $0x4e0] sm:$0xff]
        %v625 = vld [vmem:[#allocation5 + $0x4e8] sm:$0xff]
        %v626 = vld [vmem:[#allocation5 + $0x4f0] sm:$0xff]
        %v627 = vld [vmem:[#allocation5 + $0x4f8] sm:$0xff]
        %v628 = vld [vmem:[#allocation5 + $0x500] sm:$0xff]
        %v629 = vld [vmem:[#allocation5 + $0x508] sm:$0xff]
        %v630 = vld [vmem:[#allocation5 + $0x510] sm:$0xff]
        %v631 = vld [vmem:[#allocation5 + $0x518] sm:$0xff]
        %v632 = vld [vmem:[#allocation5 + $0x520] sm:$0xff]
        %v633 = vld [vmem:[#allocation5 + $0x528] sm:$0xff]
        %v634 = vld [vmem:[#allocation5 + $0x530] sm:$0xff]
        %v635 = vld [vmem:[#allocation5 + $0x538] sm:$0xff]
        %v636 = vld [vmem:[#allocation5 + $0x540] sm:$0xff]
        %v637 = vld [vmem:[#allocation5 + $0x548] sm:$0xff]
        %v638 = vld [vmem:[#allocation5 + $0x550] sm:$0xff]
        %v639 = vld [vmem:[#allocation5 + $0x558] sm:$0xff]
        %v640 = vld [vmem:[#allocation5 + $0x560] sm:$0xff]
        %v641 = vld [vmem:[#allocation5 + $0x568] sm:$0xff]
        %v642 = vld [vmem:[#allocation5 + $0x570] sm:$0xff]
        %v643 = vld [vmem:[#allocation5 + $0x578] sm:$0xff]
        %v644 = vld [vmem:[#allocation5 + $0x580] sm:$0xff]
        %v645 = vld [vmem:[#allocation5 + $0x588] sm:$0xff]
        %v646 = vld [vmem:[#allocation5 + $0x590] sm:$0xff]
        %v647 = vld [vmem:[#allocation5 + $0x598] sm:$0xff]
        %v648 = vld [vmem:[#allocation5 + $0x5a0] sm:$0xff]
        %v649 = vld [vmem:[#allocation5 + $0x5a8] sm:$0xff]
        %v650 = vld [vmem:[#allocation5 + $0x5b0] sm:$0xff]
        %v651 = vld [vmem:[#allocation5 + $0x5b8] sm:$0xff]
        %v652 = vld [vmem:[#allocation5 + $0x5c0] sm:$0xff]
        %v653 = vld [vmem:[#allocation5 + $0x5c8] sm:$0xff]
        %v654 = vld [vmem:[#allocation5 + $0x5d0] sm:$0xff]
        %v655 = vld [vmem:[#allocation5 + $0x5d8] sm:$0xff]
        %v656 = vld [vmem:[#allocation5 + $0x5e0] sm:$0xff]
        %v657 = vld [vmem:[#allocation5 + $0x5e8] sm:$0xff]
        %v658 = vld [vmem:[#allocation5 + $0x5f0] sm:$0xff]
        %v659 = vld [vmem:[#allocation5 + $0x5f8] sm:$0xff]
        %v660 = vld [vmem:[#allocation5 + $0x600] sm:$0xff]
        %v661 = vld [vmem:[#allocation5 + $0x608] sm:$0xff]
        %v662 = vld [vmem:[#allocation5 + $0x610] sm:$0xff]
        %v663 = vld [vmem:[#allocation5 + $0x618] sm:$0xff]
        %v664 = vld [vmem:[#allocation5 + $0x620] sm:$0xff]
        %v665 = vld [vmem:[#allocation5 + $0x628] sm:$0xff]
        %v666 = vld [vmem:[#allocation5 + $0x630] sm:$0xff]
        %v667 = vld [vmem:[#allocation5 + $0x638] sm:$0xff]
        %v668 = vld [vmem:[#allocation5 + $0x640] sm:$0xff]
        %v669 = vld [vmem:[#allocation5 + $0x648] sm:$0xff]
        %v670 = vld [vmem:[#allocation5 + $0x650] sm:$0xff]
        %v671 = vld [vmem:[#allocation5 + $0x658] sm:$0xff]
        %v672 = vld [vmem:[#allocation5 + $0x660] sm:$0xff]
        %v673 = vld [vmem:[#allocation5 + $0x668] sm:$0xff]
        %v674 = vld [vmem:[#allocation5 + $0x670] sm:$0xff]
        %v675 = vld [vmem:[#allocation5 + $0x678] sm:$0xff]
        %v676 = vld [vmem:[#allocation5 + $0x680] sm:$0xff]
        %v677 = vld [vmem:[#allocation5 + $0x688] sm:$0xff]
        %v678 = vld [vmem:[#allocation5 + $0x690] sm:$0xff]
        %v679 = vld [vmem:[#allocation5 + $0x698] sm:$0xff]
        %v680 = vld [vmem:[#allocation5 + $0x6a0] sm:$0xff]
        %v681 = vld [vmem:[#allocation5 + $0x6a8] sm:$0xff]
        %v682 = vld [vmem:[#allocation5 + $0x6b0] sm:$0xff]
        %v683 = vld [vmem:[#allocation5 + $0x6b8] sm:$0xff]
        %v684 = vld [vmem:[#allocation5 + $0x6c0] sm:$0xff]
        %v685 = vld [vmem:[#allocation5 + $0x6c8] sm:$0xff]
        %v686 = vld [vmem:[#allocation5 + $0x6d0] sm:$0xff]
        %v687 = vld [vmem:[#allocation5 + $0x6d8] sm:$0xff]
        %v688 = vld [vmem:[#allocation5 + $0x6e0] sm:$0xff]
        %v689 = vld [vmem:[#allocation5 + $0x6e8] sm:$0xff]
        %v690 = vld [vmem:[#allocation5 + $0x6f0] sm:$0xff]
        %v691 = vld [vmem:[#allocation5 + $0x6f8] sm:$0xff]
        %v692 = vld [vmem:[#allocation5 + $0x700] sm:$0xff]
        %v693 = vld [vmem:[#allocation5 + $0x708] sm:$0xff]
        %v694 = vld [vmem:[#allocation5 + $0x710] sm:$0xff]
        %v695 = vld [vmem:[#allocation5 + $0x718] sm:$0xff]
        %v696 = vld [vmem:[#allocation5 + $0x720] sm:$0xff]
        %v697 = vld [vmem:[#allocation5 + $0x728] sm:$0xff]
        %v698 = vld [vmem:[#allocation5 + $0x730] sm:$0xff]
        %v699 = vld [vmem:[#allocation5 + $0x738] sm:$0xff]
        %v700 = vld [vmem:[#allocation5 + $0x740] sm:$0xff]
        %v701 = vld [vmem:[#allocation5 + $0x748] sm:$0xff]
        %v702 = vld [vmem:[#allocation5 + $0x750] sm:$0xff]
        %v703 = vld [vmem:[#allocation5 + $0x758] sm:$0xff]
        %v704 = vld [vmem:[#allocation5 + $0x760] sm:$0xff]
        %v705 = vld [vmem:[#allocation5 + $0x768] sm:$0xff]
        %v706 = vld [vmem:[#allocation5 + $0x770] sm:$0xff]
        %v707 = vld [vmem:[#allocation5 + $0x778] sm:$0xff]
        %v708 = vld [vmem:[#allocation5 + $0x780] sm:$0xff]
        %v709 = vld [vmem:[#allocation5 + $0x788] sm:$0xff]
        %v710 = vld [vmem:[#allocation5 + $0x790] sm:$0xff]
        %v711 = vld [vmem:[#allocation5 + $0x798] sm:$0xff]
        %v712 = vld [vmem:[#allocation5 + $0x7a0] sm:$0xff]
        %v713 = vld [vmem:[#allocation5 + $0x7a8] sm:$0xff]
        %v714 = vld [vmem:[#allocation5 + $0x7b0] sm:$0xff]
        %v715 = vld [vmem:[#allocation5 + $0x7b8] sm:$0xff]
        %v716 = vld [vmem:[#allocation5 + $0x7c0] sm:$0xff]
        %v717 = vld [vmem:[#allocation5 + $0x7c8] sm:$0xff]
        %v718 = vld [vmem:[#allocation5 + $0x7d0] sm:$0xff]
        %v719 = vld [vmem:[#allocation5 + $0x7d8] sm:$0xff]
        %v720 = vld [vmem:[#allocation5 + $0x7e0] sm:$0xff]
        %v721 = vld [vmem:[#allocation5 + $0x7e8] sm:$0xff]
        %v722 = vld [vmem:[#allocation5 + $0x7f0] sm:$0xff]
        %v723 = vld [vmem:[#allocation5 + $0x7f8] sm:$0xff]
        %v724 = vld [vmem:[#allocation5 + $0x800] sm:$0xff]
        %v725 = vld [vmem:[#allocation5 + $0x808] sm:$0xff]
        %v726 = vld [vmem:[#allocation5 + $0x810] sm:$0xff]
        %v727 = vld [vmem:[#allocation5 + $0x818] sm:$0xff]
        %v728 = vld [vmem:[#allocation5 + $0x820] sm:$0xff]
        %v729 = vld [vmem:[#allocation5 + $0x828] sm:$0xff]
        %v730 = vld [vmem:[#allocation5 + $0x830] sm:$0xff]
        %v731 = vld [vmem:[#allocation5 + $0x838] sm:$0xff]
        %v732 = vld [vmem:[#allocation5 + $0x840] sm:$0xff]
        %v733 = vld [vmem:[#allocation5 + $0x848] sm:$0xff]
        %v734 = vld [vmem:[#allocation5 + $0x850] sm:$0xff]
        %v735 = vld [vmem:[#allocation5 + $0x858] sm:$0xff]
        %v736 = vld [vmem:[#allocation5 + $0x860] sm:$0xff]
        %v737 = vld [vmem:[#allocation5 + $0x868] sm:$0xff]
        %v738 = vld [vmem:[#allocation5 + $0x870] sm:$0xff]
        %v739 = vld [vmem:[#allocation5 + $0x878] sm:$0xff]
        %v740 = vld [vmem:[#allocation5 + $0x880] sm:$0xff]
        %v741 = vld [vmem:[#allocation5 + $0x888] sm:$0xff]
        %v742 = vld [vmem:[#allocation5 + $0x890] sm:$0xff]
        %v743 = vld [vmem:[#allocation5 + $0x898] sm:$0xff]
        %v744 = vld [vmem:[#allocation5 + $0x8a0] sm:$0xff]
        %v745 = vld [vmem:[#allocation5 + $0x8a8] sm:$0xff]
        %v746 = vld [vmem:[#allocation5 + $0x8b0] sm:$0xff]
        %v747 = vld [vmem:[#allocation5 + $0x8b8] sm:$0xff]
        %v748 = vld [vmem:[#allocation5 + $0x8c0] sm:$0xff]
        %v749 = vld [vmem:[#allocation5 + $0x8c8] sm:$0xff]
        %v750 = vld [vmem:[#allocation5 + $0x8d0] sm:$0xff]
        %v751 = vld [vmem:[#allocation5 + $0x8d8] sm:$0xff]
        %v752 = vld [vmem:[#allocation5 + $0x8e0] sm:$0xff]
        %v753 = vld [vmem:[#allocation5 + $0x8e8] sm:$0xff]
        %v754 = vld [vmem:[#allocation5 + $0x8f0] sm:$0xff]
        %v755 = vld [vmem:[#allocation5 + $0x8f8] sm:$0xff]
        %v756 = vld [vmem:[#allocation5 + $0x900] sm:$0xff]
        %v757 = vld [vmem:[#allocation5 + $0x908] sm:$0xff]
        %v758 = vld [vmem:[#allocation5 + $0x910] sm:$0xff]
        %v759 = vld [vmem:[#allocation5 + $0x918] sm:$0xff]
        %v760 = vld [vmem:[#allocation5 + $0x920] sm:$0xff]
        %v761 = vld [vmem:[#allocation5 + $0x928] sm:$0xff]
        %v762 = vld [vmem:[#allocation5 + $0x930] sm:$0xff]
        %v763 = vld [vmem:[#allocation5 + $0x938] sm:$0xff]
        %v764 = vld [vmem:[#allocation5 + $0x940] sm:$0xff]
        %v765 = vld [vmem:[#allocation5 + $0x948] sm:$0xff]
        %v766 = vld [vmem:[#allocation5 + $0x950] sm:$0xff]
        %v767 = vld [vmem:[#allocation5 + $0x958] sm:$0xff]
        %v768 = vld [vmem:[#allocation5 + $0x960] sm:$0xff]
        %v769 = vld [vmem:[#allocation5 + $0x968] sm:$0xff]
        %v770 = vld [vmem:[#allocation5 + $0x970] sm:$0xff]
        %v771 = vld [vmem:[#allocation5 + $0x978] sm:$0xff]
        %v772 = vld [vmem:[#allocation5 + $0x980] sm:$0xff]
        %v773 = vld [vmem:[#allocation5 + $0x988] sm:$0xff]
        %v774 = vld [vmem:[#allocation5 + $0x990] sm:$0xff]
        %v775 = vld [vmem:[#allocation5 + $0x998] sm:$0xff]
        %v776 = vld [vmem:[#allocation5 + $0x9a0] sm:$0xff]
        %v777 = vld [vmem:[#allocation5 + $0x9a8] sm:$0xff]
        %v778 = vld [vmem:[#allocation5 + $0x9b0] sm:$0xff]
        %v779 = vld [vmem:[#allocation5 + $0x9b8] sm:$0xff]
        %v780 = vld [vmem:[#allocation5 + $0x9c0] sm:$0xff]
        %v781 = vld [vmem:[#allocation5 + $0x9c8] sm:$0xff]
        %v782 = vld [vmem:[#allocation5 + $0x9d0] sm:$0xff]
        %v783 = vld [vmem:[#allocation5 + $0x9d8] sm:$0xff]
        %v784 = vld [vmem:[#allocation5 + $0x9e0] sm:$0xff]
        %v785 = vld [vmem:[#allocation5 + $0x9e8] sm:$0xff]
        %v786 = vld [vmem:[#allocation5 + $0x9f0] sm:$0xff]
        %v787 = vld [vmem:[#allocation5 + $0x9f8] sm:$0xff]
        %v788 = vld [vmem:[#allocation5 + $0xa00] sm:$0xff]
        %v789 = vld [vmem:[#allocation5 + $0xa08] sm:$0xff]
        %v790 = vld [vmem:[#allocation5 + $0xa10] sm:$0xff]
        %v791 = vld [vmem:[#allocation5 + $0xa18] sm:$0xff]
        %v792 = vld [vmem:[#allocation5 + $0xa20] sm:$0xff]
        %v793 = vld [vmem:[#allocation5 + $0xa28] sm:$0xff]
        %v794 = vld [vmem:[#allocation5 + $0xa30] sm:$0xff]
        %v795 = vld [vmem:[#allocation5 + $0xa38] sm:$0xff]
        %v796 = vld [vmem:[#allocation5 + $0xa40] sm:$0xff]
        %v797 = vld [vmem:[#allocation5 + $0xa48] sm:$0xff]
        %v798 = vld [vmem:[#allocation5 + $0xa50] sm:$0xff]
        %v799 = vld [vmem:[#allocation5 + $0xa58] sm:$0xff]
        %v800 = vld [vmem:[#allocation5 + $0xa60] sm:$0xff]
        %v801 = vld [vmem:[#allocation5 + $0xa68] sm:$0xff]
        %v802 = vld [vmem:[#allocation5 + $0xa70] sm:$0xff]
        %v803 = vld [vmem:[#allocation5 + $0xa78] sm:$0xff]
        %v804 = vld [vmem:[#allocation5 + $0xa80] sm:$0xff]
        %v805 = vld [vmem:[#allocation5 + $0xa88] sm:$0xff]
        %v806 = vld [vmem:[#allocation5 + $0xa90] sm:$0xff]
        %v807 = vld [vmem:[#allocation5 + $0xa98] sm:$0xff]
        %v808 = vld [vmem:[#allocation5 + $0xaa0] sm:$0xff]
        %v809 = vld [vmem:[#allocation5 + $0xaa8] sm:$0xff]
        %v810 = vld [vmem:[#allocation5 + $0xab0] sm:$0xff]
        %v811 = vld [vmem:[#allocation5 + $0xab8] sm:$0xff]
        %v812 = vld [vmem:[#allocation5 + $0xac0] sm:$0xff]
        %v813 = vld [vmem:[#allocation5 + $0xac8] sm:$0xff]
        %v814 = vld [vmem:[#allocation5 + $0xad0] sm:$0xff]
        %v815 = vld [vmem:[#allocation5 + $0xad8] sm:$0xff]
        %v816 = vld [vmem:[#allocation5 + $0xae0] sm:$0xff]
        %v817 = vld [vmem:[#allocation5 + $0xae8] sm:$0xff]
        %v818 = vld [vmem:[#allocation5 + $0xaf0] sm:$0xff]
        %v819 = vld [vmem:[#allocation5 + $0xaf8] sm:$0xff]
        %v820 = vld [vmem:[#allocation5 + $0xb00] sm:$0xff]
        %v821 = vld [vmem:[#allocation5 + $0xb08] sm:$0xff]
        %v822 = vld [vmem:[#allocation5 + $0xb10] sm:$0xff]
        %v823 = vld [vmem:[#allocation5 + $0xb18] sm:$0xff]
        %v824 = vld [vmem:[#allocation5 + $0xb20] sm:$0xff]
        %v825 = vld [vmem:[#allocation5 + $0xb28] sm:$0xff]
        %v826 = vld [vmem:[#allocation5 + $0xb30] sm:$0xff]
        %v827 = vld [vmem:[#allocation5 + $0xb38] sm:$0xff]
        %v828 = vld [vmem:[#allocation5 + $0xb40] sm:$0xff]
        %v829 = vld [vmem:[#allocation5 + $0xb48] sm:$0xff]
        %v830 = vld [vmem:[#allocation5 + $0xb50] sm:$0xff]
        %v831 = vld [vmem:[#allocation5 + $0xb58] sm:$0xff]
        %v832 = vld [vmem:[#allocation5 + $0xb60] sm:$0xff]
        %v833 = vld [vmem:[#allocation5 + $0xb68] sm:$0xff]
        %v834 = vld [vmem:[#allocation5 + $0xb70] sm:$0xff]
        %v835 = vld [vmem:[#allocation5 + $0xb78] sm:$0xff]
        %v836 = vld [vmem:[#allocation5 + $0xb80] sm:$0xff]
        %v837 = vld [vmem:[#allocation5 + $0xb88] sm:$0xff]
        %v838 = vld [vmem:[#allocation5 + $0xb90] sm:$0xff]
        %v839 = vld [vmem:[#allocation5 + $0xb98] sm:$0xff]
        %v840 = vld [vmem:[#allocation5 + $0xba0] sm:$0xff]
        %v841 = vld [vmem:[#allocation5 + $0xba8] sm:$0xff]
        %v842 = vld [vmem:[#allocation5 + $0xbb0] sm:$0xff]
        %v843 = vld [vmem:[#allocation5 + $0xbb8] sm:$0xff]
        %v844 = vld [vmem:[#allocation5 + $0xbc0] sm:$0xff]
        %v845 = vld [vmem:[#allocation5 + $0xbc8] sm:$0xff]
        %v846 = vld [vmem:[#allocation5 + $0xbd0] sm:$0xff]
        %v847 = vld [vmem:[#allocation5 + $0xbd8] sm:$0xff]
        %v848 = vld [vmem:[#allocation5 + $0xbe0] sm:$0xff]
        %v849 = vld [vmem:[#allocation5 + $0xbe8] sm:$0xff]
        %v850 = vld [vmem:[#allocation5 + $0xbf0] sm:$0xff]
        %v851 = vld [vmem:[#allocation5 + $0xbf8] sm:$0xff]
        %v852 = vld [vmem:[#allocation5 + $0xc00] sm:$0xff]
        %v853 = vld [vmem:[#allocation5 + $0xc08] sm:$0xff]
        %v854 = vld [vmem:[#allocation5 + $0xc10] sm:$0xff]
        %v855 = vld [vmem:[#allocation5 + $0xc18] sm:$0xff]
        %v856 = vld [vmem:[#allocation5 + $0xc20] sm:$0xff]
        %v857 = vld [vmem:[#allocation5 + $0xc28] sm:$0xff]
        %v858 = vld [vmem:[#allocation5 + $0xc30] sm:$0xff]
        %v859 = vld [vmem:[#allocation5 + $0xc38] sm:$0xff]
        %v860 = vld [vmem:[#allocation5 + $0xc40] sm:$0xff]
        %v861 = vld [vmem:[#allocation5 + $0xc48] sm:$0xff]
        %v862 = vld [vmem:[#allocation5 + $0xc50] sm:$0xff]
        %v863 = vld [vmem:[#allocation5 + $0xc58] sm:$0xff]
        %v864 = vld [vmem:[#allocation5 + $0xc60] sm:$0xff]
        %v865 = vld [vmem:[#allocation5 + $0xc68] sm:$0xff]
        %v866 = vld [vmem:[#allocation5 + $0xc70] sm:$0xff]
        %v867 = vld [vmem:[#allocation5 + $0xc78] sm:$0xff]
        %v868 = vld [vmem:[#allocation5 + $0xc80] sm:$0xff]
        %v869 = vld [vmem:[#allocation5 + $0xc88] sm:$0xff]
        %v870 = vld [vmem:[#allocation5 + $0xc90] sm:$0xff]
        %v871 = vld [vmem:[#allocation5 + $0xc98] sm:$0xff]
        %v872 = vld [vmem:[#allocation5 + $0xca0] sm:$0xff]
        %v873 = vld [vmem:[#allocation5 + $0xca8] sm:$0xff]
        %v874 = vld [vmem:[#allocation5 + $0xcb0] sm:$0xff]
        %v875 = vld [vmem:[#allocation5 + $0xcb8] sm:$0xff]
        %v876 = vld [vmem:[#allocation5 + $0xcc0] sm:$0xff]
        %v877 = vld [vmem:[#allocation5 + $0xcc8] sm:$0xff]
        %v878 = vld [vmem:[#allocation5 + $0xcd0] sm:$0xff]
        %v879 = vld [vmem:[#allocation5 + $0xcd8] sm:$0xff]
        %v880 = vld [vmem:[#allocation5 + $0xce0] sm:$0xff]
        %v881 = vld [vmem:[#allocation5 + $0xce8] sm:$0xff]
        %v882 = vld [vmem:[#allocation5 + $0xcf0] sm:$0xff]
        %v883 = vld [vmem:[#allocation5 + $0xcf8] sm:$0xff]
        %v884 = vld [vmem:[#allocation5 + $0xd00] sm:$0xff]
        %v885 = vld [vmem:[#allocation5 + $0xd08] sm:$0xff]
        %v886 = vld [vmem:[#allocation5 + $0xd10] sm:$0xff]
        %v887 = vld [vmem:[#allocation5 + $0xd18] sm:$0xff]
        %v888 = vld [vmem:[#allocation5 + $0xd20] sm:$0xff]
        %v889 = vld [vmem:[#allocation5 + $0xd28] sm:$0xff]
        %v890 = vld [vmem:[#allocation5 + $0xd30] sm:$0xff]
        %v891 = vld [vmem:[#allocation5 + $0xd38] sm:$0xff]
        %v892 = vld [vmem:[#allocation5 + $0xd40] sm:$0xff]
        %v893 = vld [vmem:[#allocation5 + $0xd48] sm:$0xff]
        %v894 = vld [vmem:[#allocation5 + $0xd50] sm:$0xff]
        %v895 = vld [vmem:[#allocation5 + $0xd58] sm:$0xff]
        %v896 = vld [vmem:[#allocation5 + $0xd60] sm:$0xff]
        %v897 = vld [vmem:[#allocation5 + $0xd68] sm:$0xff]
        %v898 = vld [vmem:[#allocation5 + $0xd70] sm:$0xff]
        %v899 = vld [vmem:[#allocation5 + $0xd78] sm:$0xff]
        %v900 = vld [vmem:[#allocation5 + $0xd80] sm:$0xff]
        %v901 = vld [vmem:[#allocation5 + $0xd88] sm:$0xff]
        %v902 = vld [vmem:[#allocation5 + $0xd90] sm:$0xff]
        %v903 = vld [vmem:[#allocation5 + $0xd98] sm:$0xff]
        %v904 = vld [vmem:[#allocation5 + $0xda0] sm:$0xff]
        %v905 = vld [vmem:[#allocation5 + $0xda8] sm:$0xff]
        %v906 = vld [vmem:[#allocation5 + $0xdb0] sm:$0xff]
        %v907 = vld [vmem:[#allocation5 + $0xdb8] sm:$0xff]
        %v908 = vld [vmem:[#allocation5 + $0xdc0] sm:$0xff]
        %v909 = vld [vmem:[#allocation5 + $0xdc8] sm:$0xff]
        %v910 = vld [vmem:[#allocation5 + $0xdd0] sm:$0xff]
        %v911 = vld [vmem:[#allocation5 + $0xdd8] sm:$0xff]
        %v912 = vld [vmem:[#allocation5 + $0xde0] sm:$0xff]
        %v913 = vld [vmem:[#allocation5 + $0xde8] sm:$0xff]
        %v914 = vld [vmem:[#allocation5 + $0xdf0] sm:$0xff]
        %v915 = vld [vmem:[#allocation5 + $0xdf8] sm:$0xff]
        %v916 = vld [vmem:[#allocation5 + $0xe00] sm:$0xff]
        %v917 = vld [vmem:[#allocation5 + $0xe08] sm:$0xff]
        %v918 = vld [vmem:[#allocation5 + $0xe10] sm:$0xff]
        %v919 = vld [vmem:[#allocation5 + $0xe18] sm:$0xff]
        %v920 = vld [vmem:[#allocation5 + $0xe20] sm:$0xff]
        %v921 = vld [vmem:[#allocation5 + $0xe28] sm:$0xff]
        %v922 = vld [vmem:[#allocation5 + $0xe30] sm:$0xff]
        %v923 = vld [vmem:[#allocation5 + $0xe38] sm:$0xff]
        %v924 = vld [vmem:[#allocation5 + $0xe40] sm:$0xff]
        %v925 = vld [vmem:[#allocation5 + $0xe48] sm:$0xff]
        %v926 = vld [vmem:[#allocation5 + $0xe50] sm:$0xff]
        %v927 = vld [vmem:[#allocation5 + $0xe58] sm:$0xff]
        %v928 = vld [vmem:[#allocation5 + $0xe60] sm:$0xff]
        %v929 = vld [vmem:[#allocation5 + $0xe68] sm:$0xff]
        %v930 = vld [vmem:[#allocation5 + $0xe70] sm:$0xff]
        %v931 = vld [vmem:[#allocation5 + $0xe78] sm:$0xff]
        %v932 = vld [vmem:[#allocation5 + $0xe80] sm:$0xff]
        %v933 = vld [vmem:[#allocation5 + $0xe88] sm:$0xff]
        %v934 = vld [vmem:[#allocation5 + $0xe90] sm:$0xff]
        %v935 = vld [vmem:[#allocation5 + $0xe98] sm:$0xff]
        %v936 = vld [vmem:[#allocation5 + $0xea0] sm:$0xff]
        %v937 = vld [vmem:[#allocation5 + $0xea8] sm:$0xff]
        %v938 = vld [vmem:[#allocation5 + $0xeb0] sm:$0xff]
        %v939 = vld [vmem:[#allocation5 + $0xeb8] sm:$0xff]
        %v940 = vld [vmem:[#allocation5 + $0xec0] sm:$0xff]
        %v941 = vld [vmem:[#allocation5 + $0xec8] sm:$0xff]
        %v942 = vld [vmem:[#allocation5 + $0xed0] sm:$0xff]
        %v943 = vld [vmem:[#allocation5 + $0xed8] sm:$0xff]
        %v944 = vld [vmem:[#allocation5 + $0xee0] sm:$0xff]
        %v945 = vld [vmem:[#allocation5 + $0xee8] sm:$0xff]
        %v946 = vld [vmem:[#allocation5 + $0xef0] sm:$0xff]
        %v947 = vld [vmem:[#allocation5 + $0xef8] sm:$0xff]
        %v948 = vld [vmem:[#allocation5 + $0xf00] sm:$0xff]
        %v949 = vld [vmem:[#allocation5 + $0xf08] sm:$0xff]
        %v950 = vld [vmem:[#allocation5 + $0xf10] sm:$0xff]
        %v951 = vld [vmem:[#allocation5 + $0xf18] sm:$0xff]
        %v952 = vld [vmem:[#allocation5 + $0xf20] sm:$0xff]
        %v953 = vld [vmem:[#allocation5 + $0xf28] sm:$0xff]
        %v954 = vld [vmem:[#allocation5 + $0xf30] sm:$0xff]
        %v955 = vld [vmem:[#allocation5 + $0xf38] sm:$0xff]
        %v956 = vld [vmem:[#allocation5 + $0xf40] sm:$0xff]
        %v957 = vld [vmem:[#allocation5 + $0xf48] sm:$0xff]
        %v958 = vld [vmem:[#allocation5 + $0xf50] sm:$0xff]
        %v959 = vld [vmem:[#allocation5 + $0xf58] sm:$0xff]
        %v960 = vld [vmem:[#allocation5 + $0xf60] sm:$0xff]
        %v961 = vld [vmem:[#allocation5 + $0xf68] sm:$0xff]
        %v962 = vld [vmem:[#allocation5 + $0xf70] sm:$0xff]
        %v963 = vld [vmem:[#allocation5 + $0xf78] sm:$0xff]
        %v964 = vld [vmem:[#allocation5 + $0xf80] sm:$0xff]
        %v965 = vld [vmem:[#allocation5 + $0xf88] sm:$0xff]
        %v966 = vld [vmem:[#allocation5 + $0xf90] sm:$0xff]
        %v967 = vld [vmem:[#allocation5 + $0xf98] sm:$0xff]
        %v968 = vld [vmem:[#allocation5 + $0xfa0] sm:$0xff]
        %v969 = vld [vmem:[#allocation5 + $0xfa8] sm:$0xff]
        %v970 = vld [vmem:[#allocation5 + $0xfb0] sm:$0xff]
        %v971 = vld [vmem:[#allocation5 + $0xfb8] sm:$0xff]
        %v972 = vld [vmem:[#allocation5 + $0xfc0] sm:$0xff]
        %v973 = vld [vmem:[#allocation5 + $0xfc8] sm:$0xff]
        %v974 = vld [vmem:[#allocation5 + $0xfd0] sm:$0xff]
        %v975 = vld [vmem:[#allocation5 + $0xfd8] sm:$0xff]
        %v976 = vld [vmem:[#allocation5 + $0xfe0] sm:$0xff]
        %v977 = vld [vmem:[#allocation5 + $0xfe8] sm:$0xff]
        %v978 = vld [vmem:[#allocation5 + $0xff0] sm:$0xff]
        %v979 = vld [vmem:[#allocation5 + $0xff8] sm:$0xff]
        %v980 = vld [vmem:[#allocation7] sm:$0xf]
        %v982 = vlaneseq
        %v983 = vshrl.u32 %v982, 7
        %v984 = vsub.s32 0, %v983
        %v985 = vrot.slane %v980, %v984
        %v986 = vlaneseq
        %v987 = vshrl.u32 %v986, 7
        %v988 = vsub.s32 1, %v987
        %v989 = vrot.slane %v980, %v988
        %v990 = vlaneseq
        %v991 = vshrl.u32 %v990, 7
        %v992 = vsub.s32 2, %v991
        %v993 = vrot.slane %v980, %v992
        %v994 = vlaneseq
        %v995 = vshrl.u32 %v994, 7
        %v996 = vsub.s32 3, %v995
        %v997 = vrot.slane %v980, %v996
        %v1514 = vunpack.c.l.b16 %v468
        %v1515 = vunpack.c.h.b16 %v468
        %v1516 = vunpack.c.l.b16 %v469
        %v1517 = vunpack.c.h.b16 %v469
        %v1518 = vunpack.c.l.b16 %v470
        %v1519 = vunpack.c.h.b16 %v470
        %v1520 = vunpack.c.l.b16 %v471
        %v1521 = vunpack.c.h.b16 %v471
        %v1522 = vunpack.c.l.b16 %v472
        %v1523 = vunpack.c.h.b16 %v472
        %v1524 = vunpack.c.l.b16 %v473
        %v1525 = vunpack.c.h.b16 %v473
        %v1526 = vunpack.c.l.b16 %v474
        %v1527 = vunpack.c.h.b16 %v474
        %v1528 = vunpack.c.l.b16 %v475
        %v1529 = vunpack.c.h.b16 %v475
        %v1530 = vunpack.c.l.b16 %v476
        %v1531 = vunpack.c.h.b16 %v476
        %v1532 = vunpack.c.l.b16 %v477
        %v1533 = vunpack.c.h.b16 %v477
        %v1534 = vunpack.c.l.b16 %v478
        %v1535 = vunpack.c.h.b16 %v478
        %v1536 = vunpack.c.l.b16 %v479
        %v1537 = vunpack.c.h.b16 %v479
        %v1538 = vunpack.c.l.b16 %v480
        %v1539 = vunpack.c.h.b16 %v480
        %v1540 = vunpack.c.l.b16 %v481
        %v1541 = vunpack.c.h.b16 %v481
        %v1542 = vunpack.c.l.b16 %v482
        %v1543 = vunpack.c.h.b16 %v482
        %v1544 = vunpack.c.l.b16 %v483
        %v1545 = vunpack.c.h.b16 %v483
        %v1546 = vunpack.c.l.b16 %v484
        %v1547 = vunpack.c.h.b16 %v484
        %v1548 = vunpack.c.l.b16 %v485
        %v1549 = vunpack.c.h.b16 %v485
        %v1550 = vunpack.c.l.b16 %v486
        %v1551 = vunpack.c.h.b16 %v486
        %v1552 = vunpack.c.l.b16 %v487
        %v1553 = vunpack.c.h.b16 %v487
        %v1554 = vunpack.c.l.b16 %v488
        %v1555 = vunpack.c.h.b16 %v488
        %v1556 = vunpack.c.l.b16 %v489
        %v1557 = vunpack.c.h.b16 %v489
        %v1558 = vunpack.c.l.b16 %v490
        %v1559 = vunpack.c.h.b16 %v490
        %v1560 = vunpack.c.l.b16 %v491
        %v1561 = vunpack.c.h.b16 %v491
        %v1562 = vunpack.c.l.b16 %v492
        %v1563 = vunpack.c.h.b16 %v492
        %v1564 = vunpack.c.l.b16 %v493
        %v1565 = vunpack.c.h.b16 %v493
        %v1566 = vunpack.c.l.b16 %v494
        %v1567 = vunpack.c.h.b16 %v494
        %v1568 = vunpack.c.l.b16 %v495
        %v1569 = vunpack.c.h.b16 %v495
        %v1570 = vunpack.c.l.b16 %v496
        %v1571 = vunpack.c.h.b16 %v496
        %v1572 = vunpack.c.l.b16 %v497
        %v1573 = vunpack.c.h.b16 %v497
        %v1574 = vunpack.c.l.b16 %v498
        %v1575 = vunpack.c.h.b16 %v498
        %v1576 = vunpack.c.l.b16 %v499
        %v1577 = vunpack.c.h.b16 %v499
        %v1578 = vunpack.c.l.b16 %v500
        %v1579 = vunpack.c.h.b16 %v500
        %v1580 = vunpack.c.l.b16 %v501
        %v1581 = vunpack.c.h.b16 %v501
        %v1582 = vunpack.c.l.b16 %v502
        %v1583 = vunpack.c.h.b16 %v502
        %v1584 = vunpack.c.l.b16 %v503
        %v1585 = vunpack.c.h.b16 %v503
        %v1586 = vunpack.c.l.b16 %v504
        %v1587 = vunpack.c.h.b16 %v504
        %v1588 = vunpack.c.l.b16 %v505
        %v1589 = vunpack.c.h.b16 %v505
        %v1590 = vunpack.c.l.b16 %v506
        %v1591 = vunpack.c.h.b16 %v506
        %v1592 = vunpack.c.l.b16 %v507
        %v1593 = vunpack.c.h.b16 %v507
        %v1594 = vunpack.c.l.b16 %v508
        %v1595 = vunpack.c.h.b16 %v508
        %v1596 = vunpack.c.l.b16 %v509
        %v1597 = vunpack.c.h.b16 %v509
        %v1598 = vunpack.c.l.b16 %v510
        %v1599 = vunpack.c.h.b16 %v510
        %v1600 = vunpack.c.l.b16 %v511
        %v1601 = vunpack.c.h.b16 %v511
        %v1602 = vunpack.c.l.b16 %v512
        %v1603 = vunpack.c.h.b16 %v512
        %v1604 = vunpack.c.l.b16 %v513
        %v1605 = vunpack.c.h.b16 %v513
        %v1606 = vunpack.c.l.b16 %v514
        %v1607 = vunpack.c.h.b16 %v514
        %v1608 = vunpack.c.l.b16 %v515
        %v1609 = vunpack.c.h.b16 %v515
        %v1610 = vunpack.c.l.b16 %v516
        %v1611 = vunpack.c.h.b16 %v516
        %v1612 = vunpack.c.l.b16 %v517
        %v1613 = vunpack.c.h.b16 %v517
        %v1614 = vunpack.c.l.b16 %v518
        %v1615 = vunpack.c.h.b16 %v518
        %v1616 = vunpack.c.l.b16 %v519
        %v1617 = vunpack.c.h.b16 %v519
        %v1618 = vunpack.c.l.b16 %v520
        %v1619 = vunpack.c.h.b16 %v520
        %v1620 = vunpack.c.l.b16 %v521
        %v1621 = vunpack.c.h.b16 %v521
        %v1622 = vunpack.c.l.b16 %v522
        %v1623 = vunpack.c.h.b16 %v522
        %v1624 = vunpack.c.l.b16 %v523
        %v1625 = vunpack.c.h.b16 %v523
        %v1626 = vunpack.c.l.b16 %v524
        %v1627 = vunpack.c.h.b16 %v524
        %v1628 = vunpack.c.l.b16 %v525
        %v1629 = vunpack.c.h.b16 %v525
        %v1630 = vunpack.c.l.b16 %v526
        %v1631 = vunpack.c.h.b16 %v526
        %v1632 = vunpack.c.l.b16 %v527
        %v1633 = vunpack.c.h.b16 %v527
        %v1634 = vunpack.c.l.b16 %v528
        %v1635 = vunpack.c.h.b16 %v528
        %v1636 = vunpack.c.l.b16 %v529
        %v1637 = vunpack.c.h.b16 %v529
        %v1638 = vunpack.c.l.b16 %v530
        %v1639 = vunpack.c.h.b16 %v530
        %v1640 = vunpack.c.l.b16 %v531
        %v1641 = vunpack.c.h.b16 %v531
        %v1642 = vunpack.c.l.b16 %v532
        %v1643 = vunpack.c.h.b16 %v532
        %v1644 = vunpack.c.l.b16 %v533
        %v1645 = vunpack.c.h.b16 %v533
        %v1646 = vunpack.c.l.b16 %v534
        %v1647 = vunpack.c.h.b16 %v534
        %v1648 = vunpack.c.l.b16 %v535
        %v1649 = vunpack.c.h.b16 %v535
        %v1650 = vunpack.c.l.b16 %v536
        %v1651 = vunpack.c.h.b16 %v536
        %v1652 = vunpack.c.l.b16 %v537
        %v1653 = vunpack.c.h.b16 %v537
        %v1654 = vunpack.c.l.b16 %v538
        %v1655 = vunpack.c.h.b16 %v538
        %v1656 = vunpack.c.l.b16 %v539
        %v1657 = vunpack.c.h.b16 %v539
        %v1658 = vunpack.c.l.b16 %v540
        %v1659 = vunpack.c.h.b16 %v540
        %v1660 = vunpack.c.l.b16 %v541
        %v1661 = vunpack.c.h.b16 %v541
        %v1662 = vunpack.c.l.b16 %v542
        %v1663 = vunpack.c.h.b16 %v542
        %v1664 = vunpack.c.l.b16 %v543
        %v1665 = vunpack.c.h.b16 %v543
        %v1666 = vunpack.c.l.b16 %v544
        %v1667 = vunpack.c.h.b16 %v544
        %v1668 = vunpack.c.l.b16 %v545
        %v1669 = vunpack.c.h.b16 %v545
        %v1670 = vunpack.c.l.b16 %v546
        %v1671 = vunpack.c.h.b16 %v546
        %v1672 = vunpack.c.l.b16 %v547
        %v1673 = vunpack.c.h.b16 %v547
        %v1674 = vunpack.c.l.b16 %v548
        %v1675 = vunpack.c.h.b16 %v548
        %v1676 = vunpack.c.l.b16 %v549
        %v1677 = vunpack.c.h.b16 %v549
        %v1678 = vunpack.c.l.b16 %v550
        %v1679 = vunpack.c.h.b16 %v550
        %v1680 = vunpack.c.l.b16 %v551
        %v1681 = vunpack.c.h.b16 %v551
        %v1682 = vunpack.c.l.b16 %v552
        %v1683 = vunpack.c.h.b16 %v552
        %v1684 = vunpack.c.l.b16 %v553
        %v1685 = vunpack.c.h.b16 %v553
        %v1686 = vunpack.c.l.b16 %v554
        %v1687 = vunpack.c.h.b16 %v554
        %v1688 = vunpack.c.l.b16 %v555
        %v1689 = vunpack.c.h.b16 %v555
        %v1690 = vunpack.c.l.b16 %v556
        %v1691 = vunpack.c.h.b16 %v556
        %v1692 = vunpack.c.l.b16 %v557
        %v1693 = vunpack.c.h.b16 %v557
        %v1694 = vunpack.c.l.b16 %v558
        %v1695 = vunpack.c.h.b16 %v558
        %v1696 = vunpack.c.l.b16 %v559
        %v1697 = vunpack.c.h.b16 %v559
        %v1698 = vunpack.c.l.b16 %v560
        %v1699 = vunpack.c.h.b16 %v560
        %v1700 = vunpack.c.l.b16 %v561
        %v1701 = vunpack.c.h.b16 %v561
        %v1702 = vunpack.c.l.b16 %v562
        %v1703 = vunpack.c.h.b16 %v562
        %v1704 = vunpack.c.l.b16 %v563
        %v1705 = vunpack.c.h.b16 %v563
        %v1706 = vunpack.c.l.b16 %v564
        %v1707 = vunpack.c.h.b16 %v564
        %v1708 = vunpack.c.l.b16 %v565
        %v1709 = vunpack.c.h.b16 %v565
        %v1710 = vunpack.c.l.b16 %v566
        %v1711 = vunpack.c.h.b16 %v566
        %v1712 = vunpack.c.l.b16 %v567
        %v1713 = vunpack.c.h.b16 %v567
        %v1714 = vunpack.c.l.b16 %v568
        %v1715 = vunpack.c.h.b16 %v568
        %v1716 = vunpack.c.l.b16 %v569
        %v1717 = vunpack.c.h.b16 %v569
        %v1718 = vunpack.c.l.b16 %v570
        %v1719 = vunpack.c.h.b16 %v570
        %v1720 = vunpack.c.l.b16 %v571
        %v1721 = vunpack.c.h.b16 %v571
        %v1722 = vunpack.c.l.b16 %v572
        %v1723 = vunpack.c.h.b16 %v572
        %v1724 = vunpack.c.l.b16 %v573
        %v1725 = vunpack.c.h.b16 %v573
        %v1726 = vunpack.c.l.b16 %v574
        %v1727 = vunpack.c.h.b16 %v574
        %v1728 = vunpack.c.l.b16 %v575
        %v1729 = vunpack.c.h.b16 %v575
        %v1730 = vunpack.c.l.b16 %v576
        %v1731 = vunpack.c.h.b16 %v576
        %v1732 = vunpack.c.l.b16 %v577
        %v1733 = vunpack.c.h.b16 %v577
        %v1734 = vunpack.c.l.b16 %v578
        %v1735 = vunpack.c.h.b16 %v578
        %v1736 = vunpack.c.l.b16 %v579
        %v1737 = vunpack.c.h.b16 %v579
        %v1738 = vunpack.c.l.b16 %v580
        %v1739 = vunpack.c.h.b16 %v580
        %v1740 = vunpack.c.l.b16 %v581
        %v1741 = vunpack.c.h.b16 %v581
        %v1742 = vunpack.c.l.b16 %v582
        %v1743 = vunpack.c.h.b16 %v582
        %v1744 = vunpack.c.l.b16 %v583
        %v1745 = vunpack.c.h.b16 %v583
        %v1746 = vunpack.c.l.b16 %v584
        %v1747 = vunpack.c.h.b16 %v584
        %v1748 = vunpack.c.l.b16 %v585
        %v1749 = vunpack.c.h.b16 %v585
        %v1750 = vunpack.c.l.b16 %v586
        %v1751 = vunpack.c.h.b16 %v586
        %v1752 = vunpack.c.l.b16 %v587
        %v1753 = vunpack.c.h.b16 %v587
        %v1754 = vunpack.c.l.b16 %v588
        %v1755 = vunpack.c.h.b16 %v588
        %v1756 = vunpack.c.l.b16 %v589
        %v1757 = vunpack.c.h.b16 %v589
        %v1758 = vunpack.c.l.b16 %v590
        %v1759 = vunpack.c.h.b16 %v590
        %v1760 = vunpack.c.l.b16 %v591
        %v1761 = vunpack.c.h.b16 %v591
        %v1762 = vunpack.c.l.b16 %v592
        %v1763 = vunpack.c.h.b16 %v592
        %v1764 = vunpack.c.l.b16 %v593
        %v1765 = vunpack.c.h.b16 %v593
        %v1766 = vunpack.c.l.b16 %v594
        %v1767 = vunpack.c.h.b16 %v594
        %v1768 = vunpack.c.l.b16 %v595
        %v1769 = vunpack.c.h.b16 %v595
        %v1770 = vunpack.c.l.b16 %v596
        %v1771 = vunpack.c.h.b16 %v596
        %v1772 = vunpack.c.l.b16 %v597
        %v1773 = vunpack.c.h.b16 %v597
        %v1774 = vunpack.c.l.b16 %v598
        %v1775 = vunpack.c.h.b16 %v598
        %v1776 = vunpack.c.l.b16 %v599
        %v1777 = vunpack.c.h.b16 %v599
        %v1778 = vunpack.c.l.b16 %v600
        %v1779 = vunpack.c.h.b16 %v600
        %v1780 = vunpack.c.l.b16 %v601
        %v1781 = vunpack.c.h.b16 %v601
        %v1782 = vunpack.c.l.b16 %v602
        %v1783 = vunpack.c.h.b16 %v602
        %v1784 = vunpack.c.l.b16 %v603
        %v1785 = vunpack.c.h.b16 %v603
        %v1786 = vunpack.c.l.b16 %v604
        %v1787 = vunpack.c.h.b16 %v604
        %v1788 = vunpack.c.l.b16 %v605
        %v1789 = vunpack.c.h.b16 %v605
        %v1790 = vunpack.c.l.b16 %v606
        %v1791 = vunpack.c.h.b16 %v606
        %v1792 = vunpack.c.l.b16 %v607
        %v1793 = vunpack.c.h.b16 %v607
        %v1794 = vunpack.c.l.b16 %v608
        %v1795 = vunpack.c.h.b16 %v608
        %v1796 = vunpack.c.l.b16 %v609
        %v1797 = vunpack.c.h.b16 %v609
        %v1798 = vunpack.c.l.b16 %v610
        %v1799 = vunpack.c.h.b16 %v610
        %v1800 = vunpack.c.l.b16 %v611
        %v1801 = vunpack.c.h.b16 %v611
        %v1802 = vunpack.c.l.b16 %v612
        %v1803 = vunpack.c.h.b16 %v612
        %v1804 = vunpack.c.l.b16 %v613
        %v1805 = vunpack.c.h.b16 %v613
        %v1806 = vunpack.c.l.b16 %v614
        %v1807 = vunpack.c.h.b16 %v614
        %v1808 = vunpack.c.l.b16 %v615
        %v1809 = vunpack.c.h.b16 %v615
        %v1810 = vunpack.c.l.b16 %v616
        %v1811 = vunpack.c.h.b16 %v616
        %v1812 = vunpack.c.l.b16 %v617
        %v1813 = vunpack.c.h.b16 %v617
        %v1814 = vunpack.c.l.b16 %v618
        %v1815 = vunpack.c.h.b16 %v618
        %v1816 = vunpack.c.l.b16 %v619
        %v1817 = vunpack.c.h.b16 %v619
        %v1818 = vunpack.c.l.b16 %v620
        %v1819 = vunpack.c.h.b16 %v620
        %v1820 = vunpack.c.l.b16 %v621
        %v1821 = vunpack.c.h.b16 %v621
        %v1822 = vunpack.c.l.b16 %v622
        %v1823 = vunpack.c.h.b16 %v622
        %v1824 = vunpack.c.l.b16 %v623
        %v1825 = vunpack.c.h.b16 %v623
        %v1826 = vunpack.c.l.b16 %v624
        %v1827 = vunpack.c.h.b16 %v624
        %v1828 = vunpack.c.l.b16 %v625
        %v1829 = vunpack.c.h.b16 %v625
        %v1830 = vunpack.c.l.b16 %v626
        %v1831 = vunpack.c.h.b16 %v626
        %v1832 = vunpack.c.l.b16 %v627
        %v1833 = vunpack.c.h.b16 %v627
        %v1834 = vunpack.c.l.b16 %v628
        %v1835 = vunpack.c.h.b16 %v628
        %v1836 = vunpack.c.l.b16 %v629
        %v1837 = vunpack.c.h.b16 %v629
        %v1838 = vunpack.c.l.b16 %v630
        %v1839 = vunpack.c.h.b16 %v630
        %v1840 = vunpack.c.l.b16 %v631
        %v1841 = vunpack.c.h.b16 %v631
        %v1842 = vunpack.c.l.b16 %v632
        %v1843 = vunpack.c.h.b16 %v632
        %v1844 = vunpack.c.l.b16 %v633
        %v1845 = vunpack.c.h.b16 %v633
        %v1846 = vunpack.c.l.b16 %v634
        %v1847 = vunpack.c.h.b16 %v634
        %v1848 = vunpack.c.l.b16 %v635
        %v1849 = vunpack.c.h.b16 %v635
        %v1850 = vunpack.c.l.b16 %v636
        %v1851 = vunpack.c.h.b16 %v636
        %v1852 = vunpack.c.l.b16 %v637
        %v1853 = vunpack.c.h.b16 %v637
        %v1854 = vunpack.c.l.b16 %v638
        %v1855 = vunpack.c.h.b16 %v638
        %v1856 = vunpack.c.l.b16 %v639
        %v1857 = vunpack.c.h.b16 %v639
        %v1858 = vunpack.c.l.b16 %v640
        %v1859 = vunpack.c.h.b16 %v640
        %v1860 = vunpack.c.l.b16 %v641
        %v1861 = vunpack.c.h.b16 %v641
        %v1862 = vunpack.c.l.b16 %v642
        %v1863 = vunpack.c.h.b16 %v642
        %v1864 = vunpack.c.l.b16 %v643
        %v1865 = vunpack.c.h.b16 %v643
        %v1866 = vunpack.c.l.b16 %v644
        %v1867 = vunpack.c.h.b16 %v644
        %v1868 = vunpack.c.l.b16 %v645
        %v1869 = vunpack.c.h.b16 %v645
        %v1870 = vunpack.c.l.b16 %v646
        %v1871 = vunpack.c.h.b16 %v646
        %v1872 = vunpack.c.l.b16 %v647
        %v1873 = vunpack.c.h.b16 %v647
        %v1874 = vunpack.c.l.b16 %v648
        %v1875 = vunpack.c.h.b16 %v648
        %v1876 = vunpack.c.l.b16 %v649
        %v1877 = vunpack.c.h.b16 %v649
        %v1878 = vunpack.c.l.b16 %v650
        %v1879 = vunpack.c.h.b16 %v650
        %v1880 = vunpack.c.l.b16 %v651
        %v1881 = vunpack.c.h.b16 %v651
        %v1882 = vunpack.c.l.b16 %v652
        %v1883 = vunpack.c.h.b16 %v652
        %v1884 = vunpack.c.l.b16 %v653
        %v1885 = vunpack.c.h.b16 %v653
        %v1886 = vunpack.c.l.b16 %v654
        %v1887 = vunpack.c.h.b16 %v654
        %v1888 = vunpack.c.l.b16 %v655
        %v1889 = vunpack.c.h.b16 %v655
        %v1890 = vunpack.c.l.b16 %v656
        %v1891 = vunpack.c.h.b16 %v656
        %v1892 = vunpack.c.l.b16 %v657
        %v1893 = vunpack.c.h.b16 %v657
        %v1894 = vunpack.c.l.b16 %v658
        %v1895 = vunpack.c.h.b16 %v658
        %v1896 = vunpack.c.l.b16 %v659
        %v1897 = vunpack.c.h.b16 %v659
        %v1898 = vunpack.c.l.b16 %v660
        %v1899 = vunpack.c.h.b16 %v660
        %v1900 = vunpack.c.l.b16 %v661
        %v1901 = vunpack.c.h.b16 %v661
        %v1902 = vunpack.c.l.b16 %v662
        %v1903 = vunpack.c.h.b16 %v662
        %v1904 = vunpack.c.l.b16 %v663
        %v1905 = vunpack.c.h.b16 %v663
        %v1906 = vunpack.c.l.b16 %v664
        %v1907 = vunpack.c.h.b16 %v664
        %v1908 = vunpack.c.l.b16 %v665
        %v1909 = vunpack.c.h.b16 %v665
        %v1910 = vunpack.c.l.b16 %v666
        %v1911 = vunpack.c.h.b16 %v666
        %v1912 = vunpack.c.l.b16 %v667
        %v1913 = vunpack.c.h.b16 %v667
        %v1914 = vunpack.c.l.b16 %v668
        %v1915 = vunpack.c.h.b16 %v668
        %v1916 = vunpack.c.l.b16 %v669
        %v1917 = vunpack.c.h.b16 %v669
        %v1918 = vunpack.c.l.b16 %v670
        %v1919 = vunpack.c.h.b16 %v670
        %v1920 = vunpack.c.l.b16 %v671
        %v1921 = vunpack.c.h.b16 %v671
        %v1922 = vunpack.c.l.b16 %v672
        %v1923 = vunpack.c.h.b16 %v672
        %v1924 = vunpack.c.l.b16 %v673
        %v1925 = vunpack.c.h.b16 %v673
        %v1926 = vunpack.c.l.b16 %v674
        %v1927 = vunpack.c.h.b16 %v674
        %v1928 = vunpack.c.l.b16 %v675
        %v1929 = vunpack.c.h.b16 %v675
        %v1930 = vunpack.c.l.b16 %v676
        %v1931 = vunpack.c.h.b16 %v676
        %v1932 = vunpack.c.l.b16 %v677
        %v1933 = vunpack.c.h.b16 %v677
        %v1934 = vunpack.c.l.b16 %v678
        %v1935 = vunpack.c.h.b16 %v678
        %v1936 = vunpack.c.l.b16 %v679
        %v1937 = vunpack.c.h.b16 %v679
        %v1938 = vunpack.c.l.b16 %v680
        %v1939 = vunpack.c.h.b16 %v680
        %v1940 = vunpack.c.l.b16 %v681
        %v1941 = vunpack.c.h.b16 %v681
        %v1942 = vunpack.c.l.b16 %v682
        %v1943 = vunpack.c.h.b16 %v682
        %v1944 = vunpack.c.l.b16 %v683
        %v1945 = vunpack.c.h.b16 %v683
        %v1946 = vunpack.c.l.b16 %v684
        %v1947 = vunpack.c.h.b16 %v684
        %v1948 = vunpack.c.l.b16 %v685
        %v1949 = vunpack.c.h.b16 %v685
        %v1950 = vunpack.c.l.b16 %v686
        %v1951 = vunpack.c.h.b16 %v686
        %v1952 = vunpack.c.l.b16 %v687
        %v1953 = vunpack.c.h.b16 %v687
        %v1954 = vunpack.c.l.b16 %v688
        %v1955 = vunpack.c.h.b16 %v688
        %v1956 = vunpack.c.l.b16 %v689
        %v1957 = vunpack.c.h.b16 %v689
        %v1958 = vunpack.c.l.b16 %v690
        %v1959 = vunpack.c.h.b16 %v690
        %v1960 = vunpack.c.l.b16 %v691
        %v1961 = vunpack.c.h.b16 %v691
        %v1962 = vunpack.c.l.b16 %v692
        %v1963 = vunpack.c.h.b16 %v692
        %v1964 = vunpack.c.l.b16 %v693
        %v1965 = vunpack.c.h.b16 %v693
        %v1966 = vunpack.c.l.b16 %v694
        %v1967 = vunpack.c.h.b16 %v694
        %v1968 = vunpack.c.l.b16 %v695
        %v1969 = vunpack.c.h.b16 %v695
        %v1970 = vunpack.c.l.b16 %v696
        %v1971 = vunpack.c.h.b16 %v696
        %v1972 = vunpack.c.l.b16 %v697
        %v1973 = vunpack.c.h.b16 %v697
        %v1974 = vunpack.c.l.b16 %v698
        %v1975 = vunpack.c.h.b16 %v698
        %v1976 = vunpack.c.l.b16 %v699
        %v1977 = vunpack.c.h.b16 %v699
        %v1978 = vunpack.c.l.b16 %v700
        %v1979 = vunpack.c.h.b16 %v700
        %v1980 = vunpack.c.l.b16 %v701
        %v1981 = vunpack.c.h.b16 %v701
        %v1982 = vunpack.c.l.b16 %v702
        %v1983 = vunpack.c.h.b16 %v702
        %v1984 = vunpack.c.l.b16 %v703
        %v1985 = vunpack.c.h.b16 %v703
        %v1986 = vunpack.c.l.b16 %v704
        %v1987 = vunpack.c.h.b16 %v704
        %v1988 = vunpack.c.l.b16 %v705
        %v1989 = vunpack.c.h.b16 %v705
        %v1990 = vunpack.c.l.b16 %v706
        %v1991 = vunpack.c.h.b16 %v706
        %v1992 = vunpack.c.l.b16 %v707
        %v1993 = vunpack.c.h.b16 %v707
        %v1994 = vunpack.c.l.b16 %v708
        %v1995 = vunpack.c.h.b16 %v708
        %v1996 = vunpack.c.l.b16 %v709
        %v1997 = vunpack.c.h.b16 %v709
        %v1998 = vunpack.c.l.b16 %v710
        %v1999 = vunpack.c.h.b16 %v710
        %v2000 = vunpack.c.l.b16 %v711
        %v2001 = vunpack.c.h.b16 %v711
        %v2002 = vunpack.c.l.b16 %v712
        %v2003 = vunpack.c.h.b16 %v712
        %v2004 = vunpack.c.l.b16 %v713
        %v2005 = vunpack.c.h.b16 %v713
        %v2006 = vunpack.c.l.b16 %v714
        %v2007 = vunpack.c.h.b16 %v714
        %v2008 = vunpack.c.l.b16 %v715
        %v2009 = vunpack.c.h.b16 %v715
        %v2010 = vunpack.c.l.b16 %v716
        %v2011 = vunpack.c.h.b16 %v716
        %v2012 = vunpack.c.l.b16 %v717
        %v2013 = vunpack.c.h.b16 %v717
        %v2014 = vunpack.c.l.b16 %v718
        %v2015 = vunpack.c.h.b16 %v718
        %v2016 = vunpack.c.l.b16 %v719
        %v2017 = vunpack.c.h.b16 %v719
        %v2018 = vunpack.c.l.b16 %v720
        %v2019 = vunpack.c.h.b16 %v720
        %v2020 = vunpack.c.l.b16 %v721
        %v2021 = vunpack.c.h.b16 %v721
        %v2022 = vunpack.c.l.b16 %v722
        %v2023 = vunpack.c.h.b16 %v722
        %v2024 = vunpack.c.l.b16 %v723
        %v2025 = vunpack.c.h.b16 %v723
        %v2026 = vunpack.c.l.b16 %v724
        %v2027 = vunpack.c.h.b16 %v724
        %v2028 = vunpack.c.l.b16 %v725
        %v2029 = vunpack.c.h.b16 %v725
        %v2030 = vunpack.c.l.b16 %v726
        %v2031 = vunpack.c.h.b16 %v726
        %v2032 = vunpack.c.l.b16 %v727
        %v2033 = vunpack.c.h.b16 %v727
        %v2034 = vunpack.c.l.b16 %v728
        %v2035 = vunpack.c.h.b16 %v728
        %v2036 = vunpack.c.l.b16 %v729
        %v2037 = vunpack.c.h.b16 %v729
        %v2038 = vunpack.c.l.b16 %v730
        %v2039 = vunpack.c.h.b16 %v730
        %v2040 = vunpack.c.l.b16 %v731
        %v2041 = vunpack.c.h.b16 %v731
        %v2042 = vunpack.c.l.b16 %v732
        %v2043 = vunpack.c.h.b16 %v732
        %v2044 = vunpack.c.l.b16 %v733
        %v2045 = vunpack.c.h.b16 %v733
        %v2046 = vunpack.c.l.b16 %v734
        %v2047 = vunpack.c.h.b16 %v734
        %v2048 = vunpack.c.l.b16 %v735
        %v2049 = vunpack.c.h.b16 %v735
        %v2050 = vunpack.c.l.b16 %v736
        %v2051 = vunpack.c.h.b16 %v736
        %v2052 = vunpack.c.l.b16 %v737
        %v2053 = vunpack.c.h.b16 %v737
        %v2054 = vunpack.c.l.b16 %v738
        %v2055 = vunpack.c.h.b16 %v738
        %v2056 = vunpack.c.l.b16 %v739
        %v2057 = vunpack.c.h.b16 %v739
        %v2058 = vunpack.c.l.b16 %v740
        %v2059 = vunpack.c.h.b16 %v740
        %v2060 = vunpack.c.l.b16 %v741
        %v2061 = vunpack.c.h.b16 %v741
        %v2062 = vunpack.c.l.b16 %v742
        %v2063 = vunpack.c.h.b16 %v742
        %v2064 = vunpack.c.l.b16 %v743
        %v2065 = vunpack.c.h.b16 %v743
        %v2066 = vunpack.c.l.b16 %v744
        %v2067 = vunpack.c.h.b16 %v744
        %v2068 = vunpack.c.l.b16 %v745
        %v2069 = vunpack.c.h.b16 %v745
        %v2070 = vunpack.c.l.b16 %v746
        %v2071 = vunpack.c.h.b16 %v746
        %v2072 = vunpack.c.l.b16 %v747
        %v2073 = vunpack.c.h.b16 %v747
        %v2074 = vunpack.c.l.b16 %v748
        %v2075 = vunpack.c.h.b16 %v748
        %v2076 = vunpack.c.l.b16 %v749
        %v2077 = vunpack.c.h.b16 %v749
        %v2078 = vunpack.c.l.b16 %v750
        %v2079 = vunpack.c.h.b16 %v750
        %v2080 = vunpack.c.l.b16 %v751
        %v2081 = vunpack.c.h.b16 %v751
        %v2082 = vunpack.c.l.b16 %v752
        %v2083 = vunpack.c.h.b16 %v752
        %v2084 = vunpack.c.l.b16 %v753
        %v2085 = vunpack.c.h.b16 %v753
        %v2086 = vunpack.c.l.b16 %v754
        %v2087 = vunpack.c.h.b16 %v754
        %v2088 = vunpack.c.l.b16 %v755
        %v2089 = vunpack.c.h.b16 %v755
        %v2090 = vunpack.c.l.b16 %v756
        %v2091 = vunpack.c.h.b16 %v756
        %v2092 = vunpack.c.l.b16 %v757
        %v2093 = vunpack.c.h.b16 %v757
        %v2094 = vunpack.c.l.b16 %v758
        %v2095 = vunpack.c.h.b16 %v758
        %v2096 = vunpack.c.l.b16 %v759
        %v2097 = vunpack.c.h.b16 %v759
        %v2098 = vunpack.c.l.b16 %v760
        %v2099 = vunpack.c.h.b16 %v760
        %v2100 = vunpack.c.l.b16 %v761
        %v2101 = vunpack.c.h.b16 %v761
        %v2102 = vunpack.c.l.b16 %v762
        %v2103 = vunpack.c.h.b16 %v762
        %v2104 = vunpack.c.l.b16 %v763
        %v2105 = vunpack.c.h.b16 %v763
        %v2106 = vunpack.c.l.b16 %v764
        %v2107 = vunpack.c.h.b16 %v764
        %v2108 = vunpack.c.l.b16 %v765
        %v2109 = vunpack.c.h.b16 %v765
        %v2110 = vunpack.c.l.b16 %v766
        %v2111 = vunpack.c.h.b16 %v766
        %v2112 = vunpack.c.l.b16 %v767
        %v2113 = vunpack.c.h.b16 %v767
        %v2114 = vunpack.c.l.b16 %v768
        %v2115 = vunpack.c.h.b16 %v768
        %v2116 = vunpack.c.l.b16 %v769
        %v2117 = vunpack.c.h.b16 %v769
        %v2118 = vunpack.c.l.b16 %v770
        %v2119 = vunpack.c.h.b16 %v770
        %v2120 = vunpack.c.l.b16 %v771
        %v2121 = vunpack.c.h.b16 %v771
        %v2122 = vunpack.c.l.b16 %v772
        %v2123 = vunpack.c.h.b16 %v772
        %v2124 = vunpack.c.l.b16 %v773
        %v2125 = vunpack.c.h.b16 %v773
        %v2126 = vunpack.c.l.b16 %v774
        %v2127 = vunpack.c.h.b16 %v774
        %v2128 = vunpack.c.l.b16 %v775
        %v2129 = vunpack.c.h.b16 %v775
        %v2130 = vunpack.c.l.b16 %v776
        %v2131 = vunpack.c.h.b16 %v776
        %v2132 = vunpack.c.l.b16 %v777
        %v2133 = vunpack.c.h.b16 %v777
        %v2134 = vunpack.c.l.b16 %v778
        %v2135 = vunpack.c.h.b16 %v778
        %v2136 = vunpack.c.l.b16 %v779
        %v2137 = vunpack.c.h.b16 %v779
        %v2138 = vunpack.c.l.b16 %v780
        %v2139 = vunpack.c.h.b16 %v780
        %v2140 = vunpack.c.l.b16 %v781
        %v2141 = vunpack.c.h.b16 %v781
        %v2142 = vunpack.c.l.b16 %v782
        %v2143 = vunpack.c.h.b16 %v782
        %v2144 = vunpack.c.l.b16 %v783
        %v2145 = vunpack.c.h.b16 %v783
        %v2146 = vunpack.c.l.b16 %v784
        %v2147 = vunpack.c.h.b16 %v784
        %v2148 = vunpack.c.l.b16 %v785
        %v2149 = vunpack.c.h.b16 %v785
        %v2150 = vunpack.c.l.b16 %v786
        %v2151 = vunpack.c.h.b16 %v786
        %v2152 = vunpack.c.l.b16 %v787
        %v2153 = vunpack.c.h.b16 %v787
        %v2154 = vunpack.c.l.b16 %v788
        %v2155 = vunpack.c.h.b16 %v788
        %v2156 = vunpack.c.l.b16 %v789
        %v2157 = vunpack.c.h.b16 %v789
        %v2158 = vunpack.c.l.b16 %v790
        %v2159 = vunpack.c.h.b16 %v790
        %v2160 = vunpack.c.l.b16 %v791
        %v2161 = vunpack.c.h.b16 %v791
        %v2162 = vunpack.c.l.b16 %v792
        %v2163 = vunpack.c.h.b16 %v792
        %v2164 = vunpack.c.l.b16 %v793
        %v2165 = vunpack.c.h.b16 %v793
        %v2166 = vunpack.c.l.b16 %v794
        %v2167 = vunpack.c.h.b16 %v794
        %v2168 = vunpack.c.l.b16 %v795
        %v2169 = vunpack.c.h.b16 %v795
        %v2170 = vunpack.c.l.b16 %v796
        %v2171 = vunpack.c.h.b16 %v796
        %v2172 = vunpack.c.l.b16 %v797
        %v2173 = vunpack.c.h.b16 %v797
        %v2174 = vunpack.c.l.b16 %v798
        %v2175 = vunpack.c.h.b16 %v798
        %v2176 = vunpack.c.l.b16 %v799
        %v2177 = vunpack.c.h.b16 %v799
        %v2178 = vunpack.c.l.b16 %v800
        %v2179 = vunpack.c.h.b16 %v800
        %v2180 = vunpack.c.l.b16 %v801
        %v2181 = vunpack.c.h.b16 %v801
        %v2182 = vunpack.c.l.b16 %v802
        %v2183 = vunpack.c.h.b16 %v802
        %v2184 = vunpack.c.l.b16 %v803
        %v2185 = vunpack.c.h.b16 %v803
        %v2186 = vunpack.c.l.b16 %v804
        %v2187 = vunpack.c.h.b16 %v804
        %v2188 = vunpack.c.l.b16 %v805
        %v2189 = vunpack.c.h.b16 %v805
        %v2190 = vunpack.c.l.b16 %v806
        %v2191 = vunpack.c.h.b16 %v806
        %v2192 = vunpack.c.l.b16 %v807
        %v2193 = vunpack.c.h.b16 %v807
        %v2194 = vunpack.c.l.b16 %v808
        %v2195 = vunpack.c.h.b16 %v808
        %v2196 = vunpack.c.l.b16 %v809
        %v2197 = vunpack.c.h.b16 %v809
        %v2198 = vunpack.c.l.b16 %v810
        %v2199 = vunpack.c.h.b16 %v810
        %v2200 = vunpack.c.l.b16 %v811
        %v2201 = vunpack.c.h.b16 %v811
        %v2202 = vunpack.c.l.b16 %v812
        %v2203 = vunpack.c.h.b16 %v812
        %v2204 = vunpack.c.l.b16 %v813
        %v2205 = vunpack.c.h.b16 %v813
        %v2206 = vunpack.c.l.b16 %v814
        %v2207 = vunpack.c.h.b16 %v814
        %v2208 = vunpack.c.l.b16 %v815
        %v2209 = vunpack.c.h.b16 %v815
        %v2210 = vunpack.c.l.b16 %v816
        %v2211 = vunpack.c.h.b16 %v816
        %v2212 = vunpack.c.l.b16 %v817
        %v2213 = vunpack.c.h.b16 %v817
        %v2214 = vunpack.c.l.b16 %v818
        %v2215 = vunpack.c.h.b16 %v818
        %v2216 = vunpack.c.l.b16 %v819
        %v2217 = vunpack.c.h.b16 %v819
        %v2218 = vunpack.c.l.b16 %v820
        %v2219 = vunpack.c.h.b16 %v820
        %v2220 = vunpack.c.l.b16 %v821
        %v2221 = vunpack.c.h.b16 %v821
        %v2222 = vunpack.c.l.b16 %v822
        %v2223 = vunpack.c.h.b16 %v822
        %v2224 = vunpack.c.l.b16 %v823
        %v2225 = vunpack.c.h.b16 %v823
        %v2226 = vunpack.c.l.b16 %v824
        %v2227 = vunpack.c.h.b16 %v824
        %v2228 = vunpack.c.l.b16 %v825
        %v2229 = vunpack.c.h.b16 %v825
        %v2230 = vunpack.c.l.b16 %v826
        %v2231 = vunpack.c.h.b16 %v826
        %v2232 = vunpack.c.l.b16 %v827
        %v2233 = vunpack.c.h.b16 %v827
        %v2234 = vunpack.c.l.b16 %v828
        %v2235 = vunpack.c.h.b16 %v828
        %v2236 = vunpack.c.l.b16 %v829
        %v2237 = vunpack.c.h.b16 %v829
        %v2238 = vunpack.c.l.b16 %v830
        %v2239 = vunpack.c.h.b16 %v830
        %v2240 = vunpack.c.l.b16 %v831
        %v2241 = vunpack.c.h.b16 %v831
        %v2242 = vunpack.c.l.b16 %v832
        %v2243 = vunpack.c.h.b16 %v832
        %v2244 = vunpack.c.l.b16 %v833
        %v2245 = vunpack.c.h.b16 %v833
        %v2246 = vunpack.c.l.b16 %v834
        %v2247 = vunpack.c.h.b16 %v834
        %v2248 = vunpack.c.l.b16 %v835
        %v2249 = vunpack.c.h.b16 %v835
        %v2250 = vunpack.c.l.b16 %v836
        %v2251 = vunpack.c.h.b16 %v836
        %v2252 = vunpack.c.l.b16 %v837
        %v2253 = vunpack.c.h.b16 %v837
        %v2254 = vunpack.c.l.b16 %v838
        %v2255 = vunpack.c.h.b16 %v838
        %v2256 = vunpack.c.l.b16 %v839
        %v2257 = vunpack.c.h.b16 %v839
        %v2258 = vunpack.c.l.b16 %v840
        %v2259 = vunpack.c.h.b16 %v840
        %v2260 = vunpack.c.l.b16 %v841
        %v2261 = vunpack.c.h.b16 %v841
        %v2262 = vunpack.c.l.b16 %v842
        %v2263 = vunpack.c.h.b16 %v842
        %v2264 = vunpack.c.l.b16 %v843
        %v2265 = vunpack.c.h.b16 %v843
        %v2266 = vunpack.c.l.b16 %v844
        %v2267 = vunpack.c.h.b16 %v844
        %v2268 = vunpack.c.l.b16 %v845
        %v2269 = vunpack.c.h.b16 %v845
        %v2270 = vunpack.c.l.b16 %v846
        %v2271 = vunpack.c.h.b16 %v846
        %v2272 = vunpack.c.l.b16 %v847
        %v2273 = vunpack.c.h.b16 %v847
        %v2274 = vunpack.c.l.b16 %v848
        %v2275 = vunpack.c.h.b16 %v848
        %v2276 = vunpack.c.l.b16 %v849
        %v2277 = vunpack.c.h.b16 %v849
        %v2278 = vunpack.c.l.b16 %v850
        %v2279 = vunpack.c.h.b16 %v850
        %v2280 = vunpack.c.l.b16 %v851
        %v2281 = vunpack.c.h.b16 %v851
        %v2282 = vunpack.c.l.b16 %v852
        %v2283 = vunpack.c.h.b16 %v852
        %v2284 = vunpack.c.l.b16 %v853
        %v2285 = vunpack.c.h.b16 %v853
        %v2286 = vunpack.c.l.b16 %v854
        %v2287 = vunpack.c.h.b16 %v854
        %v2288 = vunpack.c.l.b16 %v855
        %v2289 = vunpack.c.h.b16 %v855
        %v2290 = vunpack.c.l.b16 %v856
        %v2291 = vunpack.c.h.b16 %v856
        %v2292 = vunpack.c.l.b16 %v857
        %v2293 = vunpack.c.h.b16 %v857
        %v2294 = vunpack.c.l.b16 %v858
        %v2295 = vunpack.c.h.b16 %v858
        %v2296 = vunpack.c.l.b16 %v859
        %v2297 = vunpack.c.h.b16 %v859
        %v2298 = vunpack.c.l.b16 %v860
        %v2299 = vunpack.c.h.b16 %v860
        %v2300 = vunpack.c.l.b16 %v861
        %v2301 = vunpack.c.h.b16 %v861
        %v2302 = vunpack.c.l.b16 %v862
        %v2303 = vunpack.c.h.b16 %v862
        %v2304 = vunpack.c.l.b16 %v863
        %v2305 = vunpack.c.h.b16 %v863
        %v2306 = vunpack.c.l.b16 %v864
        %v2307 = vunpack.c.h.b16 %v864
        %v2308 = vunpack.c.l.b16 %v865
        %v2309 = vunpack.c.h.b16 %v865
        %v2310 = vunpack.c.l.b16 %v866
        %v2311 = vunpack.c.h.b16 %v866
        %v2312 = vunpack.c.l.b16 %v867
        %v2313 = vunpack.c.h.b16 %v867
        %v2314 = vunpack.c.l.b16 %v868
        %v2315 = vunpack.c.h.b16 %v868
        %v2316 = vunpack.c.l.b16 %v869
        %v2317 = vunpack.c.h.b16 %v869
        %v2318 = vunpack.c.l.b16 %v870
        %v2319 = vunpack.c.h.b16 %v870
        %v2320 = vunpack.c.l.b16 %v871
        %v2321 = vunpack.c.h.b16 %v871
        %v2322 = vunpack.c.l.b16 %v872
        %v2323 = vunpack.c.h.b16 %v872
        %v2324 = vunpack.c.l.b16 %v873
        %v2325 = vunpack.c.h.b16 %v873
        %v2326 = vunpack.c.l.b16 %v874
        %v2327 = vunpack.c.h.b16 %v874
        %v2328 = vunpack.c.l.b16 %v875
        %v2329 = vunpack.c.h.b16 %v875
        %v2330 = vunpack.c.l.b16 %v876
        %v2331 = vunpack.c.h.b16 %v876
        %v2332 = vunpack.c.l.b16 %v877
        %v2333 = vunpack.c.h.b16 %v877
        %v2334 = vunpack.c.l.b16 %v878
        %v2335 = vunpack.c.h.b16 %v878
        %v2336 = vunpack.c.l.b16 %v879
        %v2337 = vunpack.c.h.b16 %v879
        %v2338 = vunpack.c.l.b16 %v880
        %v2339 = vunpack.c.h.b16 %v880
        %v2340 = vunpack.c.l.b16 %v881
        %v2341 = vunpack.c.h.b16 %v881
        %v2342 = vunpack.c.l.b16 %v882
        %v2343 = vunpack.c.h.b16 %v882
        %v2344 = vunpack.c.l.b16 %v883
        %v2345 = vunpack.c.h.b16 %v883
        %v2346 = vunpack.c.l.b16 %v884
        %v2347 = vunpack.c.h.b16 %v884
        %v2348 = vunpack.c.l.b16 %v885
        %v2349 = vunpack.c.h.b16 %v885
        %v2350 = vunpack.c.l.b16 %v886
        %v2351 = vunpack.c.h.b16 %v886
        %v2352 = vunpack.c.l.b16 %v887
        %v2353 = vunpack.c.h.b16 %v887
        %v2354 = vunpack.c.l.b16 %v888
        %v2355 = vunpack.c.h.b16 %v888
        %v2356 = vunpack.c.l.b16 %v889
        %v2357 = vunpack.c.h.b16 %v889
        %v2358 = vunpack.c.l.b16 %v890
        %v2359 = vunpack.c.h.b16 %v890
        %v2360 = vunpack.c.l.b16 %v891
        %v2361 = vunpack.c.h.b16 %v891
        %v2362 = vunpack.c.l.b16 %v892
        %v2363 = vunpack.c.h.b16 %v892
        %v2364 = vunpack.c.l.b16 %v893
        %v2365 = vunpack.c.h.b16 %v893
        %v2366 = vunpack.c.l.b16 %v894
        %v2367 = vunpack.c.h.b16 %v894
        %v2368 = vunpack.c.l.b16 %v895
        %v2369 = vunpack.c.h.b16 %v895
        %v2370 = vunpack.c.l.b16 %v896
        %v2371 = vunpack.c.h.b16 %v896
        %v2372 = vunpack.c.l.b16 %v897
        %v2373 = vunpack.c.h.b16 %v897
        %v2374 = vunpack.c.l.b16 %v898
        %v2375 = vunpack.c.h.b16 %v898
        %v2376 = vunpack.c.l.b16 %v899
        %v2377 = vunpack.c.h.b16 %v899
        %v2378 = vunpack.c.l.b16 %v900
        %v2379 = vunpack.c.h.b16 %v900
        %v2380 = vunpack.c.l.b16 %v901
        %v2381 = vunpack.c.h.b16 %v901
        %v2382 = vunpack.c.l.b16 %v902
        %v2383 = vunpack.c.h.b16 %v902
        %v2384 = vunpack.c.l.b16 %v903
        %v2385 = vunpack.c.h.b16 %v903
        %v2386 = vunpack.c.l.b16 %v904
        %v2387 = vunpack.c.h.b16 %v904
        %v2388 = vunpack.c.l.b16 %v905
        %v2389 = vunpack.c.h.b16 %v905
        %v2390 = vunpack.c.l.b16 %v906
        %v2391 = vunpack.c.h.b16 %v906
        %v2392 = vunpack.c.l.b16 %v907
        %v2393 = vunpack.c.h.b16 %v907
        %v2394 = vunpack.c.l.b16 %v908
        %v2395 = vunpack.c.h.b16 %v908
        %v2396 = vunpack.c.l.b16 %v909
        %v2397 = vunpack.c.h.b16 %v909
        %v2398 = vunpack.c.l.b16 %v910
        %v2399 = vunpack.c.h.b16 %v910
        %v2400 = vunpack.c.l.b16 %v911
        %v2401 = vunpack.c.h.b16 %v911
        %v2402 = vunpack.c.l.b16 %v912
        %v2403 = vunpack.c.h.b16 %v912
        %v2404 = vunpack.c.l.b16 %v913
        %v2405 = vunpack.c.h.b16 %v913
        %v2406 = vunpack.c.l.b16 %v914
        %v2407 = vunpack.c.h.b16 %v914
        %v2408 = vunpack.c.l.b16 %v915
        %v2409 = vunpack.c.h.b16 %v915
        %v2410 = vunpack.c.l.b16 %v916
        %v2411 = vunpack.c.h.b16 %v916
        %v2412 = vunpack.c.l.b16 %v917
        %v2413 = vunpack.c.h.b16 %v917
        %v2414 = vunpack.c.l.b16 %v918
        %v2415 = vunpack.c.h.b16 %v918
        %v2416 = vunpack.c.l.b16 %v919
        %v2417 = vunpack.c.h.b16 %v919
        %v2418 = vunpack.c.l.b16 %v920
        %v2419 = vunpack.c.h.b16 %v920
        %v2420 = vunpack.c.l.b16 %v921
        %v2421 = vunpack.c.h.b16 %v921
        %v2422 = vunpack.c.l.b16 %v922
        %v2423 = vunpack.c.h.b16 %v922
        %v2424 = vunpack.c.l.b16 %v923
        %v2425 = vunpack.c.h.b16 %v923
        %v2426 = vunpack.c.l.b16 %v924
        %v2427 = vunpack.c.h.b16 %v924
        %v2428 = vunpack.c.l.b16 %v925
        %v2429 = vunpack.c.h.b16 %v925
        %v2430 = vunpack.c.l.b16 %v926
        %v2431 = vunpack.c.h.b16 %v926
        %v2432 = vunpack.c.l.b16 %v927
        %v2433 = vunpack.c.h.b16 %v927
        %v2434 = vunpack.c.l.b16 %v928
        %v2435 = vunpack.c.h.b16 %v928
        %v2436 = vunpack.c.l.b16 %v929
        %v2437 = vunpack.c.h.b16 %v929
        %v2438 = vunpack.c.l.b16 %v930
        %v2439 = vunpack.c.h.b16 %v930
        %v2440 = vunpack.c.l.b16 %v931
        %v2441 = vunpack.c.h.b16 %v931
        %v2442 = vunpack.c.l.b16 %v932
        %v2443 = vunpack.c.h.b16 %v932
        %v2444 = vunpack.c.l.b16 %v933
        %v2445 = vunpack.c.h.b16 %v933
        %v2446 = vunpack.c.l.b16 %v934
        %v2447 = vunpack.c.h.b16 %v934
        %v2448 = vunpack.c.l.b16 %v935
        %v2449 = vunpack.c.h.b16 %v935
        %v2450 = vunpack.c.l.b16 %v936
        %v2451 = vunpack.c.h.b16 %v936
        %v2452 = vunpack.c.l.b16 %v937
        %v2453 = vunpack.c.h.b16 %v937
        %v2454 = vunpack.c.l.b16 %v938
        %v2455 = vunpack.c.h.b16 %v938
        %v2456 = vunpack.c.l.b16 %v939
        %v2457 = vunpack.c.h.b16 %v939
        %v2458 = vunpack.c.l.b16 %v940
        %v2459 = vunpack.c.h.b16 %v940
        %v2460 = vunpack.c.l.b16 %v941
        %v2461 = vunpack.c.h.b16 %v941
        %v2462 = vunpack.c.l.b16 %v942
        %v2463 = vunpack.c.h.b16 %v942
        %v2464 = vunpack.c.l.b16 %v943
        %v2465 = vunpack.c.h.b16 %v943
        %v2466 = vunpack.c.l.b16 %v944
        %v2467 = vunpack.c.h.b16 %v944
        %v2468 = vunpack.c.l.b16 %v945
        %v2469 = vunpack.c.h.b16 %v945
        %v2470 = vunpack.c.l.b16 %v946
        %v2471 = vunpack.c.h.b16 %v946
        %v2472 = vunpack.c.l.b16 %v947
        %v2473 = vunpack.c.h.b16 %v947
        %v2474 = vunpack.c.l.b16 %v948
        %v2475 = vunpack.c.h.b16 %v948
        %v2476 = vunpack.c.l.b16 %v949
        %v2477 = vunpack.c.h.b16 %v949
        %v2478 = vunpack.c.l.b16 %v950
        %v2479 = vunpack.c.h.b16 %v950
        %v2480 = vunpack.c.l.b16 %v951
        %v2481 = vunpack.c.h.b16 %v951
        %v2482 = vunpack.c.l.b16 %v952
        %v2483 = vunpack.c.h.b16 %v952
        %v2484 = vunpack.c.l.b16 %v953
        %v2485 = vunpack.c.h.b16 %v953
        %v2486 = vunpack.c.l.b16 %v954
        %v2487 = vunpack.c.h.b16 %v954
        %v2488 = vunpack.c.l.b16 %v955
        %v2489 = vunpack.c.h.b16 %v955
        %v2490 = vunpack.c.l.b16 %v956
        %v2491 = vunpack.c.h.b16 %v956
        %v2492 = vunpack.c.l.b16 %v957
        %v2493 = vunpack.c.h.b16 %v957
        %v2494 = vunpack.c.l.b16 %v958
        %v2495 = vunpack.c.h.b16 %v958
        %v2496 = vunpack.c.l.b16 %v959
        %v2497 = vunpack.c.h.b16 %v959
        %v2498 = vunpack.c.l.b16 %v960
        %v2499 = vunpack.c.h.b16 %v960
        %v2500 = vunpack.c.l.b16 %v961
        %v2501 = vunpack.c.h.b16 %v961
        %v2502 = vunpack.c.l.b16 %v962
        %v2503 = vunpack.c.h.b16 %v962
        %v2504 = vunpack.c.l.b16 %v963
        %v2505 = vunpack.c.h.b16 %v963
        %v2506 = vunpack.c.l.b16 %v964
        %v2507 = vunpack.c.h.b16 %v964
        %v2508 = vunpack.c.l.b16 %v965
        %v2509 = vunpack.c.h.b16 %v965
        %v2510 = vunpack.c.l.b16 %v966
        %v2511 = vunpack.c.h.b16 %v966
        %v2512 = vunpack.c.l.b16 %v967
        %v2513 = vunpack.c.h.b16 %v967
        %v2514 = vunpack.c.l.b16 %v968
        %v2515 = vunpack.c.h.b16 %v968
        %v2516 = vunpack.c.l.b16 %v969
        %v2517 = vunpack.c.h.b16 %v969
        %v2518 = vunpack.c.l.b16 %v970
        %v2519 = vunpack.c.h.b16 %v970
        %v2520 = vunpack.c.l.b16 %v971
        %v2521 = vunpack.c.h.b16 %v971
        %v2522 = vunpack.c.l.b16 %v972
        %v2523 = vunpack.c.h.b16 %v972
        %v2524 = vunpack.c.l.b16 %v973
        %v2525 = vunpack.c.h.b16 %v973
        %v2526 = vunpack.c.l.b16 %v974
        %v2527 = vunpack.c.h.b16 %v974
        %v2528 = vunpack.c.l.b16 %v975
        %v2529 = vunpack.c.h.b16 %v975
        %v2530 = vunpack.c.l.b16 %v976
        %v2531 = vunpack.c.h.b16 %v976
        %v2532 = vunpack.c.l.b16 %v977
        %v2533 = vunpack.c.h.b16 %v977
        %v2534 = vunpack.c.l.b16 %v978
        %v2535 = vunpack.c.h.b16 %v978
        %v2536 = vunpack.c.l.b16 %v979
        %v2537 = vunpack.c.h.b16 %v979
        %v2538 = vpack.c.b16 %v1518, %v1514
        %v2539 = vpack.c.b16 %v1519, %v1515
        %v2540 = vpack.c.b16 %v1520, %v1516
        %v2541 = vpack.c.b16 %v1521, %v1517
        %v2542 = vpack.c.b16 %v1526, %v1522
        %v2543 = vpack.c.b16 %v1527, %v1523
        %v2544 = vpack.c.b16 %v1528, %v1524
        %v2545 = vpack.c.b16 %v1529, %v1525
        %v2546 = vpack.c.b16 %v1534, %v1530
        %v2547 = vpack.c.b16 %v1535, %v1531
        %v2548 = vpack.c.b16 %v1536, %v1532
        %v2549 = vpack.c.b16 %v1537, %v1533
        %v2550 = vpack.c.b16 %v1542, %v1538
        %v2551 = vpack.c.b16 %v1543, %v1539
        %v2552 = vpack.c.b16 %v1544, %v1540
        %v2553 = vpack.c.b16 %v1545, %v1541
        %v2554 = vpack.c.b16 %v1550, %v1546
        %v2555 = vpack.c.b16 %v1551, %v1547
        %v2556 = vpack.c.b16 %v1552, %v1548
        %v2557 = vpack.c.b16 %v1553, %v1549
        %v2558 = vpack.c.b16 %v1558, %v1554
        %v2559 = vpack.c.b16 %v1559, %v1555
        %v2560 = vpack.c.b16 %v1560, %v1556
        %v2561 = vpack.c.b16 %v1561, %v1557
        %v2562 = vpack.c.b16 %v1566, %v1562
        %v2563 = vpack.c.b16 %v1567, %v1563
        %v2564 = vpack.c.b16 %v1568, %v1564
        %v2565 = vpack.c.b16 %v1569, %v1565
        %v2566 = vpack.c.b16 %v1574, %v1570
        %v2567 = vpack.c.b16 %v1575, %v1571
        %v2568 = vpack.c.b16 %v1576, %v1572
        %v2569 = vpack.c.b16 %v1577, %v1573
        %v2570 = vpack.c.b16 %v1582, %v1578
        %v2571 = vpack.c.b16 %v1583, %v1579
        %v2572 = vpack.c.b16 %v1584, %v1580
        %v2573 = vpack.c.b16 %v1585, %v1581
        %v2574 = vpack.c.b16 %v1590, %v1586
        %v2575 = vpack.c.b16 %v1591, %v1587
        %v2576 = vpack.c.b16 %v1592, %v1588
        %v2577 = vpack.c.b16 %v1593, %v1589
        %v2578 = vpack.c.b16 %v1598, %v1594
        %v2579 = vpack.c.b16 %v1599, %v1595
        %v2580 = vpack.c.b16 %v1600, %v1596
        %v2581 = vpack.c.b16 %v1601, %v1597
        %v2582 = vpack.c.b16 %v1606, %v1602
        %v2583 = vpack.c.b16 %v1607, %v1603
        %v2584 = vpack.c.b16 %v1608, %v1604
        %v2585 = vpack.c.b16 %v1609, %v1605
        %v2586 = vpack.c.b16 %v1614, %v1610
        %v2587 = vpack.c.b16 %v1615, %v1611
        %v2588 = vpack.c.b16 %v1616, %v1612
        %v2589 = vpack.c.b16 %v1617, %v1613
        %v2590 = vpack.c.b16 %v1622, %v1618
        %v2591 = vpack.c.b16 %v1623, %v1619
        %v2592 = vpack.c.b16 %v1624, %v1620
        %v2593 = vpack.c.b16 %v1625, %v1621
        %v2594 = vpack.c.b16 %v1630, %v1626
        %v2595 = vpack.c.b16 %v1631, %v1627
        %v2596 = vpack.c.b16 %v1632, %v1628
        %v2597 = vpack.c.b16 %v1633, %v1629
        %v2598 = vpack.c.b16 %v1638, %v1634
        %v2599 = vpack.c.b16 %v1639, %v1635
        %v2600 = vpack.c.b16 %v1640, %v1636
        %v2601 = vpack.c.b16 %v1641, %v1637
        %v2602 = vpack.c.b16 %v1646, %v1642
        %v2603 = vpack.c.b16 %v1647, %v1643
        %v2604 = vpack.c.b16 %v1648, %v1644
        %v2605 = vpack.c.b16 %v1649, %v1645
        %v2606 = vpack.c.b16 %v1654, %v1650
        %v2607 = vpack.c.b16 %v1655, %v1651
        %v2608 = vpack.c.b16 %v1656, %v1652
        %v2609 = vpack.c.b16 %v1657, %v1653
        %v2610 = vpack.c.b16 %v1662, %v1658
        %v2611 = vpack.c.b16 %v1663, %v1659
        %v2612 = vpack.c.b16 %v1664, %v1660
        %v2613 = vpack.c.b16 %v1665, %v1661
        %v2614 = vpack.c.b16 %v1670, %v1666
        %v2615 = vpack.c.b16 %v1671, %v1667
        %v2616 = vpack.c.b16 %v1672, %v1668
        %v2617 = vpack.c.b16 %v1673, %v1669
        %v2618 = vpack.c.b16 %v1678, %v1674
        %v2619 = vpack.c.b16 %v1679, %v1675
        %v2620 = vpack.c.b16 %v1680, %v1676
        %v2621 = vpack.c.b16 %v1681, %v1677
        %v2622 = vpack.c.b16 %v1686, %v1682
        %v2623 = vpack.c.b16 %v1687, %v1683
        %v2624 = vpack.c.b16 %v1688, %v1684
        %v2625 = vpack.c.b16 %v1689, %v1685
        %v2626 = vpack.c.b16 %v1694, %v1690
        %v2627 = vpack.c.b16 %v1695, %v1691
        %v2628 = vpack.c.b16 %v1696, %v1692
        %v2629 = vpack.c.b16 %v1697, %v1693
        %v2630 = vpack.c.b16 %v1702, %v1698
        %v2631 = vpack.c.b16 %v1703, %v1699
        %v2632 = vpack.c.b16 %v1704, %v1700
        %v2633 = vpack.c.b16 %v1705, %v1701
        %v2634 = vpack.c.b16 %v1710, %v1706
        %v2635 = vpack.c.b16 %v1711, %v1707
        %v2636 = vpack.c.b16 %v1712, %v1708
        %v2637 = vpack.c.b16 %v1713, %v1709
        %v2638 = vpack.c.b16 %v1718, %v1714
        %v2639 = vpack.c.b16 %v1719, %v1715
        %v2640 = vpack.c.b16 %v1720, %v1716
        %v2641 = vpack.c.b16 %v1721, %v1717
        %v2642 = vpack.c.b16 %v1726, %v1722
        %v2643 = vpack.c.b16 %v1727, %v1723
        %v2644 = vpack.c.b16 %v1728, %v1724
        %v2645 = vpack.c.b16 %v1729, %v1725
        %v2646 = vpack.c.b16 %v1734, %v1730
        %v2647 = vpack.c.b16 %v1735, %v1731
        %v2648 = vpack.c.b16 %v1736, %v1732
        %v2649 = vpack.c.b16 %v1737, %v1733
        %v2650 = vpack.c.b16 %v1742, %v1738
        %v2651 = vpack.c.b16 %v1743, %v1739
        %v2652 = vpack.c.b16 %v1744, %v1740
        %v2653 = vpack.c.b16 %v1745, %v1741
        %v2654 = vpack.c.b16 %v1750, %v1746
        %v2655 = vpack.c.b16 %v1751, %v1747
        %v2656 = vpack.c.b16 %v1752, %v1748
        %v2657 = vpack.c.b16 %v1753, %v1749
        %v2658 = vpack.c.b16 %v1758, %v1754
        %v2659 = vpack.c.b16 %v1759, %v1755
        %v2660 = vpack.c.b16 %v1760, %v1756
        %v2661 = vpack.c.b16 %v1761, %v1757
        %v2662 = vpack.c.b16 %v1766, %v1762
        %v2663 = vpack.c.b16 %v1767, %v1763
        %v2664 = vpack.c.b16 %v1768, %v1764
        %v2665 = vpack.c.b16 %v1769, %v1765
        %v2666 = vpack.c.b16 %v1774, %v1770
        %v2667 = vpack.c.b16 %v1775, %v1771
        %v2668 = vpack.c.b16 %v1776, %v1772
        %v2669 = vpack.c.b16 %v1777, %v1773
        %v2670 = vpack.c.b16 %v1782, %v1778
        %v2671 = vpack.c.b16 %v1783, %v1779
        %v2672 = vpack.c.b16 %v1784, %v1780
        %v2673 = vpack.c.b16 %v1785, %v1781
        %v2674 = vpack.c.b16 %v1790, %v1786
        %v2675 = vpack.c.b16 %v1791, %v1787
        %v2676 = vpack.c.b16 %v1792, %v1788
        %v2677 = vpack.c.b16 %v1793, %v1789
        %v2678 = vpack.c.b16 %v1798, %v1794
        %v2679 = vpack.c.b16 %v1799, %v1795
        %v2680 = vpack.c.b16 %v1800, %v1796
        %v2681 = vpack.c.b16 %v1801, %v1797
        %v2682 = vpack.c.b16 %v1806, %v1802
        %v2683 = vpack.c.b16 %v1807, %v1803
        %v2684 = vpack.c.b16 %v1808, %v1804
        %v2685 = vpack.c.b16 %v1809, %v1805
        %v2686 = vpack.c.b16 %v1814, %v1810
        %v2687 = vpack.c.b16 %v1815, %v1811
        %v2688 = vpack.c.b16 %v1816, %v1812
        %v2689 = vpack.c.b16 %v1817, %v1813
        %v2690 = vpack.c.b16 %v1822, %v1818
        %v2691 = vpack.c.b16 %v1823, %v1819
        %v2692 = vpack.c.b16 %v1824, %v1820
        %v2693 = vpack.c.b16 %v1825, %v1821
        %v2694 = vpack.c.b16 %v1830, %v1826
        %v2695 = vpack.c.b16 %v1831, %v1827
        %v2696 = vpack.c.b16 %v1832, %v1828
        %v2697 = vpack.c.b16 %v1833, %v1829
        %v2698 = vpack.c.b16 %v1838, %v1834
        %v2699 = vpack.c.b16 %v1839, %v1835
        %v2700 = vpack.c.b16 %v1840, %v1836
        %v2701 = vpack.c.b16 %v1841, %v1837
        %v2702 = vpack.c.b16 %v1846, %v1842
        %v2703 = vpack.c.b16 %v1847, %v1843
        %v2704 = vpack.c.b16 %v1848, %v1844
        %v2705 = vpack.c.b16 %v1849, %v1845
        %v2706 = vpack.c.b16 %v1854, %v1850
        %v2707 = vpack.c.b16 %v1855, %v1851
        %v2708 = vpack.c.b16 %v1856, %v1852
        %v2709 = vpack.c.b16 %v1857, %v1853
        %v2710 = vpack.c.b16 %v1862, %v1858
        %v2711 = vpack.c.b16 %v1863, %v1859
        %v2712 = vpack.c.b16 %v1864, %v1860
        %v2713 = vpack.c.b16 %v1865, %v1861
        %v2714 = vpack.c.b16 %v1870, %v1866
        %v2715 = vpack.c.b16 %v1871, %v1867
        %v2716 = vpack.c.b16 %v1872, %v1868
        %v2717 = vpack.c.b16 %v1873, %v1869
        %v2718 = vpack.c.b16 %v1878, %v1874
        %v2719 = vpack.c.b16 %v1879, %v1875
        %v2720 = vpack.c.b16 %v1880, %v1876
        %v2721 = vpack.c.b16 %v1881, %v1877
        %v2722 = vpack.c.b16 %v1886, %v1882
        %v2723 = vpack.c.b16 %v1887, %v1883
        %v2724 = vpack.c.b16 %v1888, %v1884
        %v2725 = vpack.c.b16 %v1889, %v1885
        %v2726 = vpack.c.b16 %v1894, %v1890
        %v2727 = vpack.c.b16 %v1895, %v1891
        %v2728 = vpack.c.b16 %v1896, %v1892
        %v2729 = vpack.c.b16 %v1897, %v1893
        %v2730 = vpack.c.b16 %v1902, %v1898
        %v2731 = vpack.c.b16 %v1903, %v1899
        %v2732 = vpack.c.b16 %v1904, %v1900
        %v2733 = vpack.c.b16 %v1905, %v1901
        %v2734 = vpack.c.b16 %v1910, %v1906
        %v2735 = vpack.c.b16 %v1911, %v1907
        %v2736 = vpack.c.b16 %v1912, %v1908
        %v2737 = vpack.c.b16 %v1913, %v1909
        %v2738 = vpack.c.b16 %v1918, %v1914
        %v2739 = vpack.c.b16 %v1919, %v1915
        %v2740 = vpack.c.b16 %v1920, %v1916
        %v2741 = vpack.c.b16 %v1921, %v1917
        %v2742 = vpack.c.b16 %v1926, %v1922
        %v2743 = vpack.c.b16 %v1927, %v1923
        %v2744 = vpack.c.b16 %v1928, %v1924
        %v2745 = vpack.c.b16 %v1929, %v1925
        %v2746 = vpack.c.b16 %v1934, %v1930
        %v2747 = vpack.c.b16 %v1935, %v1931
        %v2748 = vpack.c.b16 %v1936, %v1932
        %v2749 = vpack.c.b16 %v1937, %v1933
        %v2750 = vpack.c.b16 %v1942, %v1938
        %v2751 = vpack.c.b16 %v1943, %v1939
        %v2752 = vpack.c.b16 %v1944, %v1940
        %v2753 = vpack.c.b16 %v1945, %v1941
        %v2754 = vpack.c.b16 %v1950, %v1946
        %v2755 = vpack.c.b16 %v1951, %v1947
        %v2756 = vpack.c.b16 %v1952, %v1948
        %v2757 = vpack.c.b16 %v1953, %v1949
        %v2758 = vpack.c.b16 %v1958, %v1954
        %v2759 = vpack.c.b16 %v1959, %v1955
        %v2760 = vpack.c.b16 %v1960, %v1956
        %v2761 = vpack.c.b16 %v1961, %v1957
        %v2762 = vpack.c.b16 %v1966, %v1962
        %v2763 = vpack.c.b16 %v1967, %v1963
        %v2764 = vpack.c.b16 %v1968, %v1964
        %v2765 = vpack.c.b16 %v1969, %v1965
        %v2766 = vpack.c.b16 %v1974, %v1970
        %v2767 = vpack.c.b16 %v1975, %v1971
        %v2768 = vpack.c.b16 %v1976, %v1972
        %v2769 = vpack.c.b16 %v1977, %v1973
        %v2770 = vpack.c.b16 %v1982, %v1978
        %v2771 = vpack.c.b16 %v1983, %v1979
        %v2772 = vpack.c.b16 %v1984, %v1980
        %v2773 = vpack.c.b16 %v1985, %v1981
        %v2774 = vpack.c.b16 %v1990, %v1986
        %v2775 = vpack.c.b16 %v1991, %v1987
        %v2776 = vpack.c.b16 %v1992, %v1988
        %v2777 = vpack.c.b16 %v1993, %v1989
        %v2778 = vpack.c.b16 %v1998, %v1994
        %v2779 = vpack.c.b16 %v1999, %v1995
        %v2780 = vpack.c.b16 %v2000, %v1996
        %v2781 = vpack.c.b16 %v2001, %v1997
        %v2782 = vpack.c.b16 %v2006, %v2002
        %v2783 = vpack.c.b16 %v2007, %v2003
        %v2784 = vpack.c.b16 %v2008, %v2004
        %v2785 = vpack.c.b16 %v2009, %v2005
        %v2786 = vpack.c.b16 %v2014, %v2010
        %v2787 = vpack.c.b16 %v2015, %v2011
        %v2788 = vpack.c.b16 %v2016, %v2012
        %v2789 = vpack.c.b16 %v2017, %v2013
        %v2790 = vpack.c.b16 %v2022, %v2018
        %v2791 = vpack.c.b16 %v2023, %v2019
        %v2792 = vpack.c.b16 %v2024, %v2020
        %v2793 = vpack.c.b16 %v2025, %v2021
        %v2794 = vpack.c.b16 %v2030, %v2026
        %v2795 = vpack.c.b16 %v2031, %v2027
        %v2796 = vpack.c.b16 %v2032, %v2028
        %v2797 = vpack.c.b16 %v2033, %v2029
        %v2798 = vpack.c.b16 %v2038, %v2034
        %v2799 = vpack.c.b16 %v2039, %v2035
        %v2800 = vpack.c.b16 %v2040, %v2036
        %v2801 = vpack.c.b16 %v2041, %v2037
        %v2802 = vpack.c.b16 %v2046, %v2042
        %v2803 = vpack.c.b16 %v2047, %v2043
        %v2804 = vpack.c.b16 %v2048, %v2044
        %v2805 = vpack.c.b16 %v2049, %v2045
        %v2806 = vpack.c.b16 %v2054, %v2050
        %v2807 = vpack.c.b16 %v2055, %v2051
        %v2808 = vpack.c.b16 %v2056, %v2052
        %v2809 = vpack.c.b16 %v2057, %v2053
        %v2810 = vpack.c.b16 %v2062, %v2058
        %v2811 = vpack.c.b16 %v2063, %v2059
        %v2812 = vpack.c.b16 %v2064, %v2060
        %v2813 = vpack.c.b16 %v2065, %v2061
        %v2814 = vpack.c.b16 %v2070, %v2066
        %v2815 = vpack.c.b16 %v2071, %v2067
        %v2816 = vpack.c.b16 %v2072, %v2068
        %v2817 = vpack.c.b16 %v2073, %v2069
        %v2818 = vpack.c.b16 %v2078, %v2074
        %v2819 = vpack.c.b16 %v2079, %v2075
        %v2820 = vpack.c.b16 %v2080, %v2076
        %v2821 = vpack.c.b16 %v2081, %v2077
        %v2822 = vpack.c.b16 %v2086, %v2082
        %v2823 = vpack.c.b16 %v2087, %v2083
        %v2824 = vpack.c.b16 %v2088, %v2084
        %v2825 = vpack.c.b16 %v2089, %v2085
        %v2826 = vpack.c.b16 %v2094, %v2090
        %v2827 = vpack.c.b16 %v2095, %v2091
        %v2828 = vpack.c.b16 %v2096, %v2092
        %v2829 = vpack.c.b16 %v2097, %v2093
        %v2830 = vpack.c.b16 %v2102, %v2098
        %v2831 = vpack.c.b16 %v2103, %v2099
        %v2832 = vpack.c.b16 %v2104, %v2100
        %v2833 = vpack.c.b16 %v2105, %v2101
        %v2834 = vpack.c.b16 %v2110, %v2106
        %v2835 = vpack.c.b16 %v2111, %v2107
        %v2836 = vpack.c.b16 %v2112, %v2108
        %v2837 = vpack.c.b16 %v2113, %v2109
        %v2838 = vpack.c.b16 %v2118, %v2114
        %v2839 = vpack.c.b16 %v2119, %v2115
        %v2840 = vpack.c.b16 %v2120, %v2116
        %v2841 = vpack.c.b16 %v2121, %v2117
        %v2842 = vpack.c.b16 %v2126, %v2122
        %v2843 = vpack.c.b16 %v2127, %v2123
        %v2844 = vpack.c.b16 %v2128, %v2124
        %v2845 = vpack.c.b16 %v2129, %v2125
        %v2846 = vpack.c.b16 %v2134, %v2130
        %v2847 = vpack.c.b16 %v2135, %v2131
        %v2848 = vpack.c.b16 %v2136, %v2132
        %v2849 = vpack.c.b16 %v2137, %v2133
        %v2850 = vpack.c.b16 %v2142, %v2138
        %v2851 = vpack.c.b16 %v2143, %v2139
        %v2852 = vpack.c.b16 %v2144, %v2140
        %v2853 = vpack.c.b16 %v2145, %v2141
        %v2854 = vpack.c.b16 %v2150, %v2146
        %v2855 = vpack.c.b16 %v2151, %v2147
        %v2856 = vpack.c.b16 %v2152, %v2148
        %v2857 = vpack.c.b16 %v2153, %v2149
        %v2858 = vpack.c.b16 %v2158, %v2154
        %v2859 = vpack.c.b16 %v2159, %v2155
        %v2860 = vpack.c.b16 %v2160, %v2156
        %v2861 = vpack.c.b16 %v2161, %v2157
        %v2862 = vpack.c.b16 %v2166, %v2162
        %v2863 = vpack.c.b16 %v2167, %v2163
        %v2864 = vpack.c.b16 %v2168, %v2164
        %v2865 = vpack.c.b16 %v2169, %v2165
        %v2866 = vpack.c.b16 %v2174, %v2170
        %v2867 = vpack.c.b16 %v2175, %v2171
        %v2868 = vpack.c.b16 %v2176, %v2172
        %v2869 = vpack.c.b16 %v2177, %v2173
        %v2870 = vpack.c.b16 %v2182, %v2178
        %v2871 = vpack.c.b16 %v2183, %v2179
        %v2872 = vpack.c.b16 %v2184, %v2180
        %v2873 = vpack.c.b16 %v2185, %v2181
        %v2874 = vpack.c.b16 %v2190, %v2186
        %v2875 = vpack.c.b16 %v2191, %v2187
        %v2876 = vpack.c.b16 %v2192, %v2188
        %v2877 = vpack.c.b16 %v2193, %v2189
        %v2878 = vpack.c.b16 %v2198, %v2194
        %v2879 = vpack.c.b16 %v2199, %v2195
        %v2880 = vpack.c.b16 %v2200, %v2196
        %v2881 = vpack.c.b16 %v2201, %v2197
        %v2882 = vpack.c.b16 %v2206, %v2202
        %v2883 = vpack.c.b16 %v2207, %v2203
        %v2884 = vpack.c.b16 %v2208, %v2204
        %v2885 = vpack.c.b16 %v2209, %v2205
        %v2886 = vpack.c.b16 %v2214, %v2210
        %v2887 = vpack.c.b16 %v2215, %v2211
        %v2888 = vpack.c.b16 %v2216, %v2212
        %v2889 = vpack.c.b16 %v2217, %v2213
        %v2890 = vpack.c.b16 %v2222, %v2218
        %v2891 = vpack.c.b16 %v2223, %v2219
        %v2892 = vpack.c.b16 %v2224, %v2220
        %v2893 = vpack.c.b16 %v2225, %v2221
        %v2894 = vpack.c.b16 %v2230, %v2226
        %v2895 = vpack.c.b16 %v2231, %v2227
        %v2896 = vpack.c.b16 %v2232, %v2228
        %v2897 = vpack.c.b16 %v2233, %v2229
        %v2898 = vpack.c.b16 %v2238, %v2234
        %v2899 = vpack.c.b16 %v2239, %v2235
        %v2900 = vpack.c.b16 %v2240, %v2236
        %v2901 = vpack.c.b16 %v2241, %v2237
        %v2902 = vpack.c.b16 %v2246, %v2242
        %v2903 = vpack.c.b16 %v2247, %v2243
        %v2904 = vpack.c.b16 %v2248, %v2244
        %v2905 = vpack.c.b16 %v2249, %v2245
        %v2906 = vpack.c.b16 %v2254, %v2250
        %v2907 = vpack.c.b16 %v2255, %v2251
        %v2908 = vpack.c.b16 %v2256, %v2252
        %v2909 = vpack.c.b16 %v2257, %v2253
        %v2910 = vpack.c.b16 %v2262, %v2258
        %v2911 = vpack.c.b16 %v2263, %v2259
        %v2912 = vpack.c.b16 %v2264, %v2260
        %v2913 = vpack.c.b16 %v2265, %v2261
        %v2914 = vpack.c.b16 %v2270, %v2266
        %v2915 = vpack.c.b16 %v2271, %v2267
        %v2916 = vpack.c.b16 %v2272, %v2268
        %v2917 = vpack.c.b16 %v2273, %v2269
        %v2918 = vpack.c.b16 %v2278, %v2274
        %v2919 = vpack.c.b16 %v2279, %v2275
        %v2920 = vpack.c.b16 %v2280, %v2276
        %v2921 = vpack.c.b16 %v2281, %v2277
        %v2922 = vpack.c.b16 %v2286, %v2282
        %v2923 = vpack.c.b16 %v2287, %v2283
        %v2924 = vpack.c.b16 %v2288, %v2284
        %v2925 = vpack.c.b16 %v2289, %v2285
        %v2926 = vpack.c.b16 %v2294, %v2290
        %v2927 = vpack.c.b16 %v2295, %v2291
        %v2928 = vpack.c.b16 %v2296, %v2292
        %v2929 = vpack.c.b16 %v2297, %v2293
        %v2930 = vpack.c.b16 %v2302, %v2298
        %v2931 = vpack.c.b16 %v2303, %v2299
        %v2932 = vpack.c.b16 %v2304, %v2300
        %v2933 = vpack.c.b16 %v2305, %v2301
        %v2934 = vpack.c.b16 %v2310, %v2306
        %v2935 = vpack.c.b16 %v2311, %v2307
        %v2936 = vpack.c.b16 %v2312, %v2308
        %v2937 = vpack.c.b16 %v2313, %v2309
        %v2938 = vpack.c.b16 %v2318, %v2314
        %v2939 = vpack.c.b16 %v2319, %v2315
        %v2940 = vpack.c.b16 %v2320, %v2316
        %v2941 = vpack.c.b16 %v2321, %v2317
        %v2942 = vpack.c.b16 %v2326, %v2322
        %v2943 = vpack.c.b16 %v2327, %v2323
        %v2944 = vpack.c.b16 %v2328, %v2324
        %v2945 = vpack.c.b16 %v2329, %v2325
        %v2946 = vpack.c.b16 %v2334, %v2330
        %v2947 = vpack.c.b16 %v2335, %v2331
        %v2948 = vpack.c.b16 %v2336, %v2332
        %v2949 = vpack.c.b16 %v2337, %v2333
        %v2950 = vpack.c.b16 %v2342, %v2338
        %v2951 = vpack.c.b16 %v2343, %v2339
        %v2952 = vpack.c.b16 %v2344, %v2340
        %v2953 = vpack.c.b16 %v2345, %v2341
        %v2954 = vpack.c.b16 %v2350, %v2346
        %v2955 = vpack.c.b16 %v2351, %v2347
        %v2956 = vpack.c.b16 %v2352, %v2348
        %v2957 = vpack.c.b16 %v2353, %v2349
        %v2958 = vpack.c.b16 %v2358, %v2354
        %v2959 = vpack.c.b16 %v2359, %v2355
        %v2960 = vpack.c.b16 %v2360, %v2356
        %v2961 = vpack.c.b16 %v2361, %v2357
        %v2962 = vpack.c.b16 %v2366, %v2362
        %v2963 = vpack.c.b16 %v2367, %v2363
        %v2964 = vpack.c.b16 %v2368, %v2364
        %v2965 = vpack.c.b16 %v2369, %v2365
        %v2966 = vpack.c.b16 %v2374, %v2370
        %v2967 = vpack.c.b16 %v2375, %v2371
        %v2968 = vpack.c.b16 %v2376, %v2372
        %v2969 = vpack.c.b16 %v2377, %v2373
        %v2970 = vpack.c.b16 %v2382, %v2378
        %v2971 = vpack.c.b16 %v2383, %v2379
        %v2972 = vpack.c.b16 %v2384, %v2380
        %v2973 = vpack.c.b16 %v2385, %v2381
        %v2974 = vpack.c.b16 %v2390, %v2386
        %v2975 = vpack.c.b16 %v2391, %v2387
        %v2976 = vpack.c.b16 %v2392, %v2388
        %v2977 = vpack.c.b16 %v2393, %v2389
        %v2978 = vpack.c.b16 %v2398, %v2394
        %v2979 = vpack.c.b16 %v2399, %v2395
        %v2980 = vpack.c.b16 %v2400, %v2396
        %v2981 = vpack.c.b16 %v2401, %v2397
        %v2982 = vpack.c.b16 %v2406, %v2402
        %v2983 = vpack.c.b16 %v2407, %v2403
        %v2984 = vpack.c.b16 %v2408, %v2404
        %v2985 = vpack.c.b16 %v2409, %v2405
        %v2986 = vpack.c.b16 %v2414, %v2410
        %v2987 = vpack.c.b16 %v2415, %v2411
        %v2988 = vpack.c.b16 %v2416, %v2412
        %v2989 = vpack.c.b16 %v2417, %v2413
        %v2990 = vpack.c.b16 %v2422, %v2418
        %v2991 = vpack.c.b16 %v2423, %v2419
        %v2992 = vpack.c.b16 %v2424, %v2420
        %v2993 = vpack.c.b16 %v2425, %v2421
        %v2994 = vpack.c.b16 %v2430, %v2426
        %v2995 = vpack.c.b16 %v2431, %v2427
        %v2996 = vpack.c.b16 %v2432, %v2428
        %v2997 = vpack.c.b16 %v2433, %v2429
        %v2998 = vpack.c.b16 %v2438, %v2434
        %v2999 = vpack.c.b16 %v2439, %v2435
        %v3000 = vpack.c.b16 %v2440, %v2436
        %v3001 = vpack.c.b16 %v2441, %v2437
        %v3002 = vpack.c.b16 %v2446, %v2442
        %v3003 = vpack.c.b16 %v2447, %v2443
        %v3004 = vpack.c.b16 %v2448, %v2444
        %v3005 = vpack.c.b16 %v2449, %v2445
        %v3006 = vpack.c.b16 %v2454, %v2450
        %v3007 = vpack.c.b16 %v2455, %v2451
        %v3008 = vpack.c.b16 %v2456, %v2452
        %v3009 = vpack.c.b16 %v2457, %v2453
        %v3010 = vpack.c.b16 %v2462, %v2458
        %v3011 = vpack.c.b16 %v2463, %v2459
        %v3012 = vpack.c.b16 %v2464, %v2460
        %v3013 = vpack.c.b16 %v2465, %v2461
        %v3014 = vpack.c.b16 %v2470, %v2466
        %v3015 = vpack.c.b16 %v2471, %v2467
        %v3016 = vpack.c.b16 %v2472, %v2468
        %v3017 = vpack.c.b16 %v2473, %v2469
        %v3018 = vpack.c.b16 %v2478, %v2474
        %v3019 = vpack.c.b16 %v2479, %v2475
        %v3020 = vpack.c.b16 %v2480, %v2476
        %v3021 = vpack.c.b16 %v2481, %v2477
        %v3022 = vpack.c.b16 %v2486, %v2482
        %v3023 = vpack.c.b16 %v2487, %v2483
        %v3024 = vpack.c.b16 %v2488, %v2484
        %v3025 = vpack.c.b16 %v2489, %v2485
        %v3026 = vpack.c.b16 %v2494, %v2490
        %v3027 = vpack.c.b16 %v2495, %v2491
        %v3028 = vpack.c.b16 %v2496, %v2492
        %v3029 = vpack.c.b16 %v2497, %v2493
        %v3030 = vpack.c.b16 %v2502, %v2498
        %v3031 = vpack.c.b16 %v2503, %v2499
        %v3032 = vpack.c.b16 %v2504, %v2500
        %v3033 = vpack.c.b16 %v2505, %v2501
        %v3034 = vpack.c.b16 %v2510, %v2506
        %v3035 = vpack.c.b16 %v2511, %v2507
        %v3036 = vpack.c.b16 %v2512, %v2508
        %v3037 = vpack.c.b16 %v2513, %v2509
        %v3038 = vpack.c.b16 %v2518, %v2514
        %v3039 = vpack.c.b16 %v2519, %v2515
        %v3040 = vpack.c.b16 %v2520, %v2516
        %v3041 = vpack.c.b16 %v2521, %v2517
        %v3042 = vpack.c.b16 %v2526, %v2522
        %v3043 = vpack.c.b16 %v2527, %v2523
        %v3044 = vpack.c.b16 %v2528, %v2524
        %v3045 = vpack.c.b16 %v2529, %v2525
        %v3046 = vpack.c.b16 %v2534, %v2530
        %v3047 = vpack.c.b16 %v2535, %v2531
        %v3048 = vpack.c.b16 %v2536, %v2532
        %v3049 = vpack.c.b16 %v2537, %v2533
        %3562 = vmatprep.subr.bf16.mxu0 %v2567
        %3563 = vmatpush1.bf16.msra.mxu0 %v2566
        %3564 = vmatprep.subr.bf16.mxu0 %v2563
        %3565 = vmatpush1.bf16.msra.mxu0 %v2562
        %3566 = vmatprep.subr.bf16.mxu0 %v2559
        %3567 = vmatpush1.bf16.msra.mxu0 %v2558
        %3568 = vmatprep.subr.bf16.mxu0 %v2555
        %3569 = vmatpush1.bf16.msra.mxu0 %v2554
        %3570 = vmatprep.subr.bf16.mxu0 %v2551
        %3571 = vmatpush1.bf16.msra.mxu0 %v2550
        %3572 = vmatprep.subr.bf16.mxu0 %v2547
        %3573 = vmatpush1.bf16.msra.mxu0 %v2546
        %3574 = vmatprep.subr.bf16.mxu0 %v2543
        %3575 = vmatpush1.bf16.msra.mxu0 %v2542
        %3576 = vmatprep.subr.bf16.mxu0 %v2539
        %3577 = vmatpush1.bf16.msra.mxu0 %v2538
        %3578 = vmatprep.subr.bf16.mxu0 %v2599
        %3579 = vmatpush2.bf16.msra.mxu0 %v2598
        %3580 = vmatprep.subr.bf16.mxu0 %v2595
        %3581 = vmatpush2.bf16.msra.mxu0 %v2594
        %3582 = vmatprep.subr.bf16.mxu0 %v2591
        %3583 = vmatpush2.bf16.msra.mxu0 %v2590
        %3584 = vmatprep.subr.bf16.mxu0 %v2587
        %3585 = vmatpush2.bf16.msra.mxu0 %v2586
        %3586 = vmatprep.subr.bf16.mxu0 %v2583
        %3587 = vmatpush2.bf16.msra.mxu0 %v2582
        %3588 = vmatprep.subr.bf16.mxu0 %v2579
        %3589 = vmatpush2.bf16.msra.mxu0 %v2578
        %3590 = vmatprep.subr.bf16.mxu0 %v2575
        %3591 = vmatpush2.bf16.msra.mxu0 %v2574
        %3592 = vmatprep.subr.bf16.mxu0 %v2571
        %3593 = vmatpush2.bf16.msra.mxu0 %v2570
        %3594 = vmatprep.mubr.bf16.mxu0 %v437
        %3595 = vmatmul.mubr.bf16.gmra.mxu0 %v436
        %v3596 = vpop.f32.mrf.mxu0
        %v3597 = vadd.f32 %v985, %v3596
        %v3598 = vpop.f32.mrf.mxu0
        %v3599 = vadd.f32 %v989, %v3598
        %v3600 = vpop.f32.mrf.mxu0
        %v3601 = vadd.f32 %v985, %v3600
        %v3602 = vpop.f32.mrf.mxu0
        %v3603 = vadd.f32 %v989, %v3602
        %3604 = vmatprep.mubr.bf16.mxu0 %v453
        %3605 = vmatmul.mubr.bf16.gmra.mxu0 %v452
        %v3606 = vpop.f32.mrf.mxu0
        %v3607 = vadd.f32 %v985, %v3606
        %v3608 = vpop.f32.mrf.mxu0
        %v3609 = vadd.f32 %v989, %v3608
        %v3610 = vpop.f32.mrf.mxu0
        %v3611 = vadd.f32 %v985, %v3610
        %v3612 = vpop.f32.mrf.mxu0
        %v3613 = vadd.f32 %v989, %v3612
        %3614 = vdwg.mxu0
        %3615 = vmatprep.subr.bf16.mxu0 %v2631
        %3616 = vmatpush1.bf16.msra.mxu0 %v2630
        %3617 = vmatprep.subr.bf16.mxu0 %v2627
        %3618 = vmatpush1.bf16.msra.mxu0 %v2626
        %3619 = vmatprep.subr.bf16.mxu0 %v2623
        %3620 = vmatpush1.bf16.msra.mxu0 %v2622
        %3621 = vmatprep.subr.bf16.mxu0 %v2619
        %3622 = vmatpush1.bf16.msra.mxu0 %v2618
        %3623 = vmatprep.subr.bf16.mxu0 %v2615
        %3624 = vmatpush1.bf16.msra.mxu0 %v2614
        %3625 = vmatprep.subr.bf16.mxu0 %v2611
        %3626 = vmatpush1.bf16.msra.mxu0 %v2610
        %3627 = vmatprep.subr.bf16.mxu0 %v2607
        %3628 = vmatpush1.bf16.msra.mxu0 %v2606
        %3629 = vmatprep.subr.bf16.mxu0 %v2603
        %3630 = vmatpush1.bf16.msra.mxu0 %v2602
        %3631 = vmatprep.subr.bf16.mxu0 %v2663
        %3632 = vmatpush2.bf16.msra.mxu0 %v2662
        %3633 = vmatprep.subr.bf16.mxu0 %v2659
        %3634 = vmatpush2.bf16.msra.mxu0 %v2658
        %3635 = vmatprep.subr.bf16.mxu0 %v2655
        %3636 = vmatpush2.bf16.msra.mxu0 %v2654
        %3637 = vmatprep.subr.bf16.mxu0 %v2651
        %3638 = vmatpush2.bf16.msra.mxu0 %v2650
        %3639 = vmatprep.subr.bf16.mxu0 %v2647
        %3640 = vmatpush2.bf16.msra.mxu0 %v2646
        %3641 = vmatprep.subr.bf16.mxu0 %v2643
        %3642 = vmatpush2.bf16.msra.mxu0 %v2642
        %3643 = vmatprep.subr.bf16.mxu0 %v2639
        %3644 = vmatpush2.bf16.msra.mxu0 %v2638
        %3645 = vmatprep.subr.bf16.mxu0 %v2635
        %3646 = vmatpush2.bf16.msra.mxu0 %v2634
        %3647 = vmatprep.mubr.bf16.mxu0 %v439
        %3648 = vmatmul.mubr.bf16.gmra.mxu0 %v438
        %v3649 = vpop.f32.mrf.mxu0
        %v3650 = vadd.f32 %v3597, %v3649
        %v3651 = vpop.f32.mrf.mxu0
        %v3652 = vadd.f32 %v3599, %v3651
        %v3653 = vpop.f32.mrf.mxu0
        %v3654 = vadd.f32 %v3601, %v3653
        %v3655 = vpop.f32.mrf.mxu0
        %v3656 = vadd.f32 %v3603, %v3655
        %3657 = vmatprep.mubr.bf16.mxu0 %v455
        %3658 = vmatmul.mubr.bf16.gmra.mxu0 %v454
        %v3659 = vpop.f32.mrf.mxu0
        %v3660 = vadd.f32 %v3607, %v3659
        %v3661 = vpop.f32.mrf.mxu0
        %v3662 = vadd.f32 %v3609, %v3661
        %v3663 = vpop.f32.mrf.mxu0
        %v3664 = vadd.f32 %v3611, %v3663
        %v3665 = vpop.f32.mrf.mxu0
        %v3666 = vadd.f32 %v3613, %v3665
        %3667 = vdwg.mxu0
        %3668 = vmatprep.subr.bf16.mxu0 %v2695
        %3669 = vmatpush1.bf16.msra.mxu0 %v2694
        %3670 = vmatprep.subr.bf16.mxu0 %v2691
        %3671 = vmatpush1.bf16.msra.mxu0 %v2690
        %3672 = vmatprep.subr.bf16.mxu0 %v2687
        %3673 = vmatpush1.bf16.msra.mxu0 %v2686
        %3674 = vmatprep.subr.bf16.mxu0 %v2683
        %3675 = vmatpush1.bf16.msra.mxu0 %v2682
        %3676 = vmatprep.subr.bf16.mxu0 %v2679
        %3677 = vmatpush1.bf16.msra.mxu0 %v2678
        %3678 = vmatprep.subr.bf16.mxu0 %v2675
        %3679 = vmatpush1.bf16.msra.mxu0 %v2674
        %3680 = vmatprep.subr.bf16.mxu0 %v2671
        %3681 = vmatpush1.bf16.msra.mxu0 %v2670
        %3682 = vmatprep.subr.bf16.mxu0 %v2667
        %3683 = vmatpush1.bf16.msra.mxu0 %v2666
        %3684 = vmatprep.subr.bf16.mxu0 %v2727
        %3685 = vmatpush2.bf16.msra.mxu0 %v2726
        %3686 = vmatprep.subr.bf16.mxu0 %v2723
        %3687 = vmatpush2.bf16.msra.mxu0 %v2722
        %3688 = vmatprep.subr.bf16.mxu0 %v2719
        %3689 = vmatpush2.bf16.msra.mxu0 %v2718
        %3690 = vmatprep.subr.bf16.mxu0 %v2715
        %3691 = vmatpush2.bf16.msra.mxu0 %v2714
        %3692 = vmatprep.subr.bf16.mxu0 %v2711
        %3693 = vmatpush2.bf16.msra.mxu0 %v2710
        %3694 = vmatprep.subr.bf16.mxu0 %v2707
        %3695 = vmatpush2.bf16.msra.mxu0 %v2706
        %3696 = vmatprep.subr.bf16.mxu0 %v2703
        %3697 = vmatpush2.bf16.msra.mxu0 %v2702
        %3698 = vmatprep.subr.bf16.mxu0 %v2699
        %3699 = vmatpush2.bf16.msra.mxu0 %v2698
        %3700 = vmatprep.mubr.bf16.mxu0 %v441
        %3701 = vmatmul.mubr.bf16.gmra.mxu0 %v440
        %v3702 = vpop.f32.mrf.mxu0
        %v3703 = vadd.f32 %v3650, %v3702
        %v3704 = vpop.f32.mrf.mxu0
        %v3705 = vadd.f32 %v3652, %v3704
        %v3706 = vpop.f32.mrf.mxu0
        %v3707 = vadd.f32 %v3654, %v3706
        %v3708 = vpop.f32.mrf.mxu0
        %v3709 = vadd.f32 %v3656, %v3708
        %3710 = vmatprep.mubr.bf16.mxu0 %v457
        %3711 = vmatmul.mubr.bf16.gmra.mxu0 %v456
        %v3712 = vpop.f32.mrf.mxu0
        %v3713 = vadd.f32 %v3660, %v3712
        %v3714 = vpop.f32.mrf.mxu0
        %v3715 = vadd.f32 %v3662, %v3714
        %v3716 = vpop.f32.mrf.mxu0
        %v3717 = vadd.f32 %v3664, %v3716
        %v3718 = vpop.f32.mrf.mxu0
        %v3719 = vadd.f32 %v3666, %v3718
        %3720 = vdwg.mxu0
        %3721 = vmatprep.subr.bf16.mxu0 %v2759
        %3722 = vmatpush1.bf16.msra.mxu0 %v2758
        %3723 = vmatprep.subr.bf16.mxu0 %v2755
        %3724 = vmatpush1.bf16.msra.mxu0 %v2754
        %3725 = vmatprep.subr.bf16.mxu0 %v2751
        %3726 = vmatpush1.bf16.msra.mxu0 %v2750
        %3727 = vmatprep.subr.bf16.mxu0 %v2747
        %3728 = vmatpush1.bf16.msra.mxu0 %v2746
        %3729 = vmatprep.subr.bf16.mxu0 %v2743
        %3730 = vmatpush1.bf16.msra.mxu0 %v2742
        %3731 = vmatprep.subr.bf16.mxu0 %v2739
        %3732 = vmatpush1.bf16.msra.mxu0 %v2738
        %3733 = vmatprep.subr.bf16.mxu0 %v2735
        %3734 = vmatpush1.bf16.msra.mxu0 %v2734
        %3735 = vmatprep.subr.bf16.mxu0 %v2731
        %3736 = vmatpush1.bf16.msra.mxu0 %v2730
        %3737 = vmatprep.subr.bf16.mxu0 %v2791
        %3738 = vmatpush2.bf16.msra.mxu0 %v2790
        %3739 = vmatprep.subr.bf16.mxu0 %v2787
        %3740 = vmatpush2.bf16.msra.mxu0 %v2786
        %3741 = vmatprep.subr.bf16.mxu0 %v2783
        %3742 = vmatpush2.bf16.msra.mxu0 %v2782
        %3743 = vmatprep.subr.bf16.mxu0 %v2779
        %3744 = vmatpush2.bf16.msra.mxu0 %v2778
        %3745 = vmatprep.subr.bf16.mxu0 %v2775
        %3746 = vmatpush2.bf16.msra.mxu0 %v2774
        %3747 = vmatprep.subr.bf16.mxu0 %v2771
        %3748 = vmatpush2.bf16.msra.mxu0 %v2770
        %3749 = vmatprep.subr.bf16.mxu0 %v2767
        %3750 = vmatpush2.bf16.msra.mxu0 %v2766
        %3751 = vmatprep.subr.bf16.mxu0 %v2763
        %3752 = vmatpush2.bf16.msra.mxu0 %v2762
        %3753 = vmatprep.mubr.bf16.mxu0 %v443
        %3754 = vmatmul.mubr.bf16.gmra.mxu0 %v442
        %v3755 = vpop.f32.mrf.mxu0
        %v3756 = vadd.f32 %v3703, %v3755
        %v3757 = vpop.f32.mrf.mxu0
        %v3758 = vadd.f32 %v3705, %v3757
        %v3759 = vpop.f32.mrf.mxu0
        %v3760 = vadd.f32 %v3707, %v3759
        %v3761 = vpop.f32.mrf.mxu0
        %v3762 = vadd.f32 %v3709, %v3761
        %3763 = vmatprep.mubr.bf16.mxu0 %v459
        %3764 = vmatmul.mubr.bf16.gmra.mxu0 %v458
        %v3765 = vpop.f32.mrf.mxu0
        %v3766 = vadd.f32 %v3713, %v3765
        %v3767 = vpop.f32.mrf.mxu0
        %v3768 = vadd.f32 %v3715, %v3767
        %v3769 = vpop.f32.mrf.mxu0
        %v3770 = vadd.f32 %v3717, %v3769
        %v3771 = vpop.f32.mrf.mxu0
        %v3772 = vadd.f32 %v3719, %v3771
        %3773 = vdwg.mxu0
        %3774 = vmatprep.subr.bf16.mxu0 %v2823
        %3775 = vmatpush1.bf16.msra.mxu0 %v2822
        %3776 = vmatprep.subr.bf16.mxu0 %v2819
        %3777 = vmatpush1.bf16.msra.mxu0 %v2818
        %3778 = vmatprep.subr.bf16.mxu0 %v2815
        %3779 = vmatpush1.bf16.msra.mxu0 %v2814
        %3780 = vmatprep.subr.bf16.mxu0 %v2811
        %3781 = vmatpush1.bf16.msra.mxu0 %v2810
        %3782 = vmatprep.subr.bf16.mxu0 %v2807
        %3783 = vmatpush1.bf16.msra.mxu0 %v2806
        %3784 = vmatprep.subr.bf16.mxu0 %v2803
        %3785 = vmatpush1.bf16.msra.mxu0 %v2802
        %3786 = vmatprep.subr.bf16.mxu0 %v2799
        %3787 = vmatpush1.bf16.msra.mxu0 %v2798
        %3788 = vmatprep.subr.bf16.mxu0 %v2795
        %3789 = vmatpush1.bf16.msra.mxu0 %v2794
        %3790 = vmatprep.subr.bf16.mxu0 %v2855
        %3791 = vmatpush2.bf16.msra.mxu0 %v2854
        %3792 = vmatprep.subr.bf16.mxu0 %v2851
        %3793 = vmatpush2.bf16.msra.mxu0 %v2850
        %3794 = vmatprep.subr.bf16.mxu0 %v2847
        %3795 = vmatpush2.bf16.msra.mxu0 %v2846
        %3796 = vmatprep.subr.bf16.mxu0 %v2843
        %3797 = vmatpush2.bf16.msra.mxu0 %v2842
        %3798 = vmatprep.subr.bf16.mxu0 %v2839
        %3799 = vmatpush2.bf16.msra.mxu0 %v2838
        %3800 = vmatprep.subr.bf16.mxu0 %v2835
        %3801 = vmatpush2.bf16.msra.mxu0 %v2834
        %3802 = vmatprep.subr.bf16.mxu0 %v2831
        %3803 = vmatpush2.bf16.msra.mxu0 %v2830
        %3804 = vmatprep.subr.bf16.mxu0 %v2827
        %3805 = vmatpush2.bf16.msra.mxu0 %v2826
        %3806 = vmatprep.mubr.bf16.mxu0 %v445
        %3807 = vmatmul.mubr.bf16.gmra.mxu0 %v444
        %v3808 = vpop.f32.mrf.mxu0
        %v3809 = vadd.f32 %v3756, %v3808
        %v3810 = vpop.f32.mrf.mxu0
        %v3811 = vadd.f32 %v3758, %v3810
        %v3812 = vpop.f32.mrf.mxu0
        %v3813 = vadd.f32 %v3760, %v3812
        %v3814 = vpop.f32.mrf.mxu0
        %v3815 = vadd.f32 %v3762, %v3814
        %3816 = vmatprep.mubr.bf16.mxu0 %v461
        %3817 = vmatmul.mubr.bf16.gmra.mxu0 %v460
        %v3818 = vpop.f32.mrf.mxu0
        %v3819 = vadd.f32 %v3766, %v3818
        %v3820 = vpop.f32.mrf.mxu0
        %v3821 = vadd.f32 %v3768, %v3820
        %v3822 = vpop.f32.mrf.mxu0
        %v3823 = vadd.f32 %v3770, %v3822
        %v3824 = vpop.f32.mrf.mxu0
        %v3825 = vadd.f32 %v3772, %v3824
        %3826 = vdwg.mxu0
        %3827 = vmatprep.subr.bf16.mxu0 %v2887
        %3828 = vmatpush1.bf16.msra.mxu0 %v2886
        %3829 = vmatprep.subr.bf16.mxu0 %v2883
        %3830 = vmatpush1.bf16.msra.mxu0 %v2882
        %3831 = vmatprep.subr.bf16.mxu0 %v2879
        %3832 = vmatpush1.bf16.msra.mxu0 %v2878
        %3833 = vmatprep.subr.bf16.mxu0 %v2875
        %3834 = vmatpush1.bf16.msra.mxu0 %v2874
        %3835 = vmatprep.subr.bf16.mxu0 %v2871
        %3836 = vmatpush1.bf16.msra.mxu0 %v2870
        %3837 = vmatprep.subr.bf16.mxu0 %v2867
        %3838 = vmatpush1.bf16.msra.mxu0 %v2866
        %3839 = vmatprep.subr.bf16.mxu0 %v2863
        %3840 = vmatpush1.bf16.msra.mxu0 %v2862
        %3841 = vmatprep.subr.bf16.mxu0 %v2859
        %3842 = vmatpush1.bf16.msra.mxu0 %v2858
        %3843 = vmatprep.subr.bf16.mxu0 %v2919
        %3844 = vmatpush2.bf16.msra.mxu0 %v2918
        %3845 = vmatprep.subr.bf16.mxu0 %v2915
        %3846 = vmatpush2.bf16.msra.mxu0 %v2914
        %3847 = vmatprep.subr.bf16.mxu0 %v2911
        %3848 = vmatpush2.bf16.msra.mxu0 %v2910
        %3849 = vmatprep.subr.bf16.mxu0 %v2907
        %3850 = vmatpush2.bf16.msra.mxu0 %v2906
        %3851 = vmatprep.subr.bf16.mxu0 %v2903
        %3852 = vmatpush2.bf16.msra.mxu0 %v2902
        %3853 = vmatprep.subr.bf16.mxu0 %v2899
        %3854 = vmatpush2.bf16.msra.mxu0 %v2898
        %3855 = vmatprep.subr.bf16.mxu0 %v2895
        %3856 = vmatpush2.bf16.msra.mxu0 %v2894
        %3857 = vmatprep.subr.bf16.mxu0 %v2891
        %3858 = vmatpush2.bf16.msra.mxu0 %v2890
        %3859 = vmatprep.mubr.bf16.mxu0 %v447
        %3860 = vmatmul.mubr.bf16.gmra.mxu0 %v446
        %v3861 = vpop.f32.mrf.mxu0
        %v3862 = vadd.f32 %v3809, %v3861
        %v3863 = vpop.f32.mrf.mxu0
        %v3864 = vadd.f32 %v3811, %v3863
        %v3865 = vpop.f32.mrf.mxu0
        %v3866 = vadd.f32 %v3813, %v3865
        %v3867 = vpop.f32.mrf.mxu0
        %v3868 = vadd.f32 %v3815, %v3867
        %3869 = vmatprep.mubr.bf16.mxu0 %v463
        %3870 = vmatmul.mubr.bf16.gmra.mxu0 %v462
        %v3871 = vpop.f32.mrf.mxu0
        %v3872 = vadd.f32 %v3819, %v3871
        %v3873 = vpop.f32.mrf.mxu0
        %v3874 = vadd.f32 %v3821, %v3873
        %v3875 = vpop.f32.mrf.mxu0
        %v3876 = vadd.f32 %v3823, %v3875
        %v3877 = vpop.f32.mrf.mxu0
        %v3878 = vadd.f32 %v3825, %v3877
        %3879 = vdwg.mxu0
        %3880 = vmatprep.subr.bf16.mxu0 %v2951
        %3881 = vmatpush1.bf16.msra.mxu0 %v2950
        %3882 = vmatprep.subr.bf16.mxu0 %v2947
        %3883 = vmatpush1.bf16.msra.mxu0 %v2946
        %3884 = vmatprep.subr.bf16.mxu0 %v2943
        %3885 = vmatpush1.bf16.msra.mxu0 %v2942
        %3886 = vmatprep.subr.bf16.mxu0 %v2939
        %3887 = vmatpush1.bf16.msra.mxu0 %v2938
        %3888 = vmatprep.subr.bf16.mxu0 %v2935
        %3889 = vmatpush1.bf16.msra.mxu0 %v2934
        %3890 = vmatprep.subr.bf16.mxu0 %v2931
        %3891 = vmatpush1.bf16.msra.mxu0 %v2930
        %3892 = vmatprep.subr.bf16.mxu0 %v2927
        %3893 = vmatpush1.bf16.msra.mxu0 %v2926
        %3894 = vmatprep.subr.bf16.mxu0 %v2923
        %3895 = vmatpush1.bf16.msra.mxu0 %v2922
        %3896 = vmatprep.subr.bf16.mxu0 %v2983
        %3897 = vmatpush2.bf16.msra.mxu0 %v2982
        %3898 = vmatprep.subr.bf16.mxu0 %v2979
        %3899 = vmatpush2.bf16.msra.mxu0 %v2978
        %3900 = vmatprep.subr.bf16.mxu0 %v2975
        %3901 = vmatpush2.bf16.msra.mxu0 %v2974
        %3902 = vmatprep.subr.bf16.mxu0 %v2971
        %3903 = vmatpush2.bf16.msra.mxu0 %v2970
        %3904 = vmatprep.subr.bf16.mxu0 %v2967
        %3905 = vmatpush2.bf16.msra.mxu0 %v2966
        %3906 = vmatprep.subr.bf16.mxu0 %v2963
        %3907 = vmatpush2.bf16.msra.mxu0 %v2962
        %3908 = vmatprep.subr.bf16.mxu0 %v2959
        %3909 = vmatpush2.bf16.msra.mxu0 %v2958
        %3910 = vmatprep.subr.bf16.mxu0 %v2955
        %3911 = vmatpush2.bf16.msra.mxu0 %v2954
        %3912 = vmatprep.mubr.bf16.mxu0 %v449
        %3913 = vmatmul.mubr.bf16.gmra.mxu0 %v448
        %v3914 = vpop.f32.mrf.mxu0
        %v3915 = vadd.f32 %v3862, %v3914
        %v3916 = vpop.f32.mrf.mxu0
        %v3917 = vadd.f32 %v3864, %v3916
        %v3918 = vpop.f32.mrf.mxu0
        %v3919 = vadd.f32 %v3866, %v3918
        %v3920 = vpop.f32.mrf.mxu0
        %v3921 = vadd.f32 %v3868, %v3920
        %3922 = vmatprep.mubr.bf16.mxu0 %v465
        %3923 = vmatmul.mubr.bf16.gmra.mxu0 %v464
        %v3924 = vpop.f32.mrf.mxu0
        %v3925 = vadd.f32 %v3872, %v3924
        %v3926 = vpop.f32.mrf.mxu0
        %v3927 = vadd.f32 %v3874, %v3926
        %v3928 = vpop.f32.mrf.mxu0
        %v3929 = vadd.f32 %v3876, %v3928
        %v3930 = vpop.f32.mrf.mxu0
        %v3931 = vadd.f32 %v3878, %v3930
        %3932 = vdwg.mxu0
        %3933 = vmatprep.subr.bf16.mxu0 %v3015
        %3934 = vmatpush1.bf16.msra.mxu0 %v3014
        %3935 = vmatprep.subr.bf16.mxu0 %v3011
        %3936 = vmatpush1.bf16.msra.mxu0 %v3010
        %3937 = vmatprep.subr.bf16.mxu0 %v3007
        %3938 = vmatpush1.bf16.msra.mxu0 %v3006
        %3939 = vmatprep.subr.bf16.mxu0 %v3003
        %3940 = vmatpush1.bf16.msra.mxu0 %v3002
        %3941 = vmatprep.subr.bf16.mxu0 %v2999
        %3942 = vmatpush1.bf16.msra.mxu0 %v2998
        %3943 = vmatprep.subr.bf16.mxu0 %v2995
        %3944 = vmatpush1.bf16.msra.mxu0 %v2994
        %3945 = vmatprep.subr.bf16.mxu0 %v2991
        %3946 = vmatpush1.bf16.msra.mxu0 %v2990
        %3947 = vmatprep.subr.bf16.mxu0 %v2987
        %3948 = vmatpush1.bf16.msra.mxu0 %v2986
        %3949 = vmatprep.subr.bf16.mxu0 %v3047
        %3950 = vmatpush2.bf16.msra.mxu0 %v3046
        %3951 = vmatprep.subr.bf16.mxu0 %v3043
        %3952 = vmatpush2.bf16.msra.mxu0 %v3042
        %3953 = vmatprep.subr.bf16.mxu0 %v3039
        %3954 = vmatpush2.bf16.msra.mxu0 %v3038
        %3955 = vmatprep.subr.bf16.mxu0 %v3035
        %3956 = vmatpush2.bf16.msra.mxu0 %v3034
        %3957 = vmatprep.subr.bf16.mxu0 %v3031
        %3958 = vmatpush2.bf16.msra.mxu0 %v3030
        %3959 = vmatprep.subr.bf16.mxu0 %v3027
        %3960 = vmatpush2.bf16.msra.mxu0 %v3026
        %3961 = vmatprep.subr.bf16.mxu0 %v3023
        %3962 = vmatpush2.bf16.msra.mxu0 %v3022
        %3963 = vmatprep.subr.bf16.mxu0 %v3019
        %3964 = vmatpush2.bf16.msra.mxu0 %v3018
        %3965 = vmatprep.mubr.bf16.mxu0 %v451
        %3966 = vmatmul.mubr.bf16.gmra.mxu0 %v450
        %v3967 = vpop.f32.mrf.mxu0
        %v3968 = vadd.f32 %v3915, %v3967
        %v3969 = vpop.f32.mrf.mxu0
        %v3970 = vadd.f32 %v3917, %v3969
        %v3971 = vpop.f32.mrf.mxu0
        %v3972 = vadd.f32 %v3919, %v3971
        %v3973 = vpop.f32.mrf.mxu0
        %v3974 = vadd.f32 %v3921, %v3973
        %3975 = vmatprep.mubr.bf16.mxu0 %v467
        %3976 = vmatmul.mubr.bf16.gmra.mxu0 %v466
        %v3977 = vpop.f32.mrf.mxu0
        %v3978 = vadd.f32 %v3925, %v3977
        %v3979 = vpop.f32.mrf.mxu0
        %v3980 = vadd.f32 %v3927, %v3979
        %v3981 = vpop.f32.mrf.mxu0
        %v3982 = vadd.f32 %v3929, %v3981
        %v3983 = vpop.f32.mrf.mxu0
        %v3984 = vadd.f32 %v3931, %v3983
        %3985 = vdwg.mxu0
        %3986 = vmatprep.subr.bf16.mxu0 %v2569
        %3987 = vmatpush1.bf16.msra.mxu0 %v2568
        %3988 = vmatprep.subr.bf16.mxu0 %v2565
        %3989 = vmatpush1.bf16.msra.mxu0 %v2564
        %3990 = vmatprep.subr.bf16.mxu0 %v2561
        %3991 = vmatpush1.bf16.msra.mxu0 %v2560
        %3992 = vmatprep.subr.bf16.mxu0 %v2557
        %3993 = vmatpush1.bf16.msra.mxu0 %v2556
        %3994 = vmatprep.subr.bf16.mxu0 %v2553
        %3995 = vmatpush1.bf16.msra.mxu0 %v2552
        %3996 = vmatprep.subr.bf16.mxu0 %v2549
        %3997 = vmatpush1.bf16.msra.mxu0 %v2548
        %3998 = vmatprep.subr.bf16.mxu0 %v2545
        %3999 = vmatpush1.bf16.msra.mxu0 %v2544
        %4000 = vmatprep.subr.bf16.mxu0 %v2541
        %4001 = vmatpush1.bf16.msra.mxu0 %v2540
        %4002 = vmatprep.subr.bf16.mxu0 %v2601
        %4003 = vmatpush2.bf16.msra.mxu0 %v2600
        %4004 = vmatprep.subr.bf16.mxu0 %v2597
        %4005 = vmatpush2.bf16.msra.mxu0 %v2596
        %4006 = vmatprep.subr.bf16.mxu0 %v2593
        %4007 = vmatpush2.bf16.msra.mxu0 %v2592
        %4008 = vmatprep.subr.bf16.mxu0 %v2589
        %4009 = vmatpush2.bf16.msra.mxu0 %v2588
        %4010 = vmatprep.subr.bf16.mxu0 %v2585
        %4011 = vmatpush2.bf16.msra.mxu0 %v2584
        %4012 = vmatprep.subr.bf16.mxu0 %v2581
        %4013 = vmatpush2.bf16.msra.mxu0 %v2580
        %4014 = vmatprep.subr.bf16.mxu0 %v2577
        %4015 = vmatpush2.bf16.msra.mxu0 %v2576
        %4016 = vmatprep.subr.bf16.mxu0 %v2573
        %4017 = vmatpush2.bf16.msra.mxu0 %v2572
        %4018 = vmatprep.mubr.bf16.mxu0 %v437
        %4019 = vmatmul.mubr.bf16.gmra.mxu0 %v436
        %v4020 = vpop.f32.mrf.mxu0
        %v4021 = vadd.f32 %v993, %v4020
        %v4022 = vpop.f32.mrf.mxu0
        %v4023 = vadd.f32 %v997, %v4022
        %v4024 = vpop.f32.mrf.mxu0
        %v4025 = vadd.f32 %v993, %v4024
        %v4026 = vpop.f32.mrf.mxu0
        %v4027 = vadd.f32 %v997, %v4026
        %4028 = vmatprep.mubr.bf16.mxu0 %v453
        %4029 = vmatmul.mubr.bf16.gmra.mxu0 %v452
        %v4030 = vpop.f32.mrf.mxu0
        %v4031 = vadd.f32 %v993, %v4030
        %v4032 = vpop.f32.mrf.mxu0
        %v4033 = vadd.f32 %v997, %v4032
        %v4034 = vpop.f32.mrf.mxu0
        %v4035 = vadd.f32 %v993, %v4034
        %v4036 = vpop.f32.mrf.mxu0
        %v4037 = vadd.f32 %v997, %v4036
        %4038 = vdwg.mxu0
        %4039 = vmatprep.subr.bf16.mxu0 %v2633
        %4040 = vmatpush1.bf16.msra.mxu0 %v2632
        %4041 = vmatprep.subr.bf16.mxu0 %v2629
        %4042 = vmatpush1.bf16.msra.mxu0 %v2628
        %4043 = vmatprep.subr.bf16.mxu0 %v2625
        %4044 = vmatpush1.bf16.msra.mxu0 %v2624
        %4045 = vmatprep.subr.bf16.mxu0 %v2621
        %4046 = vmatpush1.bf16.msra.mxu0 %v2620
        %4047 = vmatprep.subr.bf16.mxu0 %v2617
        %4048 = vmatpush1.bf16.msra.mxu0 %v2616
        %4049 = vmatprep.subr.bf16.mxu0 %v2613
        %4050 = vmatpush1.bf16.msra.mxu0 %v2612
        %4051 = vmatprep.subr.bf16.mxu0 %v2609
        %4052 = vmatpush1.bf16.msra.mxu0 %v2608
        %4053 = vmatprep.subr.bf16.mxu0 %v2605
        %4054 = vmatpush1.bf16.msra.mxu0 %v2604
        %4055 = vmatprep.subr.bf16.mxu0 %v2665
        %4056 = vmatpush2.bf16.msra.mxu0 %v2664
        %4057 = vmatprep.subr.bf16.mxu0 %v2661
        %4058 = vmatpush2.bf16.msra.mxu0 %v2660
        %4059 = vmatprep.subr.bf16.mxu0 %v2657
        %4060 = vmatpush2.bf16.msra.mxu0 %v2656
        %4061 = vmatprep.subr.bf16.mxu0 %v2653
        %4062 = vmatpush2.bf16.msra.mxu0 %v2652
        %4063 = vmatprep.subr.bf16.mxu0 %v2649
        %4064 = vmatpush2.bf16.msra.mxu0 %v2648
        %4065 = vmatprep.subr.bf16.mxu0 %v2645
        %4066 = vmatpush2.bf16.msra.mxu0 %v2644
        %4067 = vmatprep.subr.bf16.mxu0 %v2641
        %4068 = vmatpush2.bf16.msra.mxu0 %v2640
        %4069 = vmatprep.subr.bf16.mxu0 %v2637
        %4070 = vmatpush2.bf16.msra.mxu0 %v2636
        %4071 = vmatprep.mubr.bf16.mxu0 %v439
        %4072 = vmatmul.mubr.bf16.gmra.mxu0 %v438
        %v4073 = vpop.f32.mrf.mxu0
        %v4074 = vadd.f32 %v4021, %v4073
        %v4075 = vpop.f32.mrf.mxu0
        %v4076 = vadd.f32 %v4023, %v4075
        %v4077 = vpop.f32.mrf.mxu0
        %v4078 = vadd.f32 %v4025, %v4077
        %v4079 = vpop.f32.mrf.mxu0
        %v4080 = vadd.f32 %v4027, %v4079
        %4081 = vmatprep.mubr.bf16.mxu0 %v455
        %4082 = vmatmul.mubr.bf16.gmra.mxu0 %v454
        %v4083 = vpop.f32.mrf.mxu0
        %v4084 = vadd.f32 %v4031, %v4083
        %v4085 = vpop.f32.mrf.mxu0
        %v4086 = vadd.f32 %v4033, %v4085
        %v4087 = vpop.f32.mrf.mxu0
        %v4088 = vadd.f32 %v4035, %v4087
        %v4089 = vpop.f32.mrf.mxu0
        %v4090 = vadd.f32 %v4037, %v4089
        %4091 = vdwg.mxu0
        %4092 = vmatprep.subr.bf16.mxu0 %v2697
        %4093 = vmatpush1.bf16.msra.mxu0 %v2696
        %4094 = vmatprep.subr.bf16.mxu0 %v2693
        %4095 = vmatpush1.bf16.msra.mxu0 %v2692
        %4096 = vmatprep.subr.bf16.mxu0 %v2689
        %4097 = vmatpush1.bf16.msra.mxu0 %v2688
        %4098 = vmatprep.subr.bf16.mxu0 %v2685
        %4099 = vmatpush1.bf16.msra.mxu0 %v2684
        %4100 = vmatprep.subr.bf16.mxu0 %v2681
        %4101 = vmatpush1.bf16.msra.mxu0 %v2680
        %4102 = vmatprep.subr.bf16.mxu0 %v2677
        %4103 = vmatpush1.bf16.msra.mxu0 %v2676
        %4104 = vmatprep.subr.bf16.mxu0 %v2673
        %4105 = vmatpush1.bf16.msra.mxu0 %v2672
        %4106 = vmatprep.subr.bf16.mxu0 %v2669
        %4107 = vmatpush1.bf16.msra.mxu0 %v2668
        %4108 = vmatprep.subr.bf16.mxu0 %v2729
        %4109 = vmatpush2.bf16.msra.mxu0 %v2728
        %4110 = vmatprep.subr.bf16.mxu0 %v2725
        %4111 = vmatpush2.bf16.msra.mxu0 %v2724
        %4112 = vmatprep.subr.bf16.mxu0 %v2721
        %4113 = vmatpush2.bf16.msra.mxu0 %v2720
        %4114 = vmatprep.subr.bf16.mxu0 %v2717
        %4115 = vmatpush2.bf16.msra.mxu0 %v2716
        %4116 = vmatprep.subr.bf16.mxu0 %v2713
        %4117 = vmatpush2.bf16.msra.mxu0 %v2712
        %4118 = vmatprep.subr.bf16.mxu0 %v2709
        %4119 = vmatpush2.bf16.msra.mxu0 %v2708
        %4120 = vmatprep.subr.bf16.mxu0 %v2705
        %4121 = vmatpush2.bf16.msra.mxu0 %v2704
        %4122 = vmatprep.subr.bf16.mxu0 %v2701
        %4123 = vmatpush2.bf16.msra.mxu0 %v2700
        %4124 = vmatprep.mubr.bf16.mxu0 %v441
        %4125 = vmatmul.mubr.bf16.gmra.mxu0 %v440
        %v4126 = vpop.f32.mrf.mxu0
        %v4127 = vadd.f32 %v4074, %v4126
        %v4128 = vpop.f32.mrf.mxu0
        %v4129 = vadd.f32 %v4076, %v4128
        %v4130 = vpop.f32.mrf.mxu0
        %v4131 = vadd.f32 %v4078, %v4130
        %v4132 = vpop.f32.mrf.mxu0
        %v4133 = vadd.f32 %v4080, %v4132
        %4134 = vmatprep.mubr.bf16.mxu0 %v457
        %4135 = vmatmul.mubr.bf16.gmra.mxu0 %v456
        %v4136 = vpop.f32.mrf.mxu0
        %v4137 = vadd.f32 %v4084, %v4136
        %v4138 = vpop.f32.mrf.mxu0
        %v4139 = vadd.f32 %v4086, %v4138
        %v4140 = vpop.f32.mrf.mxu0
        %v4141 = vadd.f32 %v4088, %v4140
        %v4142 = vpop.f32.mrf.mxu0
        %v4143 = vadd.f32 %v4090, %v4142
        %4144 = vdwg.mxu0
        %4145 = vmatprep.subr.bf16.mxu0 %v2761
        %4146 = vmatpush1.bf16.msra.mxu0 %v2760
        %4147 = vmatprep.subr.bf16.mxu0 %v2757
        %4148 = vmatpush1.bf16.msra.mxu0 %v2756
        %4149 = vmatprep.subr.bf16.mxu0 %v2753
        %4150 = vmatpush1.bf16.msra.mxu0 %v2752
        %4151 = vmatprep.subr.bf16.mxu0 %v2749
        %4152 = vmatpush1.bf16.msra.mxu0 %v2748
        %4153 = vmatprep.subr.bf16.mxu0 %v2745
        %4154 = vmatpush1.bf16.msra.mxu0 %v2744
        %4155 = vmatprep.subr.bf16.mxu0 %v2741
        %4156 = vmatpush1.bf16.msra.mxu0 %v2740
        %4157 = vmatprep.subr.bf16.mxu0 %v2737
        %4158 = vmatpush1.bf16.msra.mxu0 %v2736
        %4159 = vmatprep.subr.bf16.mxu0 %v2733
        %4160 = vmatpush1.bf16.msra.mxu0 %v2732
        %4161 = vmatprep.subr.bf16.mxu0 %v2793
        %4162 = vmatpush2.bf16.msra.mxu0 %v2792
        %4163 = vmatprep.subr.bf16.mxu0 %v2789
        %4164 = vmatpush2.bf16.msra.mxu0 %v2788
        %4165 = vmatprep.subr.bf16.mxu0 %v2785
        %4166 = vmatpush2.bf16.msra.mxu0 %v2784
        %4167 = vmatprep.subr.bf16.mxu0 %v2781
        %4168 = vmatpush2.bf16.msra.mxu0 %v2780
        %4169 = vmatprep.subr.bf16.mxu0 %v2777
        %4170 = vmatpush2.bf16.msra.mxu0 %v2776
        %4171 = vmatprep.subr.bf16.mxu0 %v2773
        %4172 = vmatpush2.bf16.msra.mxu0 %v2772
        %4173 = vmatprep.subr.bf16.mxu0 %v2769
        %4174 = vmatpush2.bf16.msra.mxu0 %v2768
        %4175 = vmatprep.subr.bf16.mxu0 %v2765
        %4176 = vmatpush2.bf16.msra.mxu0 %v2764
        %4177 = vmatprep.mubr.bf16.mxu0 %v443
        %4178 = vmatmul.mubr.bf16.gmra.mxu0 %v442
        %v4179 = vpop.f32.mrf.mxu0
        %v4180 = vadd.f32 %v4127, %v4179
        %v4181 = vpop.f32.mrf.mxu0
        %v4182 = vadd.f32 %v4129, %v4181
        %v4183 = vpop.f32.mrf.mxu0
        %v4184 = vadd.f32 %v4131, %v4183
        %v4185 = vpop.f32.mrf.mxu0
        %v4186 = vadd.f32 %v4133, %v4185
        %4187 = vmatprep.mubr.bf16.mxu0 %v459
        %4188 = vmatmul.mubr.bf16.gmra.mxu0 %v458
        %v4189 = vpop.f32.mrf.mxu0
        %v4190 = vadd.f32 %v4137, %v4189
        %v4191 = vpop.f32.mrf.mxu0
        %v4192 = vadd.f32 %v4139, %v4191
        %v4193 = vpop.f32.mrf.mxu0
        %v4194 = vadd.f32 %v4141, %v4193
        %v4195 = vpop.f32.mrf.mxu0
        %v4196 = vadd.f32 %v4143, %v4195
        %4197 = vdwg.mxu0
        %4198 = vmatprep.subr.bf16.mxu0 %v2825
        %4199 = vmatpush1.bf16.msra.mxu0 %v2824
        %4200 = vmatprep.subr.bf16.mxu0 %v2821
        %4201 = vmatpush1.bf16.msra.mxu0 %v2820
        %4202 = vmatprep.subr.bf16.mxu0 %v2817
        %4203 = vmatpush1.bf16.msra.mxu0 %v2816
        %4204 = vmatprep.subr.bf16.mxu0 %v2813
        %4205 = vmatpush1.bf16.msra.mxu0 %v2812
        %4206 = vmatprep.subr.bf16.mxu0 %v2809
        %4207 = vmatpush1.bf16.msra.mxu0 %v2808
        %4208 = vmatprep.subr.bf16.mxu0 %v2805
        %4209 = vmatpush1.bf16.msra.mxu0 %v2804
        %4210 = vmatprep.subr.bf16.mxu0 %v2801
        %4211 = vmatpush1.bf16.msra.mxu0 %v2800
        %4212 = vmatprep.subr.bf16.mxu0 %v2797
        %4213 = vmatpush1.bf16.msra.mxu0 %v2796
        %4214 = vmatprep.subr.bf16.mxu0 %v2857
        %4215 = vmatpush2.bf16.msra.mxu0 %v2856
        %4216 = vmatprep.subr.bf16.mxu0 %v2853
        %4217 = vmatpush2.bf16.msra.mxu0 %v2852
        %4218 = vmatprep.subr.bf16.mxu0 %v2849
        %4219 = vmatpush2.bf16.msra.mxu0 %v2848
        %4220 = vmatprep.subr.bf16.mxu0 %v2845
        %4221 = vmatpush2.bf16.msra.mxu0 %v2844
        %4222 = vmatprep.subr.bf16.mxu0 %v2841
        %4223 = vmatpush2.bf16.msra.mxu0 %v2840
        %4224 = vmatprep.subr.bf16.mxu0 %v2837
        %4225 = vmatpush2.bf16.msra.mxu0 %v2836
        %4226 = vmatprep.subr.bf16.mxu0 %v2833
        %4227 = vmatpush2.bf16.msra.mxu0 %v2832
        %4228 = vmatprep.subr.bf16.mxu0 %v2829
        %4229 = vmatpush2.bf16.msra.mxu0 %v2828
        %4230 = vmatprep.mubr.bf16.mxu0 %v445
        %4231 = vmatmul.mubr.bf16.gmra.mxu0 %v444
        %v4232 = vpop.f32.mrf.mxu0
        %v4233 = vadd.f32 %v4180, %v4232
        %v4234 = vpop.f32.mrf.mxu0
        %v4235 = vadd.f32 %v4182, %v4234
        %v4236 = vpop.f32.mrf.mxu0
        %v4237 = vadd.f32 %v4184, %v4236
        %v4238 = vpop.f32.mrf.mxu0
        %v4239 = vadd.f32 %v4186, %v4238
        %4240 = vmatprep.mubr.bf16.mxu0 %v461
        %4241 = vmatmul.mubr.bf16.gmra.mxu0 %v460
        %v4242 = vpop.f32.mrf.mxu0
        %v4243 = vadd.f32 %v4190, %v4242
        %v4244 = vpop.f32.mrf.mxu0
        %v4245 = vadd.f32 %v4192, %v4244
        %v4246 = vpop.f32.mrf.mxu0
        %v4247 = vadd.f32 %v4194, %v4246
        %v4248 = vpop.f32.mrf.mxu0
        %v4249 = vadd.f32 %v4196, %v4248
        %4250 = vdwg.mxu0
        %4251 = vmatprep.subr.bf16.mxu0 %v2889
        %4252 = vmatpush1.bf16.msra.mxu0 %v2888
        %4253 = vmatprep.subr.bf16.mxu0 %v2885
        %4254 = vmatpush1.bf16.msra.mxu0 %v2884
        %4255 = vmatprep.subr.bf16.mxu0 %v2881
        %4256 = vmatpush1.bf16.msra.mxu0 %v2880
        %4257 = vmatprep.subr.bf16.mxu0 %v2877
        %4258 = vmatpush1.bf16.msra.mxu0 %v2876
        %4259 = vmatprep.subr.bf16.mxu0 %v2873
        %4260 = vmatpush1.bf16.msra.mxu0 %v2872
        %4261 = vmatprep.subr.bf16.mxu0 %v2869
        %4262 = vmatpush1.bf16.msra.mxu0 %v2868
        %4263 = vmatprep.subr.bf16.mxu0 %v2865
        %4264 = vmatpush1.bf16.msra.mxu0 %v2864
        %4265 = vmatprep.subr.bf16.mxu0 %v2861
        %4266 = vmatpush1.bf16.msra.mxu0 %v2860
        %4267 = vmatprep.subr.bf16.mxu0 %v2921
        %4268 = vmatpush2.bf16.msra.mxu0 %v2920
        %4269 = vmatprep.subr.bf16.mxu0 %v2917
        %4270 = vmatpush2.bf16.msra.mxu0 %v2916
        %4271 = vmatprep.subr.bf16.mxu0 %v2913
        %4272 = vmatpush2.bf16.msra.mxu0 %v2912
        %4273 = vmatprep.subr.bf16.mxu0 %v2909
        %4274 = vmatpush2.bf16.msra.mxu0 %v2908
        %4275 = vmatprep.subr.bf16.mxu0 %v2905
        %4276 = vmatpush2.bf16.msra.mxu0 %v2904
        %4277 = vmatprep.subr.bf16.mxu0 %v2901
        %4278 = vmatpush2.bf16.msra.mxu0 %v2900
        %4279 = vmatprep.subr.bf16.mxu0 %v2897
        %4280 = vmatpush2.bf16.msra.mxu0 %v2896
        %4281 = vmatprep.subr.bf16.mxu0 %v2893
        %4282 = vmatpush2.bf16.msra.mxu0 %v2892
        %4283 = vmatprep.mubr.bf16.mxu0 %v447
        %4284 = vmatmul.mubr.bf16.gmra.mxu0 %v446
        %v4285 = vpop.f32.mrf.mxu0
        %v4286 = vadd.f32 %v4233, %v4285
        %v4287 = vpop.f32.mrf.mxu0
        %v4288 = vadd.f32 %v4235, %v4287
        %v4289 = vpop.f32.mrf.mxu0
        %v4290 = vadd.f32 %v4237, %v4289
        %v4291 = vpop.f32.mrf.mxu0
        %v4292 = vadd.f32 %v4239, %v4291
        %4293 = vmatprep.mubr.bf16.mxu0 %v463
        %4294 = vmatmul.mubr.bf16.gmra.mxu0 %v462
        %v4295 = vpop.f32.mrf.mxu0
        %v4296 = vadd.f32 %v4243, %v4295
        %v4297 = vpop.f32.mrf.mxu0
        %v4298 = vadd.f32 %v4245, %v4297
        %v4299 = vpop.f32.mrf.mxu0
        %v4300 = vadd.f32 %v4247, %v4299
        %v4301 = vpop.f32.mrf.mxu0
        %v4302 = vadd.f32 %v4249, %v4301
        %4303 = vdwg.mxu0
        %4304 = vmatprep.subr.bf16.mxu0 %v2953
        %4305 = vmatpush1.bf16.msra.mxu0 %v2952
        %4306 = vmatprep.subr.bf16.mxu0 %v2949
        %4307 = vmatpush1.bf16.msra.mxu0 %v2948
        %4308 = vmatprep.subr.bf16.mxu0 %v2945
        %4309 = vmatpush1.bf16.msra.mxu0 %v2944
        %4310 = vmatprep.subr.bf16.mxu0 %v2941
        %4311 = vmatpush1.bf16.msra.mxu0 %v2940
        %4312 = vmatprep.subr.bf16.mxu0 %v2937
        %4313 = vmatpush1.bf16.msra.mxu0 %v2936
        %4314 = vmatprep.subr.bf16.mxu0 %v2933
        %4315 = vmatpush1.bf16.msra.mxu0 %v2932
        %4316 = vmatprep.subr.bf16.mxu0 %v2929
        %4317 = vmatpush1.bf16.msra.mxu0 %v2928
        %4318 = vmatprep.subr.bf16.mxu0 %v2925
        %4319 = vmatpush1.bf16.msra.mxu0 %v2924
        %4320 = vmatprep.subr.bf16.mxu0 %v2985
        %4321 = vmatpush2.bf16.msra.mxu0 %v2984
        %4322 = vmatprep.subr.bf16.mxu0 %v2981
        %4323 = vmatpush2.bf16.msra.mxu0 %v2980
        %4324 = vmatprep.subr.bf16.mxu0 %v2977
        %4325 = vmatpush2.bf16.msra.mxu0 %v2976
        %4326 = vmatprep.subr.bf16.mxu0 %v2973
        %4327 = vmatpush2.bf16.msra.mxu0 %v2972
        %4328 = vmatprep.subr.bf16.mxu0 %v2969
        %4329 = vmatpush2.bf16.msra.mxu0 %v2968
        %4330 = vmatprep.subr.bf16.mxu0 %v2965
        %4331 = vmatpush2.bf16.msra.mxu0 %v2964
        %4332 = vmatprep.subr.bf16.mxu0 %v2961
        %4333 = vmatpush2.bf16.msra.mxu0 %v2960
        %4334 = vmatprep.subr.bf16.mxu0 %v2957
        %4335 = vmatpush2.bf16.msra.mxu0 %v2956
        %4336 = vmatprep.mubr.bf16.mxu0 %v449
        %4337 = vmatmul.mubr.bf16.gmra.mxu0 %v448
        %v4338 = vpop.f32.mrf.mxu0
        %v4339 = vadd.f32 %v4286, %v4338
        %v4340 = vpop.f32.mrf.mxu0
        %v4341 = vadd.f32 %v4288, %v4340
        %v4342 = vpop.f32.mrf.mxu0
        %v4343 = vadd.f32 %v4290, %v4342
        %v4344 = vpop.f32.mrf.mxu0
        %v4345 = vadd.f32 %v4292, %v4344
        %4346 = vmatprep.mubr.bf16.mxu0 %v465
        %4347 = vmatmul.mubr.bf16.gmra.mxu0 %v464
        %v4348 = vpop.f32.mrf.mxu0
        %v4349 = vadd.f32 %v4296, %v4348
        %v4350 = vpop.f32.mrf.mxu0
        %v4351 = vadd.f32 %v4298, %v4350
        %v4352 = vpop.f32.mrf.mxu0
        %v4353 = vadd.f32 %v4300, %v4352
        %v4354 = vpop.f32.mrf.mxu0
        %v4355 = vadd.f32 %v4302, %v4354
        %4356 = vdwg.mxu0
        %4357 = vmatprep.subr.bf16.mxu0 %v3017
        %4358 = vmatpush1.bf16.msra.mxu0 %v3016
        %4359 = vmatprep.subr.bf16.mxu0 %v3013
        %4360 = vmatpush1.bf16.msra.mxu0 %v3012
        %4361 = vmatprep.subr.bf16.mxu0 %v3009
        %4362 = vmatpush1.bf16.msra.mxu0 %v3008
        %4363 = vmatprep.subr.bf16.mxu0 %v3005
        %4364 = vmatpush1.bf16.msra.mxu0 %v3004
        %4365 = vmatprep.subr.bf16.mxu0 %v3001
        %4366 = vmatpush1.bf16.msra.mxu0 %v3000
        %4367 = vmatprep.subr.bf16.mxu0 %v2997
        %4368 = vmatpush1.bf16.msra.mxu0 %v2996
        %4369 = vmatprep.subr.bf16.mxu0 %v2993
        %4370 = vmatpush1.bf16.msra.mxu0 %v2992
        %4371 = vmatprep.subr.bf16.mxu0 %v2989
        %4372 = vmatpush1.bf16.msra.mxu0 %v2988
        %4373 = vmatprep.subr.bf16.mxu0 %v3049
        %4374 = vmatpush2.bf16.msra.mxu0 %v3048
        %4375 = vmatprep.subr.bf16.mxu0 %v3045
        %4376 = vmatpush2.bf16.msra.mxu0 %v3044
        %4377 = vmatprep.subr.bf16.mxu0 %v3041
        %4378 = vmatpush2.bf16.msra.mxu0 %v3040
        %4379 = vmatprep.subr.bf16.mxu0 %v3037
        %4380 = vmatpush2.bf16.msra.mxu0 %v3036
        %4381 = vmatprep.subr.bf16.mxu0 %v3033
        %4382 = vmatpush2.bf16.msra.mxu0 %v3032
        %4383 = vmatprep.subr.bf16.mxu0 %v3029
        %4384 = vmatpush2.bf16.msra.mxu0 %v3028
        %4385 = vmatprep.subr.bf16.mxu0 %v3025
        %4386 = vmatpush2.bf16.msra.mxu0 %v3024
        %4387 = vmatprep.subr.bf16.mxu0 %v3021
        %4388 = vmatpush2.bf16.msra.mxu0 %v3020
        %4389 = vmatprep.mubr.bf16.mxu0 %v451
        %4390 = vmatmul.mubr.bf16.gmra.mxu0 %v450
        %v4391 = vpop.f32.mrf.mxu0
        %v4392 = vadd.f32 %v4339, %v4391
        %v4393 = vpop.f32.mrf.mxu0
        %v4394 = vadd.f32 %v4341, %v4393
        %v4395 = vpop.f32.mrf.mxu0
        %v4396 = vadd.f32 %v4343, %v4395
        %v4397 = vpop.f32.mrf.mxu0
        %v4398 = vadd.f32 %v4345, %v4397
        %4399 = vmatprep.mubr.bf16.mxu0 %v467
        %4400 = vmatmul.mubr.bf16.gmra.mxu0 %v466
        %v4401 = vpop.f32.mrf.mxu0
        %v4402 = vadd.f32 %v4349, %v4401
        %v4403 = vpop.f32.mrf.mxu0
        %v4404 = vadd.f32 %v4351, %v4403
        %v4405 = vpop.f32.mrf.mxu0
        %v4406 = vadd.f32 %v4353, %v4405
        %v4407 = vpop.f32.mrf.mxu0
        %v4408 = vadd.f32 %v4355, %v4407
        %4409 = vdwg.mxu0
        %v4410 = vmax.f32 %v3968, 0.0
        %v4411 = vmax.f32 %v3970, 0.0
        %v4412 = vmax.f32 %v4392, 0.0
        %v4413 = vmax.f32 %v4394, 0.0
        %v4414 = vmax.f32 %v3972, 0.0
        %v4415 = vmax.f32 %v3974, 0.0
        %v4416 = vmax.f32 %v4396, 0.0
        %v4417 = vmax.f32 %v4398, 0.0
        %v4418 = vmax.f32 %v3978, 0.0
        %v4419 = vmax.f32 %v3980, 0.0
        %v4420 = vmax.f32 %v4402, 0.0
        %v4421 = vmax.f32 %v4404, 0.0
        %v4422 = vmax.f32 %v3982, 0.0
        %v4423 = vmax.f32 %v3984, 0.0
        %v4424 = vmax.f32 %v4406, 0.0
        %v4425 = vmax.f32 %v4408, 0.0
        %v4426 = vpack.c.bf16 %v4414, %v4410
        %v4427 = vpack.c.bf16 %v4415, %v4411
        %v4428 = vpack.c.bf16 %v4416, %v4412
        %v4429 = vpack.c.bf16 %v4417, %v4413
        %v4430 = vpack.c.bf16 %v4422, %v4418
        %v4431 = vpack.c.bf16 %v4423, %v4419
        %v4432 = vpack.c.bf16 %v4424, %v4420
        %v4433 = vpack.c.bf16 %v4425, %v4421
        %v4434 = vld [vmem:[#allocation8] sm:$0xf]
        %v4435 = vld [vmem:[#allocation8 + $0x4] sm:$0xf]
        %v4436 = vld [vmem:[#allocation8 + $0x8] sm:$0xf]
        %v4437 = vld [vmem:[#allocation8 + $0xc] sm:$0xf]
        %v4438 = vld [vmem:[#allocation8 + $0x10] sm:$0xf]
        %v4439 = vld [vmem:[#allocation8 + $0x14] sm:$0xf]
        %v4440 = vld [vmem:[#allocation8 + $0x18] sm:$0xf]
        %v4441 = vld [vmem:[#allocation8 + $0x1c] sm:$0xf]
        %v4442 = vld [vmem:[#allocation8 + $0x20] sm:$0xf]
        %v4443 = vld [vmem:[#allocation8 + $0x24] sm:$0xf]
        %v4444 = vld [vmem:[#allocation8 + $0x28] sm:$0xf]
        %v4445 = vld [vmem:[#allocation8 + $0x2c] sm:$0xf]
        %v4446 = vld [vmem:[#allocation8 + $0x30] sm:$0xf]
        %v4447 = vld [vmem:[#allocation8 + $0x34] sm:$0xf]
        %v4448 = vld [vmem:[#allocation8 + $0x38] sm:$0xf]
        %v4449 = vld [vmem:[#allocation8 + $0x3c] sm:$0xf]
        %v4450 = vld [vmem:[#allocation8 + $0x40] sm:$0xf]
        %v4451 = vld [vmem:[#allocation8 + $0x44] sm:$0xf]
        %v4452 = vld [vmem:[#allocation8 + $0x48] sm:$0xf]
        %v4453 = vld [vmem:[#allocation8 + $0x4c] sm:$0xf]
        %v4454 = vld [vmem:[#allocation8 + $0x50] sm:$0xf]
        %v4455 = vld [vmem:[#allocation8 + $0x54] sm:$0xf]
        %v4456 = vld [vmem:[#allocation8 + $0x58] sm:$0xf]
        %v4457 = vld [vmem:[#allocation8 + $0x5c] sm:$0xf]
        %v4458 = vld [vmem:[#allocation8 + $0x60] sm:$0xf]
        %v4459 = vld [vmem:[#allocation8 + $0x64] sm:$0xf]
        %v4460 = vld [vmem:[#allocation8 + $0x68] sm:$0xf]
        %v4461 = vld [vmem:[#allocation8 + $0x6c] sm:$0xf]
        %v4462 = vld [vmem:[#allocation8 + $0x70] sm:$0xf]
        %v4463 = vld [vmem:[#allocation8 + $0x74] sm:$0xf]
        %v4464 = vld [vmem:[#allocation8 + $0x78] sm:$0xf]
        %v4465 = vld [vmem:[#allocation8 + $0x7c] sm:$0xf]
        %v4466 = vld [vmem:[#allocation8 + $0x80] sm:$0xf]
        %v4467 = vld [vmem:[#allocation8 + $0x84] sm:$0xf]
        %v4468 = vld [vmem:[#allocation8 + $0x88] sm:$0xf]
        %v4469 = vld [vmem:[#allocation8 + $0x8c] sm:$0xf]
        %v4470 = vld [vmem:[#allocation8 + $0x90] sm:$0xf]
        %v4471 = vld [vmem:[#allocation8 + $0x94] sm:$0xf]
        %v4472 = vld [vmem:[#allocation8 + $0x98] sm:$0xf]
        %v4473 = vld [vmem:[#allocation8 + $0x9c] sm:$0xf]
        %v4474 = vld [vmem:[#allocation8 + $0xa0] sm:$0xf]
        %v4475 = vld [vmem:[#allocation8 + $0xa4] sm:$0xf]
        %v4476 = vld [vmem:[#allocation8 + $0xa8] sm:$0xf]
        %v4477 = vld [vmem:[#allocation8 + $0xac] sm:$0xf]
        %v4478 = vld [vmem:[#allocation8 + $0xb0] sm:$0xf]
        %v4479 = vld [vmem:[#allocation8 + $0xb4] sm:$0xf]
        %v4480 = vld [vmem:[#allocation8 + $0xb8] sm:$0xf]
        %v4481 = vld [vmem:[#allocation8 + $0xbc] sm:$0xf]
        %v4482 = vld [vmem:[#allocation8 + $0xc0] sm:$0xf]
        %v4483 = vld [vmem:[#allocation8 + $0xc4] sm:$0xf]
        %v4484 = vld [vmem:[#allocation8 + $0xc8] sm:$0xf]
        %v4485 = vld [vmem:[#allocation8 + $0xcc] sm:$0xf]
        %v4486 = vld [vmem:[#allocation8 + $0xd0] sm:$0xf]
        %v4487 = vld [vmem:[#allocation8 + $0xd4] sm:$0xf]
        %v4488 = vld [vmem:[#allocation8 + $0xd8] sm:$0xf]
        %v4489 = vld [vmem:[#allocation8 + $0xdc] sm:$0xf]
        %v4490 = vld [vmem:[#allocation8 + $0xe0] sm:$0xf]
        %v4491 = vld [vmem:[#allocation8 + $0xe4] sm:$0xf]
        %v4492 = vld [vmem:[#allocation8 + $0xe8] sm:$0xf]
        %v4493 = vld [vmem:[#allocation8 + $0xec] sm:$0xf]
        %v4494 = vld [vmem:[#allocation8 + $0xf0] sm:$0xf]
        %v4495 = vld [vmem:[#allocation8 + $0xf4] sm:$0xf]
        %v4496 = vld [vmem:[#allocation8 + $0xf8] sm:$0xf]
        %v4497 = vld [vmem:[#allocation8 + $0xfc] sm:$0xf]
        %v4498 = vld [vmem:[#allocation10] sm:$0x1]
        %v4500 = vlaneseq
        %v4501 = vshrl.u32 %v4500, 7
        %v4502 = vsub.s32 0, %v4501
        %v4503 = vrot.slane %v4498, %v4502
        %v4569 = vunpack.c.l.b16 %v4434
        %v4570 = vunpack.c.l.b16 %v4435
        %v4571 = vunpack.c.l.b16 %v4436
        %v4572 = vunpack.c.l.b16 %v4437
        %v4573 = vunpack.c.l.b16 %v4438
        %v4574 = vunpack.c.l.b16 %v4439
        %v4575 = vunpack.c.l.b16 %v4440
        %v4576 = vunpack.c.l.b16 %v4441
        %v4577 = vunpack.c.l.b16 %v4442
        %v4578 = vunpack.c.l.b16 %v4443
        %v4579 = vunpack.c.l.b16 %v4444
        %v4580 = vunpack.c.l.b16 %v4445
        %v4581 = vunpack.c.l.b16 %v4446
        %v4582 = vunpack.c.l.b16 %v4447
        %v4583 = vunpack.c.l.b16 %v4448
        %v4584 = vunpack.c.l.b16 %v4449
        %v4585 = vunpack.c.l.b16 %v4450
        %v4586 = vunpack.c.l.b16 %v4451
        %v4587 = vunpack.c.l.b16 %v4452
        %v4588 = vunpack.c.l.b16 %v4453
        %v4589 = vunpack.c.l.b16 %v4454
        %v4590 = vunpack.c.l.b16 %v4455
        %v4591 = vunpack.c.l.b16 %v4456
        %v4592 = vunpack.c.l.b16 %v4457
        %v4593 = vunpack.c.l.b16 %v4458
        %v4594 = vunpack.c.l.b16 %v4459
        %v4595 = vunpack.c.l.b16 %v4460
        %v4596 = vunpack.c.l.b16 %v4461
        %v4597 = vunpack.c.l.b16 %v4462
        %v4598 = vunpack.c.l.b16 %v4463
        %v4599 = vunpack.c.l.b16 %v4464
        %v4600 = vunpack.c.l.b16 %v4465
        %v4601 = vunpack.c.l.b16 %v4466
        %v4602 = vunpack.c.l.b16 %v4467
        %v4603 = vunpack.c.l.b16 %v4468
        %v4604 = vunpack.c.l.b16 %v4469
        %v4605 = vunpack.c.l.b16 %v4470
        %v4606 = vunpack.c.l.b16 %v4471
        %v4607 = vunpack.c.l.b16 %v4472
        %v4608 = vunpack.c.l.b16 %v4473
        %v4609 = vunpack.c.l.b16 %v4474
        %v4610 = vunpack.c.l.b16 %v4475
        %v4611 = vunpack.c.l.b16 %v4476
        %v4612 = vunpack.c.l.b16 %v4477
        %v4613 = vunpack.c.l.b16 %v4478
        %v4614 = vunpack.c.l.b16 %v4479
        %v4615 = vunpack.c.l.b16 %v4480
        %v4616 = vunpack.c.l.b16 %v4481
        %v4617 = vunpack.c.l.b16 %v4482
        %v4618 = vunpack.c.l.b16 %v4483
        %v4619 = vunpack.c.l.b16 %v4484
        %v4620 = vunpack.c.l.b16 %v4485
        %v4621 = vunpack.c.l.b16 %v4486
        %v4622 = vunpack.c.l.b16 %v4487
        %v4623 = vunpack.c.l.b16 %v4488
        %v4624 = vunpack.c.l.b16 %v4489
        %v4625 = vunpack.c.l.b16 %v4490
        %v4626 = vunpack.c.l.b16 %v4491
        %v4627 = vunpack.c.l.b16 %v4492
        %v4628 = vunpack.c.l.b16 %v4493
        %v4629 = vunpack.c.l.b16 %v4494
        %v4630 = vunpack.c.l.b16 %v4495
        %v4631 = vunpack.c.l.b16 %v4496
        %v4632 = vunpack.c.l.b16 %v4497
        %v4633 = vpack.c.b16 %v4570, %v4569
        %v4634 = vpack.c.b16 %v4572, %v4571
        %v4635 = vpack.c.b16 %v4574, %v4573
        %v4636 = vpack.c.b16 %v4576, %v4575
        %v4637 = vpack.c.b16 %v4578, %v4577
        %v4638 = vpack.c.b16 %v4580, %v4579
        %v4639 = vpack.c.b16 %v4582, %v4581
        %v4640 = vpack.c.b16 %v4584, %v4583
        %v4641 = vpack.c.b16 %v4586, %v4585
        %v4642 = vpack.c.b16 %v4588, %v4587
        %v4643 = vpack.c.b16 %v4590, %v4589
        %v4644 = vpack.c.b16 %v4592, %v4591
        %v4645 = vpack.c.b16 %v4594, %v4593
        %v4646 = vpack.c.b16 %v4596, %v4595
        %v4647 = vpack.c.b16 %v4598, %v4597
        %v4648 = vpack.c.b16 %v4600, %v4599
        %v4649 = vpack.c.b16 %v4602, %v4601
        %v4650 = vpack.c.b16 %v4604, %v4603
        %v4651 = vpack.c.b16 %v4606, %v4605
        %v4652 = vpack.c.b16 %v4608, %v4607
        %v4653 = vpack.c.b16 %v4610, %v4609
        %v4654 = vpack.c.b16 %v4612, %v4611
        %v4655 = vpack.c.b16 %v4614, %v4613
        %v4656 = vpack.c.b16 %v4616, %v4615
        %v4657 = vpack.c.b16 %v4618, %v4617
        %v4658 = vpack.c.b16 %v4620, %v4619
        %v4659 = vpack.c.b16 %v4622, %v4621
        %v4660 = vpack.c.b16 %v4624, %v4623
        %v4661 = vpack.c.b16 %v4626, %v4625
        %v4662 = vpack.c.b16 %v4628, %v4627
        %v4663 = vpack.c.b16 %v4630, %v4629
        %v4664 = vpack.c.b16 %v4632, %v4631
        %4697 = vmatprep.subr.bf16.mxu0 0
        %4698 = vmatpush1.bf16.msra.mxu0 %v4640
        %4699 = vmatprep.subr.bf16.mxu0 0
        %4700 = vmatpush1.bf16.msra.mxu0 %v4639
        %4701 = vmatprep.subr.bf16.mxu0 0
        %4702 = vmatpush1.bf16.msra.mxu0 %v4638
        %4703 = vmatprep.subr.bf16.mxu0 0
        %4704 = vmatpush1.bf16.msra.mxu0 %v4637
        %4705 = vmatprep.subr.bf16.mxu0 0
        %4706 = vmatpush1.bf16.msra.mxu0 %v4636
        %4707 = vmatprep.subr.bf16.mxu0 0
        %4708 = vmatpush1.bf16.msra.mxu0 %v4635
        %4709 = vmatprep.subr.bf16.mxu0 0
        %4710 = vmatpush1.bf16.msra.mxu0 %v4634
        %4711 = vmatprep.subr.bf16.mxu0 0
        %4712 = vmatpush1.bf16.msra.mxu0 %v4633
        %4713 = vmatprep.subr.bf16.mxu0 0
        %4714 = vmatpush2.bf16.msra.mxu0 %v4648
        %4715 = vmatprep.subr.bf16.mxu0 0
        %4716 = vmatpush2.bf16.msra.mxu0 %v4647
        %4717 = vmatprep.subr.bf16.mxu0 0
        %4718 = vmatpush2.bf16.msra.mxu0 %v4646
        %4719 = vmatprep.subr.bf16.mxu0 0
        %4720 = vmatpush2.bf16.msra.mxu0 %v4645
        %4721 = vmatprep.subr.bf16.mxu0 0
        %4722 = vmatpush2.bf16.msra.mxu0 %v4644
        %4723 = vmatprep.subr.bf16.mxu0 0
        %4724 = vmatpush2.bf16.msra.mxu0 %v4643
        %4725 = vmatprep.subr.bf16.mxu0 0
        %4726 = vmatpush2.bf16.msra.mxu0 %v4642
        %4727 = vmatprep.subr.bf16.mxu0 0
        %4728 = vmatpush2.bf16.msra.mxu0 %v4641
        %4729 = vmatprep.mubr.bf16.mxu0 %v4427
        %4730 = vmatmul.mubr.bf16.gmra.mxu0 %v4426
        %v4731 = vpop.f32.mrf.mxu0
        %v4732 = vadd.f32 %v4503, %v4731
        %v4733 = vpop.f32.mrf.mxu0
        %v4734 = vpop.f32.mrf.mxu0
        %v4735 = vadd.f32 %v4503, %v4734
        %v4736 = vpop.f32.mrf.mxu0
        %4737 = vmatprep.mubr.bf16.mxu0 %v4431
        %4738 = vmatmul.mubr.bf16.gmra.mxu0 %v4430
        %v4739 = vpop.f32.mrf.mxu0
        %v4740 = vadd.f32 %v4503, %v4739
        %v4741 = vpop.f32.mrf.mxu0
        %v4742 = vpop.f32.mrf.mxu0
        %v4743 = vadd.f32 %v4503, %v4742
        %v4744 = vpop.f32.mrf.mxu0
        %4745 = vdwg.mxu0
        %4746 = vmatprep.subr.bf16.mxu0 0
        %4747 = vmatpush1.bf16.msra.mxu0 %v4656
        %4748 = vmatprep.subr.bf16.mxu0 0
        %4749 = vmatpush1.bf16.msra.mxu0 %v4655
        %4750 = vmatprep.subr.bf16.mxu0 0
        %4751 = vmatpush1.bf16.msra.mxu0 %v4654
        %4752 = vmatprep.subr.bf16.mxu0 0
        %4753 = vmatpush1.bf16.msra.mxu0 %v4653
        %4754 = vmatprep.subr.bf16.mxu0 0
        %4755 = vmatpush1.bf16.msra.mxu0 %v4652
        %4756 = vmatprep.subr.bf16.mxu0 0
        %4757 = vmatpush1.bf16.msra.mxu0 %v4651
        %4758 = vmatprep.subr.bf16.mxu0 0
        %4759 = vmatpush1.bf16.msra.mxu0 %v4650
        %4760 = vmatprep.subr.bf16.mxu0 0
        %4761 = vmatpush1.bf16.msra.mxu0 %v4649
        %4762 = vmatprep.subr.bf16.mxu0 0
        %4763 = vmatpush2.bf16.msra.mxu0 %v4664
        %4764 = vmatprep.subr.bf16.mxu0 0
        %4765 = vmatpush2.bf16.msra.mxu0 %v4663
        %4766 = vmatprep.subr.bf16.mxu0 0
        %4767 = vmatpush2.bf16.msra.mxu0 %v4662
        %4768 = vmatprep.subr.bf16.mxu0 0
        %4769 = vmatpush2.bf16.msra.mxu0 %v4661
        %4770 = vmatprep.subr.bf16.mxu0 0
        %4771 = vmatpush2.bf16.msra.mxu0 %v4660
        %4772 = vmatprep.subr.bf16.mxu0 0
        %4773 = vmatpush2.bf16.msra.mxu0 %v4659
        %4774 = vmatprep.subr.bf16.mxu0 0
        %4775 = vmatpush2.bf16.msra.mxu0 %v4658
        %4776 = vmatprep.subr.bf16.mxu0 0
        %4777 = vmatpush2.bf16.msra.mxu0 %v4657
        %4778 = vmatprep.mubr.bf16.mxu0 %v4429
        %4779 = vmatmul.mubr.bf16.gmra.mxu0 %v4428
        %v4780 = vpop.f32.mrf.mxu0
        %v4781 = vadd.f32 %v4732, %v4780
        %v4782 = vpop.f32.mrf.mxu0
        %v4783 = vpop.f32.mrf.mxu0
        %v4784 = vadd.f32 %v4735, %v4783
        %v4785 = vpop.f32.mrf.mxu0
        %4786 = vmatprep.mubr.bf16.mxu0 %v4433
        %4787 = vmatmul.mubr.bf16.gmra.mxu0 %v4432
        %v4788 = vpop.f32.mrf.mxu0
        %v4789 = vadd.f32 %v4740, %v4788
        %v4790 = vpop.f32.mrf.mxu0
        %v4791 = vpop.f32.mrf.mxu0
        %v4792 = vadd.f32 %v4743, %v4791
        %v4793 = vpop.f32.mrf.mxu0
        %4794 = vdwg.mxu0
        %v4795 = vmax.f32 %v4781, 0.0
        %v4796 = vmax.f32 %v4784, 0.0
        %v4797 = vmax.f32 %v4789, 0.0
        %v4798 = vmax.f32 %v4792, 0.0
        %v4799 = vld [vmem:[#allocation11] sm:$0x1]
        %v4801 = vlaneseq
        %v4802 = vshrl.u32 %v4801, 7
        %v4803 = vsub.s32 0, %v4802
        %v4804 = vrot.slane %v4799, %v4803
        %v4806 = vmul.f32 %v4795, %v4804
        %v4807 = vmul.f32 %v4796, %v4804
        %v4808 = vmul.f32 %v4797, %v4804
        %v4809 = vmul.f32 %v4798, %v4804
        %4810 = vadd.xlane.f32.xlu0 %v4806
        %v4811 = vpop.xlane.xlu0 %4810
        %4812 = vadd.xlane.f32.xlu0 %v4807
        %v4813 = vpop.xlane.xlu0 %4812
        %4814 = vadd.xlane.f32.xlu0 %v4808
        %v4815 = vpop.xlane.xlu0 %4814
        %4816 = vadd.xlane.f32.xlu0 %v4809
        %v4817 = vpop.xlane.xlu0 %4816
        %v4818 = vld [vmem:[#allocation2] sm:$0x1]
        %v4820 = vlaneseq
        %v4821 = vshrl.u32 %v4820, 7
        %v4822 = vsub.s32 0, %v4821
        %v4823 = vrot.slane %v4818, %v4822
        %v4825 = vadd.f32 %v4811, %v4823
        %v4826 = vadd.f32 %v4813, %v4823
        %v4827 = vadd.f32 %v4815, %v4823
        %v4828 = vadd.f32 %v4817, %v4823
        %vm4829 = vcmask 7168
        %4830 = vst.msk [vmem:[%s369] sm:$0xff] %vm4829, %v4825
        %4831 = vst.msk [vmem:[%s369 + $0x8] sm:$0xff] %vm4829, %v4826
        %4832 = vst.msk [vmem:[%s369 + $0x10] sm:$0xff] %vm4829, %v4827
        %4833 = vst.msk [vmem:[%s369 + $0x18] sm:$0xff] %vm4829, %v4828
        %s4834 = smul.u32 4, %s26
        %p4835 = scmp.lt.s32.totalorder %s4834, 7
        %s4836 = scalar_select %p4835, %s4834, 7
        %s4837 = smul.addr %s4836, 8
        %s4838 = scalar_lea.vmem %s7, %s4837
        // Predicated region
        $region73: #{tpu_custom_call.1} parent=47 // pred_check
          %p4839 = pneg %p196
        $region74: #{tpu_custom_call.1} parent=47 // pred_check_branch
          %4841 = sbr.rel (%p4839) target = $region76
        $region75: #{tpu_custom_call.1} parent=47 // pred_region
          %s4842 = smul.u32 4, %s26
        $region76: #{tpu_custom_call.1} parent=47 // pred_fallthru
          _
      $region48: #{tpu_custom_call.1} parent=5 // pred_fallthru
        _
      %p4843 = scmp.le.s32.totalorder 2, %s21
      // Predicated region
      $region77: #{tpu_custom_call.1} parent=5 // pred_check
        %p4844 = pneg %p4843
      $region78: #{tpu_custom_call.1} parent=5 // pred_check_branch
        %4846 = sbr.rel (%p4844) target = $region80
      $region79: #{tpu_custom_call.1} parent=5 // pred_region
        %s4847 = ssub.s32 %s21, 2
        // Predicated region
        $region81: #{tpu_custom_call.1} parent=79 // pred_check
          %p4848 = pneg %p202
        $region82: #{tpu_custom_call.1} parent=79 // pred_check_branch
          %4850 = sbr.rel (%p4848) target = $region84
        $region83: #{tpu_custom_call.1} parent=79 // pred_region
          %s4851 = smul.u32 4, %s27
          %p4852 = scmp.lt.s32.totalorder %s4851, 7
          %s4853 = scalar_select %p4852, %s4851, 7
          %s4854 = smul.addr %s4853, 8
          %s4855 = scalar_lea.vmem %s7, %s4854
        $region84: #{tpu_custom_call.1} parent=79 // pred_fallthru
          _
      $region80: #{tpu_custom_call.1} parent=5 // pred_fallthru
        _
    $region6: #{tpu_custom_call.1} parent=1 // loop_footer
      %s25 = sadd.s32 1, %s21
    $region7: #{tpu_custom_call.1} parent=1 // loop_footer_branch
      %20 = sbr.rel target = $region3
    $region8: #{tpu_custom_call.1} parent=1 // loop_exit
      _
    %4856 = vsyncpa [#allocation4], 1
    %s4857 = scalar_lea.sflag [#allocation4], 1
    %4858 = vsyncpa %s4857, 1
    %4859 = vsyncpa [#allocation6], 1
    %4860 = vsyncpa [#allocation9], 1
    %4861 = vsyncpa [#allocation12], 1

</llo_original>
